<compile_context>
chip_gen: v7x
topology: tpu7x:2x2x1
jax: 0.10.0
libtpu: 0.0.40
codegen_flags: <defaults>
</compile_context>

<pallas_src>
import itertools
import math

import numpy as np

import jax
import jax.numpy as jnp
from jax.experimental import pallas as pl
from jax.experimental.pallas import tpu as pltpu


# ----------------------------- configuration ---------------------------------

class Args:
    num_features = 4
    bae_hidden_size = 32
    bae_latent_size = 16
    bae_dropout = 0.5
    bae_att_dropout = 0.5
    cnn_encoder_channels1 = 4
    cnn_encoder_channels2 = 8
    cnn_encoder_channels3 = 8
    edge_hidden_size = 64    # unused in OutterBAE.forward
    node_hidden_size = 64    # unused in OutterBAE.forward


ARGS = Args()
NODE_DIM = 30
NUM_FEAT = ARGS.num_features
EDGE_DIM = NODE_DIM * NODE_DIM                 # 900
NODE_FLAT = NODE_DIM * NUM_FEAT                # 120
BN_EPS = 1e-5
BN_SCALE = 1.0 / math.sqrt(1.0 + BN_EPS)       # eval BatchNorm with default running stats

OPTICAL_NODES = [20, 21, 22, 23, 24, 25, 26, 27, 28, 29]
OPTICAL_EDGES = [(i, j) for i, j in itertools.product(OPTICAL_NODES, OPTICAL_NODES) if i <= j]
LOG_NODES = [20, 21, 22, 23, 24, 25, 26, 27, 28, 29, 14, 15]
LOG_EDGES = [(i, j) for i, j in itertools.product(LOG_NODES, LOG_NODES) if i <= j]

OPT_HID, OPT_PAD = 512, 512    # optical attentions: hidden 512 (already 128-aligned)
LOG_HID, LOG_PAD = 64, 128     # log attentions: hidden 64, zero-padded to 128 -> aligned slices

_VMEM = pl.BlockSpec(memory_space=pltpu.MemorySpace.VMEM)


# ------------- fused Conv3x3 + BatchNorm2d(eval) + ReLU + MaxPool2x2 kernel -------------

def _conv_pool_kernel(p00_ref, p01_ref, p10_ref, p11_ref, w_ref, b_ref, o_ref):
    # p**: (9*Cin, N*Ho*Wo) im2col slabs, one per 2x2 pool phase; w: (Cout, 9*Cin) (BN folded)
    w = w_ref[...]

    def tap(p_ref):
        return jnp.dot(w, p_ref[...], preferred_element_type=jnp.float32)

    # pool(relu(bn(conv))) == relu(max_over_phases(conv_phase) + b):
    # ReLU and a positive BN scale are monotone, so pool and activation commute.
    acc = jnp.maximum(jnp.maximum(tap(p00_ref), tap(p01_ref)),
                      jnp.maximum(tap(p10_ref), tap(p11_ref)))
    o_ref[...] = jnp.maximum(acc + b_ref[...], 0.0)


def _pool_phase_patches(x):
    # x: (N, Cin, H, W) NCHW -> four (9*Cin, N*(H//2)*(W//2)) slabs (K order: tap-major, cin-minor)
    N, C, H, W = x.shape
    xp = jnp.pad(x, ((0, 0), (0, 0), (1, 1), (1, 1)))
    taps = jnp.stack([xp[:, :, dh:dh + H, dw:dw + W]
                      for dh in range(3) for dw in range(3)], axis=0)     # (9, N, C, H, W)
    slabs = []
    for dy in (0, 1):
        for dx in (0, 1):
            t = taps[:, :, :, dy::2, dx::2]                 # (9, N, C, H/2, W/2)
            t = jnp.transpose(t, (0, 2, 1, 3, 4))           # (9, C, N, H/2, W/2)
            slabs.append(t.reshape(9 * C, -1))
    return slabs


def conv_bn_relu_pool(x, w, b):
    # x: (N, Cin, H, W) -> (N, Cout, H//2, W//2); assumes even H, W (16/8/4 here).
    N, _, H, W = x.shape
    cout = w.shape[0]
    ho, wo = H // 2, W // 2
    slabs = _pool_phase_patches(x)
    y = pl.pallas_call(
        _conv_pool_kernel,
        out_shape=jax.ShapeDtypeStruct((cout, N * ho * wo), jnp.float32),
        in_specs=[_VMEM] * 6,
        out_specs=_VMEM,
    )(*slabs, w, b)
    return jnp.transpose(y.reshape(cout, N, ho, wo), (1, 0, 2, 3))


def cnn_encoder(x, p):
    # x: (N, 3, H, W) -> (N, C3*(H//8)*(W//8)); flatten order matches PyTorch .view on NCHW.
    N = x.shape[0]
    x = conv_bn_relu_pool(x, p["conv1_w"], p["conv1_b"])
    x = conv_bn_relu_pool(x, p["conv2_w"], p["conv2_b"])
    x = conv_bn_relu_pool(x, p["conv3_w"], p["conv3_b"])
    return x.reshape(N, -1)


# ---------- fused BAE kernel: MLP + 4 attentions + node/edge scatter (one call) ----------

def _bae_kernel(x_ref, opt_ref, logm_ref,
                enc_w, enc_b, mu_w, mu_b, d1_w, d1_b,
                d2e_w, d2e_b, d2n_w, d2n_b,
                on_w, on_b, oe_w, oe_b, ln_w, ln_b, le_w, le_b,
                s_on, s_oe, s_ln, s_le,
                edge_ref, eadd_ref, node_ref):
    f32 = jnp.float32
    dot = lambda a, b: jnp.dot(a, b, preferred_element_type=f32)

    # ---- encoder -> mu (z = mu in eval; logvar is discarded by OutterBAE, so skipped) ----
    x = x_ref[...]
    h1 = jnp.maximum(dot(x, enc_w[...]) + enc_b[...], 0.0)    # Linear+ReLU (enc BN folded into mu_w)
    mu = dot(h1, mu_w[...]) + mu_b[...]
    # ---- decoder (dec BN folded into d2*_w) ----
    h2 = jnp.maximum(dot(mu, d1_w[...]) + d1_b[...], 0.0)
    edge_raw = dot(h2, d2e_w[...]) + d2e_b[...]               # (B, 900)
    node_raw = dot(h2, d2n_w[...]) + d2n_b[...]               # (B, 120)

    # ---- BaseAttention (sequence length 1); q/k/v fused into one projection matmul ----
    def attend(feat, w_ref, b_ref, hid, pad, out):
        proj = dot(feat, w_ref[...]) + b_ref[...]             # layout: [q | pad | k | pad | v]
        q = proj[:, 0:hid]
        k = proj[:, pad:pad + hid]
        v = proj[:, 2 * pad:2 * pad + out]
        s = jnp.sum(q * k, axis=-1, keepdims=True) / jnp.float32(math.sqrt(hid))
        inf = jnp.float32(jnp.inf)
        s = jnp.where(jnp.abs(s) == inf, jnp.float32(0.0), s)   # masked_fill_(isinf, 0)
        wgt = jnp.exp(s - s)                                    # softmax over the length-1 axis
        wgt = wgt * (jnp.abs(s) < inf).astype(f32)              # * isfinite(post-fill scores)
        return wgt * v                                          # attention dropout = identity (eval)

    opt = opt_ref[...]
    logm = logm_ref[...]
    att_on = attend(opt, on_w, on_b, OPT_HID, OPT_PAD, len(OPTICAL_NODES))
    att_oe = attend(opt, oe_w, oe_b, OPT_HID, OPT_PAD, len(OPTICAL_EDGES))
    att_ln = attend(logm, ln_w, ln_b, LOG_HID, LOG_PAD, len(LOG_NODES))
    att_le = attend(logm, le_w, le_b, LOG_HID, LOG_PAD, len(LOG_EDGES))

    # ---- scatter-adds of attention outputs expressed as matmuls with 0/1 matrices ----
    edge_ref[...] = edge_raw
    eadd_ref[...] = dot(att_oe, s_oe[...]) + dot(att_le, s_le[...])
    node_ref[...] = node_raw + dot(att_on, s_on[...]) + dot(att_ln, s_ln[...])


def bae_fused(x, opt, log_mean, p):
    B = x.shape[0]
    outs = (jax.ShapeDtypeStruct((B, EDGE_DIM), jnp.float32),   # decoder edge part (pre-symmetrize)
            jax.ShapeDtypeStruct((B, EDGE_DIM), jnp.float32),   # attention edge scatter contribution
            jax.ShapeDtypeStruct((B, NODE_FLAT), jnp.float32))  # final node representation (flat)
    return pl.pallas_call(
        _bae_kernel,
        out_shape=outs,
        in_specs=[_VMEM] * 25,
        out_specs=(_VMEM, _VMEM, _VMEM),
    )(x, opt, log_mean,
      p["enc_w"], p["enc_b"], p["mu_w"], p["mu_b"], p["dec1_w"], p["dec1_b"],
      p["dec2_edge_w"], p["dec2_edge_b"], p["dec2_node_w"], p["dec2_node_b"],
      p["opt_node_w"], p["opt_node_b"], p["opt_edge_w"], p["opt_edge_b"],
      p["log_node_w"], p["log_node_b"], p["log_edge_w"], p["log_edge_b"],
      p["s_opt_node"], p["s_opt_edge"], p["s_log_node"], p["s_log_edge"])


# ----------------------------- forward pass (JAX glue) --------------------------------

def log_processor(log):
    # (x - mean(0,1)) / (std(0,1, unbiased) + 1e-5), as in OutterBAE.log_processor
    mean = jnp.mean(log, axis=(0, 1), keepdims=True)
    std = jnp.std(log, axis=(0, 1), keepdims=True, ddof=1) + 1e-5
    return (log - mean) / std


def outter_bae_forward(params, original, optical, log):
    B = original.shape[0]
    # mean over the frame axis T; both image streams batched through a SINGLE CNN pass
    frames = jnp.concatenate([jnp.mean(original, axis=1), jnp.mean(optical, axis=1)], axis=0)
    feat = cnn_encoder(frames, params["cnn"])                  # (2B, flat)
    orig_feat, opt_feat = feat[:B], feat[B:]

    logn = log_processor(log)
    log_mean = jnp.mean(logn, axis=1)                          # (B, 9)

    edge_raw, edge_add, node_flat = bae_fused(orig_feat, opt_feat, log_mean, params["bae"])

    # tiny epilogue left to XLA: reshape, symmetrize, add the in-kernel scatter result
    edge = edge_raw.reshape(B, NODE_DIM, NODE_DIM)
    edge = (edge + jnp.swapaxes(edge, -1, -2)) / 2             # BAE.decode(); the second
    # symmetrization in BAE.forward() is an exact no-op on an already-symmetric matrix.
    edge = edge + edge_add.reshape(B, NODE_DIM, NODE_DIM)
    node = node_flat.reshape(B, NODE_DIM, NUM_FEAT)
    return edge, node


# ----------------------------- parameter init ------------------------------------------

def _node_scatter(node_list):
    m = np.zeros((len(node_list), NODE_FLAT), np.float32)
    for idx, n in enumerate(node_list):
        m[idx, n * NUM_FEAT:(n + 1) * NUM_FEAT] = 1.0          # broadcast over the 4 features
    return jnp.asarray(m)


def _edge_scatter(edge_list):
    m = np.zeros((len(edge_list), EDGE_DIM), np.float32)
    for idx, (i, j) in enumerate(edge_list):
        m[idx, i * NODE_DIM + j] = 1.0
    return jnp.asarray(m)


def init_params(key, input_size):
    H, W = input_size
    c1, c2, c3 = (ARGS.cnn_encoder_channels1, ARGS.cnn_encoder_channels2,
                  ARGS.cnn_encoder_channels3)
    flat = c3 * (H // 8) * (W // 8)
    hidden, latent = ARGS.bae_hidden_size, ARGS.bae_latent_size
    keys = iter(jax.random.split(key, 32))

    def kaiming(fan_in, shape):
        # kaiming_normal_ (fan_in, relu gain); all biases are zero (nn.init.constant_(bias, 0))
        return jax.random.normal(next(keys), shape, jnp.float32) * math.sqrt(2.0 / fan_in)

    # CNN convs, eval BatchNorm2d scale folded into weight & bias
    cnn = {}
    for name, cin, cout in (("conv1", 3, c1), ("conv2", c1, c2), ("conv3", c2, c3)):
        cnn[name + "_w"] = kaiming(9 * cin, (cout, 9 * cin)) * BN_SCALE
        cnn[name + "_b"] = jnp.zeros((cout, 1), jnp.float32)

    def lin(fan_in, fan_out):
        return kaiming(fan_in, (fan_in, fan_out)), jnp.zeros((1, fan_out), jnp.float32)

    def att_qkv(in_dim, hid, out_dim, pad):
        wq, bq = lin(in_dim, hid)
        wk, bk = lin(in_dim, hid)
        wv, bv = lin(in_dim, out_dim)
        if pad > hid:                                          # zero-pad so slice starts are 128-aligned
            zw = jnp.zeros((in_dim, pad - hid), jnp.float32)
            zb = jnp.zeros((1, pad - hid), jnp.float32)
            w = jnp.concatenate([wq, zw, wk, zw, wv], axis=1)
            b = jnp.concatenate([bq, zb, bk, zb, bv], axis=1)
        else:
            w = jnp.concatenate([wq, wk, wv], axis=1)
            b = jnp.concatenate([bq, bk, bv], axis=1)
        return w, b

    enc_w, enc_b = lin(flat, hidden)
    mu_w, mu_b = lin(hidden, latent)
    mu_w = mu_w * BN_SCALE                  # fold encoder BatchNorm1d (eval) into fc_mu
    # fc_logvar exists in the module, but OutterBAE discards logvar -> dead compute, omitted
    d1_w, d1_b = lin(latent, hidden)
    d2_w, d2_b = lin(hidden, EDGE_DIM + NODE_FLAT)
    d2_w = d2_w * BN_SCALE                  # fold decoder BatchNorm1d (eval) into the final Linear

    opt_node_w, opt_node_b = att_qkv(flat, OPT_HID, len(OPTICAL_NODES), OPT_PAD)
    opt_edge_w, opt_edge_b = att_qkv(flat, OPT_HID, len(OPTICAL_EDGES), OPT_PAD)
    log_node_w, log_node_b = att_qkv(9, LOG_HID, len(LOG_NODES), LOG_PAD)
    log_edge_w, log_edge_b = att_qkv(9, LOG_HID, len(LOG_EDGES), LOG_PAD)

    bae = {
        "enc_w": enc_w, "enc_b": enc_b,
        "mu_w": mu_w, "mu_b": mu_b,
        "dec1_w": d1_w, "dec1_b": d1_b,
        # split edge/node heads -> every in-kernel slice/store starts lane-aligned
        "dec2_edge_w": d2_w[:, :EDGE_DIM], "dec2_edge_b": d2_b[:, :EDGE_DIM],
        "dec2_node_w": d2_w[:, EDGE_DIM:], "dec2_node_b": d2_b[:, EDGE_DIM:],
        "opt_node_w": opt_node_w, "opt_node_b": opt_node_b,
        "opt_edge_w": opt_edge_w, "opt_edge_b": opt_edge_b,
        "log_node_w": log_node_w, "log_node_b": log_node_b,
        "log_edge_w": log_edge_w, "log_edge_b": log_edge_b,
        "s_opt_node": _node_scatter(OPTICAL_NODES),
        "s_opt_edge": _edge_scatter(OPTICAL_EDGES),
        "s_log_node": _node_scatter(LOG_NODES),
        "s_log_edge": _edge_scatter(LOG_EDGES),
    }
    return {"cnn": cnn, "bae": bae}


# ----------------------------- main ------------------------------------------------------

if __name__ == "__main__":
    B, T, S = 2, 4, 8
    H = W = 16

    params = init_params(jax.random.PRNGKey(0), (H, W))
    k1, k2, k3 = jax.random.split(jax.random.PRNGKey(0), 3)
    original = jax.random.normal(k1, (B, T, 3, H, W), jnp.float32)
    optical = jax.random.normal(k2, (B, T, 3, H, W), jnp.float32)
    log = jax.random.normal(k3, (B, S, 9), jnp.float32)

    edge_repr, node_repr = jax.jit(outter_bae_forward)(params, original, optical, log)
    jax.block_until_ready((edge_repr, node_repr))

    assert edge_repr.shape == (B, NODE_DIM, NODE_DIM)
    assert node_repr.shape == (B, NODE_DIM, NUM_FEAT)
    # host-side stand-in for the module's check_nan()
    assert bool(jnp.all(jnp.isfinite(edge_repr))) and bool(jnp.all(jnp.isfinite(node_repr)))
    print("KERNEL_OK")
</pallas_src>

<mosaic_0001>
module attributes {stable_mosaic.version = 11 : i64} {
  func.func @_conv_pool_kernel(%arg0: memref<27x256xf32, #tpu.memory_space<vmem>>, %arg1: memref<27x256xf32, #tpu.memory_space<vmem>>, %arg2: memref<27x256xf32, #tpu.memory_space<vmem>>, %arg3: memref<27x256xf32, #tpu.memory_space<vmem>>, %arg4: memref<4x27xf32, #tpu.memory_space<vmem>>, %arg5: memref<4x1xf32, #tpu.memory_space<vmem>>, %arg6: memref<4x256xf32, #tpu.memory_space<vmem>>) attributes {dimension_semantics = [], scalar_prefetch = 0 : i64, scratch_operands = 0 : i64, tpu.core_type = #tpu.core_type<tc>} {
    %c0 = arith.constant 0 : index
    %c0_0 = arith.constant 0 : index
    %0 = vector.load %arg4[%c0, %c0_0] : memref<4x27xf32, #tpu.memory_space<vmem>>, vector<4x27xf32>
    %c0_1 = arith.constant 0 : index
    %c0_2 = arith.constant 0 : index
    %1 = vector.load %arg0[%c0_1, %c0_2] : memref<27x256xf32, #tpu.memory_space<vmem>>, vector<27x256xf32>
    %cst = arith.constant dense<0.000000e+00> : vector<4x256xf32>
    %2 = tpu.matmul %0, %1, %cst {dimension_numbers = #tpu.dot_dimension_numbers<[1], [0], [0], [1], [0, 0, 1, 1], [], []>} : vector<4x27xf32>, vector<27x256xf32>, vector<4x256xf32> -> vector<4x256xf32>
    %c0_3 = arith.constant 0 : index
    %c0_4 = arith.constant 0 : index
    %3 = vector.load %arg1[%c0_3, %c0_4] : memref<27x256xf32, #tpu.memory_space<vmem>>, vector<27x256xf32>
    %cst_5 = arith.constant dense<0.000000e+00> : vector<4x256xf32>
    %4 = tpu.matmul %0, %3, %cst_5 {dimension_numbers = #tpu.dot_dimension_numbers<[1], [0], [0], [1], [0, 0, 1, 1], [], []>} : vector<4x27xf32>, vector<27x256xf32>, vector<4x256xf32> -> vector<4x256xf32>
    %5 = arith.maximumf %2, %4 : vector<4x256xf32>
    %c0_6 = arith.constant 0 : index
    %c0_7 = arith.constant 0 : index
    %6 = vector.load %arg2[%c0_6, %c0_7] : memref<27x256xf32, #tpu.memory_space<vmem>>, vector<27x256xf32>
    %cst_8 = arith.constant dense<0.000000e+00> : vector<4x256xf32>
    %7 = tpu.matmul %0, %6, %cst_8 {dimension_numbers = #tpu.dot_dimension_numbers<[1], [0], [0], [1], [0, 0, 1, 1], [], []>} : vector<4x27xf32>, vector<27x256xf32>, vector<4x256xf32> -> vector<4x256xf32>
    %c0_9 = arith.constant 0 : index
    %c0_10 = arith.constant 0 : index
    %8 = vector.load %arg3[%c0_9, %c0_10] : memref<27x256xf32, #tpu.memory_space<vmem>>, vector<27x256xf32>
    %cst_11 = arith.constant dense<0.000000e+00> : vector<4x256xf32>
    %9 = tpu.matmul %0, %8, %cst_11 {dimension_numbers = #tpu.dot_dimension_numbers<[1], [0], [0], [1], [0, 0, 1, 1], [], []>} : vector<4x27xf32>, vector<27x256xf32>, vector<4x256xf32> -> vector<4x256xf32>
    %10 = arith.maximumf %7, %9 : vector<4x256xf32>
    %11 = arith.maximumf %5, %10 : vector<4x256xf32>
    %c0_12 = arith.constant 0 : index
    %c0_13 = arith.constant 0 : index
    %12 = vector.load %arg5[%c0_12, %c0_13] : memref<4x1xf32, #tpu.memory_space<vmem>>, vector<4x1xf32>
    %13 = vector.broadcast %12 : vector<4x1xf32> to vector<4x256xf32>
    %14 = arith.addf %11, %13 : vector<4x256xf32>
    %cst_14 = arith.constant 0.000000e+00 : f32
    %15 = vector.broadcast %cst_14 : f32 to vector<4x256xf32>
    %16 = arith.maximumf %14, %15 : vector<4x256xf32>
    %c0_15 = arith.constant 0 : index
    %c0_16 = arith.constant 0 : index
    %17 = vector.load %arg6[%c0_15, %c0_16] : memref<4x256xf32, #tpu.memory_space<vmem>>, vector<4x256xf32>
    tpu.vector_store %arg6[%c0_15, %c0_16], %16 {strides = array<i32>} : memref<4x256xf32, #tpu.memory_space<vmem>>, vector<4x256xf32>,
    return
  }
}

module attributes {stable_mosaic.version = 11 : i64} {
  func.func @_conv_pool_kernel(%arg0: memref<36x64xf32, #tpu.memory_space<vmem>>, %arg1: memref<36x64xf32, #tpu.memory_space<vmem>>, %arg2: memref<36x64xf32, #tpu.memory_space<vmem>>, %arg3: memref<36x64xf32, #tpu.memory_space<vmem>>, %arg4: memref<8x36xf32, #tpu.memory_space<vmem>>, %arg5: memref<8x1xf32, #tpu.memory_space<vmem>>, %arg6: memref<8x64xf32, #tpu.memory_space<vmem>>) attributes {dimension_semantics = [], scalar_prefetch = 0 : i64, scratch_operands = 0 : i64, tpu.core_type = #tpu.core_type<tc>} {
    %c0 = arith.constant 0 : index
    %c0_0 = arith.constant 0 : index
    %0 = vector.load %arg4[%c0, %c0_0] : memref<8x36xf32, #tpu.memory_space<vmem>>, vector<8x36xf32>
    %c0_1 = arith.constant 0 : index
    %c0_2 = arith.constant 0 : index
    %1 = vector.load %arg0[%c0_1, %c0_2] : memref<36x64xf32, #tpu.memory_space<vmem>>, vector<36x64xf32>
    %cst = arith.constant dense<0.000000e+00> : vector<8x64xf32>
    %2 = tpu.matmul %0, %1, %cst {dimension_numbers = #tpu.dot_dimension_numbers<[1], [0], [0], [1], [0, 0, 1, 1], [], []>} : vector<8x36xf32>, vector<36x64xf32>, vector<8x64xf32> -> vector<8x64xf32>
    %c0_3 = arith.constant 0 : index
    %c0_4 = arith.constant 0 : index
    %3 = vector.load %arg1[%c0_3, %c0_4] : memref<36x64xf32, #tpu.memory_space<vmem>>, vector<36x64xf32>
    %cst_5 = arith.constant dense<0.000000e+00> : vector<8x64xf32>
    %4 = tpu.matmul %0, %3, %cst_5 {dimension_numbers = #tpu.dot_dimension_numbers<[1], [0], [0], [1], [0, 0, 1, 1], [], []>} : vector<8x36xf32>, vector<36x64xf32>, vector<8x64xf32> -> vector<8x64xf32>
    %5 = arith.maximumf %2, %4 : vector<8x64xf32>
    %c0_6 = arith.constant 0 : index
    %c0_7 = arith.constant 0 : index
    %6 = vector.load %arg2[%c0_6, %c0_7] : memref<36x64xf32, #tpu.memory_space<vmem>>, vector<36x64xf32>
    %cst_8 = arith.constant dense<0.000000e+00> : vector<8x64xf32>
    %7 = tpu.matmul %0, %6, %cst_8 {dimension_numbers = #tpu.dot_dimension_numbers<[1], [0], [0], [1], [0, 0, 1, 1], [], []>} : vector<8x36xf32>, vector<36x64xf32>, vector<8x64xf32> -> vector<8x64xf32>
    %c0_9 = arith.constant 0 : index
    %c0_10 = arith.constant 0 : index
    %8 = vector.load %arg3[%c0_9, %c0_10] : memref<36x64xf32, #tpu.memory_space<vmem>>, vector<36x64xf32>
    %cst_11 = arith.constant dense<0.000000e+00> : vector<8x64xf32>
    %9 = tpu.matmul %0, %8, %cst_11 {dimension_numbers = #tpu.dot_dimension_numbers<[1], [0], [0], [1], [0, 0, 1, 1], [], []>} : vector<8x36xf32>, vector<36x64xf32>, vector<8x64xf32> -> vector<8x64xf32>
    %10 = arith.maximumf %7, %9 : vector<8x64xf32>
    %11 = arith.maximumf %5, %10 : vector<8x64xf32>
    %c0_12 = arith.constant 0 : index
    %c0_13 = arith.constant 0 : index
    %12 = vector.load %arg5[%c0_12, %c0_13] : memref<8x1xf32, #tpu.memory_space<vmem>>, vector<8x1xf32>
    %13 = vector.broadcast %12 : vector<8x1xf32> to vector<8x64xf32>
    %14 = arith.addf %11, %13 : vector<8x64xf32>
    %cst_14 = arith.constant 0.000000e+00 : f32
    %15 = vector.broadcast %cst_14 : f32 to vector<8x64xf32>
    %16 = arith.maximumf %14, %15 : vector<8x64xf32>
    %c0_15 = arith.constant 0 : index
    %c0_16 = arith.constant 0 : index
    %17 = vector.load %arg6[%c0_15, %c0_16] : memref<8x64xf32, #tpu.memory_space<vmem>>, vector<8x64xf32>
    tpu.vector_store %arg6[%c0_15, %c0_16], %16 {strides = array<i32>} : memref<8x64xf32, #tpu.memory_space<vmem>>, vector<8x64xf32>,
    return
  }
}

module attributes {stable_mosaic.version = 11 : i64} {
  func.func @_conv_pool_kernel(%arg0: memref<72x16xf32, #tpu.memory_space<vmem>>, %arg1: memref<72x16xf32, #tpu.memory_space<vmem>>, %arg2: memref<72x16xf32, #tpu.memory_space<vmem>>, %arg3: memref<72x16xf32, #tpu.memory_space<vmem>>, %arg4: memref<8x72xf32, #tpu.memory_space<vmem>>, %arg5: memref<8x1xf32, #tpu.memory_space<vmem>>, %arg6: memref<8x16xf32, #tpu.memory_space<vmem>>) attributes {dimension_semantics = [], scalar_prefetch = 0 : i64, scratch_operands = 0 : i64, tpu.core_type = #tpu.core_type<tc>} {
    %c0 = arith.constant 0 : index
    %c0_0 = arith.constant 0 : index
    %0 = vector.load %arg4[%c0, %c0_0] : memref<8x72xf32, #tpu.memory_space<vmem>>, vector<8x72xf32>
    %c0_1 = arith.constant 0 : index
    %c0_2 = arith.constant 0 : index
    %1 = vector.load %arg0[%c0_1, %c0_2] : memref<72x16xf32, #tpu.memory_space<vmem>>, vector<72x16xf32>
    %cst = arith.constant dense<0.000000e+00> : vector<8x16xf32>
    %2 = tpu.matmul %0, %1, %cst {dimension_numbers = #tpu.dot_dimension_numbers<[1], [0], [0], [1], [0, 0, 1, 1], [], []>} : vector<8x72xf32>, vector<72x16xf32>, vector<8x16xf32> -> vector<8x16xf32>
    %c0_3 = arith.constant 0 : index
    %c0_4 = arith.constant 0 : index
    %3 = vector.load %arg1[%c0_3, %c0_4] : memref<72x16xf32, #tpu.memory_space<vmem>>, vector<72x16xf32>
    %cst_5 = arith.constant dense<0.000000e+00> : vector<8x16xf32>
    %4 = tpu.matmul %0, %3, %cst_5 {dimension_numbers = #tpu.dot_dimension_numbers<[1], [0], [0], [1], [0, 0, 1, 1], [], []>} : vector<8x72xf32>, vector<72x16xf32>, vector<8x16xf32> -> vector<8x16xf32>
    %5 = arith.maximumf %2, %4 : vector<8x16xf32>
    %c0_6 = arith.constant 0 : index
    %c0_7 = arith.constant 0 : index
    %6 = vector.load %arg2[%c0_6, %c0_7] : memref<72x16xf32, #tpu.memory_space<vmem>>, vector<72x16xf32>
    %cst_8 = arith.constant dense<0.000000e+00> : vector<8x16xf32>
    %7 = tpu.matmul %0, %6, %cst_8 {dimension_numbers = #tpu.dot_dimension_numbers<[1], [0], [0], [1], [0, 0, 1, 1], [], []>} : vector<8x72xf32>, vector<72x16xf32>, vector<8x16xf32> -> vector<8x16xf32>
    %c0_9 = arith.constant 0 : index
    %c0_10 = arith.constant 0 : index
    %8 = vector.load %arg3[%c0_9, %c0_10] : memref<72x16xf32, #tpu.memory_space<vmem>>, vector<72x16xf32>
    %cst_11 = arith.constant dense<0.000000e+00> : vector<8x16xf32>
    %9 = tpu.matmul %0, %8, %cst_11 {dimension_numbers = #tpu.dot_dimension_numbers<[1], [0], [0], [1], [0, 0, 1, 1], [], []>} : vector<8x72xf32>, vector<72x16xf32>, vector<8x16xf32> -> vector<8x16xf32>
    %10 = arith.maximumf %7, %9 : vector<8x16xf32>
    %11 = arith.maximumf %5, %10 : vector<8x16xf32>
    %c0_12 = arith.constant 0 : index
    %c0_13 = arith.constant 0 : index
    %12 = vector.load %arg5[%c0_12, %c0_13] : memref<8x1xf32, #tpu.memory_space<vmem>>, vector<8x1xf32>
    %13 = vector.broadcast %12 : vector<8x1xf32> to vector<8x16xf32>
    %14 = arith.addf %11, %13 : vector<8x16xf32>
    %cst_14 = arith.constant 0.000000e+00 : f32
    %15 = vector.broadcast %cst_14 : f32 to vector<8x16xf32>
    %16 = arith.maximumf %14, %15 : vector<8x16xf32>
    %c0_15 = arith.constant 0 : index
    %c0_16 = arith.constant 0 : index
    %17 = vector.load %arg6[%c0_15, %c0_16] : memref<8x16xf32, #tpu.memory_space<vmem>>, vector<8x16xf32>
    tpu.vector_store %arg6[%c0_15, %c0_16], %16 {strides = array<i32>} : memref<8x16xf32, #tpu.memory_space<vmem>>, vector<8x16xf32>,
    return
  }
}

module attributes {stable_mosaic.version = 11 : i64} {
  func.func @_bae_kernel(%arg0: memref<2x32xf32, #tpu.memory_space<vmem>>, %arg1: memref<2x32xf32, #tpu.memory_space<vmem>>, %arg2: memref<2x9xf32, #tpu.memory_space<vmem>>, %arg3: memref<32x32xf32, #tpu.memory_space<vmem>>, %arg4: memref<1x32xf32, #tpu.memory_space<vmem>>, %arg5: memref<32x16xf32, #tpu.memory_space<vmem>>, %arg6: memref<1x16xf32, #tpu.memory_space<vmem>>, %arg7: memref<16x32xf32, #tpu.memory_space<vmem>>, %arg8: memref<1x32xf32, #tpu.memory_space<vmem>>, %arg9: memref<32x900xf32, #tpu.memory_space<vmem>>, %arg10: memref<1x900xf32, #tpu.memory_space<vmem>>, %arg11: memref<32x120xf32, #tpu.memory_space<vmem>>, %arg12: memref<1x120xf32, #tpu.memory_space<vmem>>, %arg13: memref<32x1034xf32, #tpu.memory_space<vmem>>, %arg14: memref<1x1034xf32, #tpu.memory_space<vmem>>, %arg15: memref<32x1079xf32, #tpu.memory_space<vmem>>, %arg16: memref<1x1079xf32, #tpu.memory_space<vmem>>, %arg17: memref<9x268xf32, #tpu.memory_space<vmem>>, %arg18: memref<1x268xf32, #tpu.memory_space<vmem>>, %arg19: memref<9x334xf32, #tpu.memory_space<vmem>>, %arg20: memref<1x334xf32, #tpu.memory_space<vmem>>, %arg21: memref<10x120xf32, #tpu.memory_space<vmem>>, %arg22: memref<55x900xf32, #tpu.memory_space<vmem>>, %arg23: memref<12x120xf32, #tpu.memory_space<vmem>>, %arg24: memref<78x900xf32, #tpu.memory_space<vmem>>, %arg25: memref<2x900xf32, #tpu.memory_space<vmem>>, %arg26: memref<2x900xf32, #tpu.memory_space<vmem>>, %arg27: memref<2x120xf32, #tpu.memory_space<vmem>>) attributes {dimension_semantics = [], scalar_prefetch = 0 : i64, scratch_operands = 0 : i64, tpu.core_type = #tpu.core_type<tc>} {
    %c0 = arith.constant 0 : index
    %c0_0 = arith.constant 0 : index
    %0 = vector.load %arg0[%c0, %c0_0] : memref<2x32xf32, #tpu.memory_space<vmem>>, vector<2x32xf32>
    %c0_1 = arith.constant 0 : index
    %c0_2 = arith.constant 0 : index
    %1 = vector.load %arg3[%c0_1, %c0_2] : memref<32x32xf32, #tpu.memory_space<vmem>>, vector<32x32xf32>
    %cst = arith.constant dense<0.000000e+00> : vector<2x32xf32>
    %2 = tpu.matmul %0, %1, %cst {dimension_numbers = #tpu.dot_dimension_numbers<[1], [0], [0], [1], [0, 0, 1, 1], [], []>} : vector<2x32xf32>, vector<32x32xf32>, vector<2x32xf32> -> vector<2x32xf32>
    %c0_3 = arith.constant 0 : index
    %c0_4 = arith.constant 0 : index
    %3 = vector.load %arg4[%c0_3, %c0_4] : memref<1x32xf32, #tpu.memory_space<vmem>>, vector<1x32xf32>
    %4 = vector.broadcast %3 : vector<1x32xf32> to vector<2x32xf32>
    %5 = arith.addf %2, %4 : vector<2x32xf32>
    %cst_5 = arith.constant 0.000000e+00 : f32
    %6 = vector.broadcast %cst_5 : f32 to vector<2x32xf32>
    %7 = arith.maximumf %5, %6 : vector<2x32xf32>
    %c0_6 = arith.constant 0 : index
    %c0_7 = arith.constant 0 : index
    %8 = vector.load %arg5[%c0_6, %c0_7] : memref<32x16xf32, #tpu.memory_space<vmem>>, vector<32x16xf32>
    %cst_8 = arith.constant dense<0.000000e+00> : vector<2x16xf32>
    %9 = tpu.matmul %7, %8, %cst_8 {dimension_numbers = #tpu.dot_dimension_numbers<[1], [0], [0], [1], [0, 0, 1, 1], [], []>} : vector<2x32xf32>, vector<32x16xf32>, vector<2x16xf32> -> vector<2x16xf32>
    %c0_9 = arith.constant 0 : index
    %c0_10 = arith.constant 0 : index
    %10 = vector.load %arg6[%c0_9, %c0_10] : memref<1x16xf32, #tpu.memory_space<vmem>>, vector<1x16xf32>
    %11 = vector.broadcast %10 : vector<1x16xf32> to vector<2x16xf32>
    %12 = arith.addf %9, %11 : vector<2x16xf32>
    %c0_11 = arith.constant 0 : index
    %c0_12 = arith.constant 0 : index
    %13 = vector.load %arg7[%c0_11, %c0_12] : memref<16x32xf32, #tpu.memory_space<vmem>>, vector<16x32xf32>
    %cst_13 = arith.constant dense<0.000000e+00> : vector<2x32xf32>
    %14 = tpu.matmul %12, %13, %cst_13 {dimension_numbers = #tpu.dot_dimension_numbers<[1], [0], [0], [1], [0, 0, 1, 1], [], []>} : vector<2x16xf32>, vector<16x32xf32>, vector<2x32xf32> -> vector<2x32xf32>
    %c0_14 = arith.constant 0 : index
    %c0_15 = arith.constant 0 : index
    %15 = vector.load %arg8[%c0_14, %c0_15] : memref<1x32xf32, #tpu.memory_space<vmem>>, vector<1x32xf32>
    %16 = vector.broadcast %15 : vector<1x32xf32> to vector<2x32xf32>
    %17 = arith.addf %14, %16 : vector<2x32xf32>
    %cst_16 = arith.constant 0.000000e+00 : f32
    %18 = vector.broadcast %cst_16 : f32 to vector<2x32xf32>
    %19 = arith.maximumf %17, %18 : vector<2x32xf32>
    %c0_17 = arith.constant 0 : index
    %c0_18 = arith.constant 0 : index
    %20 = vector.load %arg9[%c0_17, %c0_18] : memref<32x900xf32, #tpu.memory_space<vmem>>, vector<32x900xf32>
    %cst_19 = arith.constant dense<0.000000e+00> : vector<2x900xf32>
    %21 = tpu.matmul %19, %20, %cst_19 {dimension_numbers = #tpu.dot_dimension_numbers<[1], [0], [0], [1], [0, 0, 1, 1], [], []>} : vector<2x32xf32>, vector<32x900xf32>, vector<2x900xf32> -> vector<2x900xf32>
    %c0_20 = arith.constant 0 : index
    %c0_21 = arith.constant 0 : index
    %22 = vector.load %arg10[%c0_20, %c0_21] : memref<1x900xf32, #tpu.memory_space<vmem>>, vector<1x900xf32>
    %23 = vector.broadcast %22 : vector<1x900xf32> to vector<2x900xf32>
    %24 = arith.addf %21, %23 : vector<2x900xf32>
    %c0_22 = arith.constant 0 : index
    %c0_23 = arith.constant 0 : index
    %25 = vector.load %arg11[%c0_22, %c0_23] : memref<32x120xf32, #tpu.memory_space<vmem>>, vector<32x120xf32>
    %cst_24 = arith.constant dense<0.000000e+00> : vector<2x120xf32>
    %26 = tpu.matmul %19, %25, %cst_24 {dimension_numbers = #tpu.dot_dimension_numbers<[1], [0], [0], [1], [0, 0, 1, 1], [], []>} : vector<2x32xf32>, vector<32x120xf32>, vector<2x120xf32> -> vector<2x120xf32>
    %c0_25 = arith.constant 0 : index
    %c0_26 = arith.constant 0 : index
    %27 = vector.load %arg12[%c0_25, %c0_26] : memref<1x120xf32, #tpu.memory_space<vmem>>, vector<1x120xf32>
    %28 = vector.broadcast %27 : vector<1x120xf32> to vector<2x120xf32>
    %29 = arith.addf %26, %28 : vector<2x120xf32>
    %c0_27 = arith.constant 0 : index
    %c0_28 = arith.constant 0 : index
    %30 = vector.load %arg1[%c0_27, %c0_28] : memref<2x32xf32, #tpu.memory_space<vmem>>, vector<2x32xf32>
    %c0_29 = arith.constant 0 : index
    %c0_30 = arith.constant 0 : index
    %31 = vector.load %arg2[%c0_29, %c0_30] : memref<2x9xf32, #tpu.memory_space<vmem>>, vector<2x9xf32>
    %c0_31 = arith.constant 0 : index
    %c0_32 = arith.constant 0 : index
    %32 = vector.load %arg13[%c0_31, %c0_32] : memref<32x1034xf32, #tpu.memory_space<vmem>>, vector<32x1034xf32>
    %cst_33 = arith.constant dense<0.000000e+00> : vector<2x1034xf32>
    %33 = tpu.matmul %30, %32, %cst_33 {dimension_numbers = #tpu.dot_dimension_numbers<[1], [0], [0], [1], [0, 0, 1, 1], [], []>} : vector<2x32xf32>, vector<32x1034xf32>, vector<2x1034xf32> -> vector<2x1034xf32>
    %c0_34 = arith.constant 0 : index
    %c0_35 = arith.constant 0 : index
    %34 = vector.load %arg14[%c0_34, %c0_35] : memref<1x1034xf32, #tpu.memory_space<vmem>>, vector<1x1034xf32>
    %35 = vector.broadcast %34 : vector<1x1034xf32> to vector<2x1034xf32>
    %36 = arith.addf %33, %35 : vector<2x1034xf32>
    %37 = vector.extract_strided_slice %36 {offsets = [0, 0], sizes = [2, 512], strides = [1, 1]} : vector<2x1034xf32> to vector<2x512xf32>
    %38 = vector.extract_strided_slice %36 {offsets = [0, 512], sizes = [2, 512], strides = [1, 1]} : vector<2x1034xf32> to vector<2x512xf32>
    %39 = vector.extract_strided_slice %36 {offsets = [0, 1024], sizes = [2, 10], strides = [1, 1]} : vector<2x1034xf32> to vector<2x10xf32>
    %40 = arith.mulf %37, %38 : vector<2x512xf32>
    %cst_36 = arith.constant dense<0.000000e+00> : vector<2xf32>
    %41 = vector.multi_reduction <add>, %40, %cst_36 [1] : vector<2x512xf32> to vector<2xf32>
    %42 = vector.shape_cast %41 : vector<2xf32> to vector<2x1xf32>
    %cst_37 = arith.constant 22.6274166 : f32
    %43 = vector.broadcast %cst_37 : f32 to vector<2x1xf32>
    %44 = arith.divf %42, %43 : vector<2x1xf32>
    %45 = math.absf %44 : vector<2x1xf32>
    %cst_38 = arith.constant 0x7F800000 : f32
    %46 = vector.broadcast %cst_38 : f32 to vector<2x1xf32>
    %47 = arith.cmpf oeq, %45, %46 : vector<2x1xf32>
    %cst_39 = arith.constant 0.000000e+00 : f32
    %48 = vector.broadcast %cst_39 : f32 to vector<2x1xf32>
    %49 = arith.select %47, %48, %44 : vector<2x1xi1>, vector<2x1xf32>
    %50 = arith.subf %49, %49 : vector<2x1xf32>
    %51 = math.exp %50 : vector<2x1xf32>
    %52 = math.absf %49 : vector<2x1xf32>
    %cst_40 = arith.constant 0x7F800000 : f32
    %53 = vector.broadcast %cst_40 : f32 to vector<2x1xf32>
    %54 = arith.cmpf olt, %52, %53 : vector<2x1xf32>
    %55 = arith.extui %54 : vector<2x1xi1> to vector<2x1xi32>
    %56 = arith.sitofp %55 : vector<2x1xi32> to vector<2x1xf32>
    %57 = arith.mulf %51, %56 : vector<2x1xf32>
    %58 = vector.broadcast %57 : vector<2x1xf32> to vector<2x10xf32>
    %59 = arith.mulf %58, %39 : vector<2x10xf32>
    %c0_41 = arith.constant 0 : index
    %c0_42 = arith.constant 0 : index
    %60 = vector.load %arg15[%c0_41, %c0_42] : memref<32x1079xf32, #tpu.memory_space<vmem>>, vector<32x1079xf32>
    %cst_43 = arith.constant dense<0.000000e+00> : vector<2x1079xf32>
    %61 = tpu.matmul %30, %60, %cst_43 {dimension_numbers = #tpu.dot_dimension_numbers<[1], [0], [0], [1], [0, 0, 1, 1], [], []>} : vector<2x32xf32>, vector<32x1079xf32>, vector<2x1079xf32> -> vector<2x1079xf32>
    %c0_44 = arith.constant 0 : index
    %c0_45 = arith.constant 0 : index
    %62 = vector.load %arg16[%c0_44, %c0_45] : memref<1x1079xf32, #tpu.memory_space<vmem>>, vector<1x1079xf32>
    %63 = vector.broadcast %62 : vector<1x1079xf32> to vector<2x1079xf32>
    %64 = arith.addf %61, %63 : vector<2x1079xf32>
    %65 = vector.extract_strided_slice %64 {offsets = [0, 0], sizes = [2, 512], strides = [1, 1]} : vector<2x1079xf32> to vector<2x512xf32>
    %66 = vector.extract_strided_slice %64 {offsets = [0, 512], sizes = [2, 512], strides = [1, 1]} : vector<2x1079xf32> to vector<2x512xf32>
    %67 = vector.extract_strided_slice %64 {offsets = [0, 1024], sizes = [2, 55], strides = [1, 1]} : vector<2x1079xf32> to vector<2x55xf32>
    %68 = arith.mulf %65, %66 : vector<2x512xf32>
    %cst_46 = arith.constant dense<0.000000e+00> : vector<2xf32>
    %69 = vector.multi_reduction <add>, %68, %cst_46 [1] : vector<2x512xf32> to vector<2xf32>
    %70 = vector.shape_cast %69 : vector<2xf32> to vector<2x1xf32>
    %cst_47 = arith.constant 22.6274166 : f32
    %71 = vector.broadcast %cst_47 : f32 to vector<2x1xf32>
    %72 = arith.divf %70, %71 : vector<2x1xf32>
    %73 = math.absf %72 : vector<2x1xf32>
    %cst_48 = arith.constant 0x7F800000 : f32
    %74 = vector.broadcast %cst_48 : f32 to vector<2x1xf32>
    %75 = arith.cmpf oeq, %73, %74 : vector<2x1xf32>
    %cst_49 = arith.constant 0.000000e+00 : f32
    %76 = vector.broadcast %cst_49 : f32 to vector<2x1xf32>
    %77 = arith.select %75, %76, %72 : vector<2x1xi1>, vector<2x1xf32>
    %78 = arith.subf %77, %77 : vector<2x1xf32>
    %79 = math.exp %78 : vector<2x1xf32>
    %80 = math.absf %77 : vector<2x1xf32>
    %cst_50 = arith.constant 0x7F800000 : f32
    %81 = vector.broadcast %cst_50 : f32 to vector<2x1xf32>
    %82 = arith.cmpf olt, %80, %81 : vector<2x1xf32>
    %83 = arith.extui %82 : vector<2x1xi1> to vector<2x1xi32>
    %84 = arith.sitofp %83 : vector<2x1xi32> to vector<2x1xf32>
    %85 = arith.mulf %79, %84 : vector<2x1xf32>
    %86 = vector.broadcast %85 : vector<2x1xf32> to vector<2x55xf32>
    %87 = arith.mulf %86, %67 : vector<2x55xf32>
    %c0_51 = arith.constant 0 : index
    %c0_52 = arith.constant 0 : index
    %88 = vector.load %arg17[%c0_51, %c0_52] : memref<9x268xf32, #tpu.memory_space<vmem>>, vector<9x268xf32>
    %cst_53 = arith.constant dense<0.000000e+00> : vector<2x268xf32>
    %89 = tpu.matmul %31, %88, %cst_53 {dimension_numbers = #tpu.dot_dimension_numbers<[1], [0], [0], [1], [0, 0, 1, 1], [], []>} : vector<2x9xf32>, vector<9x268xf32>, vector<2x268xf32> -> vector<2x268xf32>
    %c0_54 = arith.constant 0 : index
    %c0_55 = arith.constant 0 : index
    %90 = vector.load %arg18[%c0_54, %c0_55] : memref<1x268xf32, #tpu.memory_space<vmem>>, vector<1x268xf32>
    %91 = vector.broadcast %90 : vector<1x268xf32> to vector<2x268xf32>
    %92 = arith.addf %89, %91 : vector<2x268xf32>
    %93 = vector.extract_strided_slice %92 {offsets = [0, 0], sizes = [2, 64], strides = [1, 1]} : vector<2x268xf32> to vector<2x64xf32>
    %94 = vector.extract_strided_slice %92 {offsets = [0, 128], sizes = [2, 64], strides = [1, 1]} : vector<2x268xf32> to vector<2x64xf32>
    %95 = vector.extract_strided_slice %92 {offsets = [0, 256], sizes = [2, 12], strides = [1, 1]} : vector<2x268xf32> to vector<2x12xf32>
    %96 = arith.mulf %93, %94 : vector<2x64xf32>
    %cst_56 = arith.constant dense<0.000000e+00> : vector<2xf32>
    %97 = vector.multi_reduction <add>, %96, %cst_56 [1] : vector<2x64xf32> to vector<2xf32>
    %98 = vector.shape_cast %97 : vector<2xf32> to vector<2x1xf32>
    %cst_57 = arith.constant 8.000000e+00 : f32
    %99 = vector.broadcast %cst_57 : f32 to vector<2x1xf32>
    %100 = arith.divf %98, %99 : vector<2x1xf32>
    %101 = math.absf %100 : vector<2x1xf32>
    %cst_58 = arith.constant 0x7F800000 : f32
    %102 = vector.broadcast %cst_58 : f32 to vector<2x1xf32>
    %103 = arith.cmpf oeq, %101, %102 : vector<2x1xf32>
    %cst_59 = arith.constant 0.000000e+00 : f32
    %104 = vector.broadcast %cst_59 : f32 to vector<2x1xf32>
    %105 = arith.select %103, %104, %100 : vector<2x1xi1>, vector<2x1xf32>
    %106 = arith.subf %105, %105 : vector<2x1xf32>
    %107 = math.exp %106 : vector<2x1xf32>
    %108 = math.absf %105 : vector<2x1xf32>
    %cst_60 = arith.constant 0x7F800000 : f32
    %109 = vector.broadcast %cst_60 : f32 to vector<2x1xf32>
    %110 = arith.cmpf olt, %108, %109 : vector<2x1xf32>
    %111 = arith.extui %110 : vector<2x1xi1> to vector<2x1xi32>
    %112 = arith.sitofp %111 : vector<2x1xi32> to vector<2x1xf32>
    %113 = arith.mulf %107, %112 : vector<2x1xf32>
    %114 = vector.broadcast %113 : vector<2x1xf32> to vector<2x12xf32>
    %115 = arith.mulf %114, %95 : vector<2x12xf32>
    %c0_61 = arith.constant 0 : index
    %c0_62 = arith.constant 0 : index
    %116 = vector.load %arg19[%c0_61, %c0_62] : memref<9x334xf32, #tpu.memory_space<vmem>>, vector<9x334xf32>
    %cst_63 = arith.constant dense<0.000000e+00> : vector<2x334xf32>
    %117 = tpu.matmul %31, %116, %cst_63 {dimension_numbers = #tpu.dot_dimension_numbers<[1], [0], [0], [1], [0, 0, 1, 1], [], []>} : vector<2x9xf32>, vector<9x334xf32>, vector<2x334xf32> -> vector<2x334xf32>
    %c0_64 = arith.constant 0 : index
    %c0_65 = arith.constant 0 : index
    %118 = vector.load %arg20[%c0_64, %c0_65] : memref<1x334xf32, #tpu.memory_space<vmem>>, vector<1x334xf32>
    %119 = vector.broadcast %118 : vector<1x334xf32> to vector<2x334xf32>
    %120 = arith.addf %117, %119 : vector<2x334xf32>
    %121 = vector.extract_strided_slice %120 {offsets = [0, 0], sizes = [2, 64], strides = [1, 1]} : vector<2x334xf32> to vector<2x64xf32>
    %122 = vector.extract_strided_slice %120 {offsets = [0, 128], sizes = [2, 64], strides = [1, 1]} : vector<2x334xf32> to vector<2x64xf32>
    %123 = vector.extract_strided_slice %120 {offsets = [0, 256], sizes = [2, 78], strides = [1, 1]} : vector<2x334xf32> to vector<2x78xf32>
    %124 = arith.mulf %121, %122 : vector<2x64xf32>
    %cst_66 = arith.constant dense<0.000000e+00> : vector<2xf32>
    %125 = vector.multi_reduction <add>, %124, %cst_66 [1] : vector<2x64xf32> to vector<2xf32>
    %126 = vector.shape_cast %125 : vector<2xf32> to vector<2x1xf32>
    %cst_67 = arith.constant 8.000000e+00 : f32
    %127 = vector.broadcast %cst_67 : f32 to vector<2x1xf32>
    %128 = arith.divf %126, %127 : vector<2x1xf32>
    %129 = math.absf %128 : vector<2x1xf32>
    %cst_68 = arith.constant 0x7F800000 : f32
    %130 = vector.broadcast %cst_68 : f32 to vector<2x1xf32>
    %131 = arith.cmpf oeq, %129, %130 : vector<2x1xf32>
    %cst_69 = arith.constant 0.000000e+00 : f32
    %132 = vector.broadcast %cst_69 : f32 to vector<2x1xf32>
    %133 = arith.select %131, %132, %128 : vector<2x1xi1>, vector<2x1xf32>
    %134 = arith.subf %133, %133 : vector<2x1xf32>
    %135 = math.exp %134 : vector<2x1xf32>
    %136 = math.absf %133 : vector<2x1xf32>
    %cst_70 = arith.constant 0x7F800000 : f32
    %137 = vector.broadcast %cst_70 : f32 to vector<2x1xf32>
    %138 = arith.cmpf olt, %136, %137 : vector<2x1xf32>
    %139 = arith.extui %138 : vector<2x1xi1> to vector<2x1xi32>
    %140 = arith.sitofp %139 : vector<2x1xi32> to vector<2x1xf32>
    %141 = arith.mulf %135, %140 : vector<2x1xf32>
    %142 = vector.broadcast %141 : vector<2x1xf32> to vector<2x78xf32>
    %143 = arith.mulf %142, %123 : vector<2x78xf32>
    %c0_71 = arith.constant 0 : index
    %c0_72 = arith.constant 0 : index
    %144 = vector.load %arg25[%c0_71, %c0_72] : memref<2x900xf32, #tpu.memory_space<vmem>>, vector<2x900xf32>
    tpu.vector_store %arg25[%c0_71, %c0_72], %24 {strides = array<i32>} : memref<2x900xf32, #tpu.memory_space<vmem>>, vector<2x900xf32>,
    %c0_73 = arith.constant 0 : index
    %c0_74 = arith.constant 0 : index
    %145 = vector.load %arg22[%c0_73, %c0_74] : memref<55x900xf32, #tpu.memory_space<vmem>>, vector<55x900xf32>
    %cst_75 = arith.constant dense<0.000000e+00> : vector<2x900xf32>
    %146 = tpu.matmul %87, %145, %cst_75 {dimension_numbers = #tpu.dot_dimension_numbers<[1], [0], [0], [1], [0, 0, 1, 1], [], []>} : vector<2x55xf32>, vector<55x900xf32>, vector<2x900xf32> -> vector<2x900xf32>
    %c0_76 = arith.constant 0 : index
    %c0_77 = arith.constant 0 : index
    %147 = vector.load %arg24[%c0_76, %c0_77] : memref<78x900xf32, #tpu.memory_space<vmem>>, vector<78x900xf32>
    %cst_78 = arith.constant dense<0.000000e+00> : vector<2x900xf32>
    %148 = tpu.matmul %143, %147, %cst_78 {dimension_numbers = #tpu.dot_dimension_numbers<[1], [0], [0], [1], [0, 0, 1, 1], [], []>} : vector<2x78xf32>, vector<78x900xf32>, vector<2x900xf32> -> vector<2x900xf32>
    %149 = arith.addf %146, %148 : vector<2x900xf32>
    %c0_79 = arith.constant 0 : index
    %c0_80 = arith.constant 0 : index
    %150 = vector.load %arg26[%c0_79, %c0_80] : memref<2x900xf32, #tpu.memory_space<vmem>>, vector<2x900xf32>
    tpu.vector_store %arg26[%c0_79, %c0_80], %149 {strides = array<i32>} : memref<2x900xf32, #tpu.memory_space<vmem>>, vector<2x900xf32>,
    %c0_81 = arith.constant 0 : index
    %c0_82 = arith.constant 0 : index
    %151 = vector.load %arg21[%c0_81, %c0_82] : memref<10x120xf32, #tpu.memory_space<vmem>>, vector<10x120xf32>
    %cst_83 = arith.constant dense<0.000000e+00> : vector<2x120xf32>
    %152 = tpu.matmul %59, %151, %cst_83 {dimension_numbers = #tpu.dot_dimension_numbers<[1], [0], [0], [1], [0, 0, 1, 1], [], []>} : vector<2x10xf32>, vector<10x120xf32>, vector<2x120xf32> -> vector<2x120xf32>
    %153 = arith.addf %29, %152 : vector<2x120xf32>
    %c0_84 = arith.constant 0 : index
    %c0_85 = arith.constant 0 : index
    %154 = vector.load %arg23[%c0_84, %c0_85] : memref<12x120xf32, #tpu.memory_space<vmem>>, vector<12x120xf32>
    %cst_86 = arith.constant dense<0.000000e+00> : vector<2x120xf32>
    %155 = tpu.matmul %115, %154, %cst_86 {dimension_numbers = #tpu.dot_dimension_numbers<[1], [0], [0], [1], [0, 0, 1, 1], [], []>} : vector<2x12xf32>, vector<12x120xf32>, vector<2x120xf32> -> vector<2x120xf32>
    %156 = arith.addf %153, %155 : vector<2x120xf32>
    %c0_87 = arith.constant 0 : index
    %c0_88 = arith.constant 0 : index
    %157 = vector.load %arg27[%c0_87, %c0_88] : memref<2x120xf32, #tpu.memory_space<vmem>>, vector<2x120xf32>
    tpu.vector_store %arg27[%c0_87, %c0_88], %156 {strides = array<i32>} : memref<2x120xf32, #tpu.memory_space<vmem>>, vector<2x120xf32>,
    return
  }
}

</mosaic_0001>

<llo_original>
// kernel: outter_bae_forward.4
$region0: #{outter_bae_forward.4}
  #allocation0 [shape = 'u32[]', space=smem, size = 0x4, offset = 0x4, fixed_abs, tag = 'smem constant byte address 0x4 - core index']
  #allocation1 [shape = 'u32[144,128]{1,0:T(1,128)}', space=vmem, size = 0x12000, scoped, tag = 'internal scratch']
  %s0 = inlined_call_operand.vmem [shape: f32[27,256], index: 0, kind: input, shape index: {}]
  %s1 = inlined_call_operand.vmem [shape: f32[27,256], index: 1, kind: input, shape index: {}]
  %s2 = inlined_call_operand.vmem [shape: f32[27,256], index: 2, kind: input, shape index: {}]
  %s3 = inlined_call_operand.vmem [shape: f32[27,256], index: 3, kind: input, shape index: {}]
  %s4 = inlined_call_operand.vmem [shape: f32[4,27], index: 4, kind: input, shape index: {}]
  %s5 = inlined_call_operand.vmem [shape: f32[4,1], index: 5, kind: input, shape index: {}]
  %s6 = inlined_call_operand.vmem [shape: f32[4,256], index: 6, kind: output, shape index: {}]
  %s7 = sld [smem:[#allocation0]]
  $region34: #{outter_bae_forward.4} parent=0
    _
  %s9 = ssub.s32 1, %s7
  %s10 = scalar_select 0, %s9, %s7
  // Predicated region
  $region2: #{outter_bae_forward.4} parent=0 // pred_check
    _
  $region3: #{outter_bae_forward.4} parent=0 // pred_check_branch
    %12 = sbr.rel (0) target = $region5
  $region4: #{outter_bae_forward.4} parent=0 // pred_region
    _
  $region5: #{outter_bae_forward.4} parent=0 // pred_fallthru
    _
  // Predicated region
  $region6: #{outter_bae_forward.4} parent=0 // pred_check
    _
  $region7: #{outter_bae_forward.4} parent=0 // pred_check_branch
    %14 = sbr.rel (0) target = $region9
  $region8: #{outter_bae_forward.4} parent=0 // pred_region
    _
  $region9: #{outter_bae_forward.4} parent=0 // pred_fallthru
    _
  // Predicated region
  $region10: #{outter_bae_forward.4} parent=0 // pred_check
    _
  $region11: #{outter_bae_forward.4} parent=0 // pred_check_branch
    %16 = sbr.rel (0) target = $region13
  $region12: #{outter_bae_forward.4} parent=0 // pred_region
    _
  $region13: #{outter_bae_forward.4} parent=0 // pred_fallthru
    _
  // Predicated region
  $region14: #{outter_bae_forward.4} parent=0 // pred_check
    _
  $region15: #{outter_bae_forward.4} parent=0 // pred_check_branch
    %18 = sbr.rel (0) target = $region17
  $region16: #{outter_bae_forward.4} parent=0 // pred_region
    _
  $region17: #{outter_bae_forward.4} parent=0 // pred_fallthru
    _
  // Predicated region
  $region18: #{outter_bae_forward.4} parent=0 // pred_check
    _
  $region19: #{outter_bae_forward.4} parent=0 // pred_check_branch
    %20 = sbr.rel (0) target = $region21
  $region20: #{outter_bae_forward.4} parent=0 // pred_region
    _
  $region21: #{outter_bae_forward.4} parent=0 // pred_fallthru
    _
  // Predicated region
  $region22: #{outter_bae_forward.4} parent=0 // pred_check
    _
  $region23: #{outter_bae_forward.4} parent=0 // pred_check_branch
    %22 = sbr.rel (0) target = $region25
  $region24: #{outter_bae_forward.4} parent=0 // pred_region
    _
  $region25: #{outter_bae_forward.4} parent=0 // pred_fallthru
    _
  %v23 = vld [vmem:[%s4] sm:$0xf]
  %v24 = vld [vmem:[%s0] sm:$0xff]
  %v25 = vld [vmem:[%s0 + $0x8] sm:$0xff]
  %v26 = vld [vmem:[%s0 + $0x10] sm:$0xff]
  %v27 = vld [vmem:[%s0 + $0x18] sm:$0xff]
  %v28 = vld [vmem:[%s0 + $0x20] sm:$0xff]
  %v29 = vld [vmem:[%s0 + $0x28] sm:$0xff]
  %v30 = vld [vmem:[%s0 + $0x30] sm:$0x7]
  %v31 = vld [vmem:[%s0 + $0x38] sm:$0x7]
  %vm32 = vcmask 220160
  %v34 = vsel %vm32, %v23, 0
  %vm36 = vcmask 1042432
  %v38 = vsel %vm36, %v30, 0
  %v41 = vsel %vm36, %v31, 0
  %43 = vmatprep.subr.mxu0 %v25
  %44 = vmatpush1.msra.mxu0 %v24
  %45 = vmatprep.subr.mxu0 %v27
  %46 = vmatpush1.msra.mxu0 %v26
  %47 = vmatprep.subr.mxu0 %v29
  %48 = vmatpush1.msra.mxu0 %v28
  %49 = vmatprep.subr.mxu0 %v41
  %50 = vmatpush1.msra.mxu0 %v38
  %51 = vmatprep.subr.mxu0 0.0
  %52 = vmatpush1.msra.mxu0 0.0
  %53 = vmatprep.subr.mxu0 0.0
  %54 = vmatpush1.msra.mxu0 0.0
  %55 = vmatprep.subr.mxu0 0.0
  %56 = vmatpush1.msra.mxu0 0.0
  %57 = vmatprep.subr.mxu0 0.0
  %58 = vmatpush1.msra.mxu0 0.0
  %59 = vmatprep.subr.mxu0 0.0
  %60 = vmatpush1.msra.mxu0 0.0
  %61 = vmatprep.subr.mxu0 0.0
  %62 = vmatpush1.msra.mxu0 0.0
  %63 = vmatprep.subr.mxu0 0.0
  %64 = vmatpush1.msra.mxu0 0.0
  %65 = vmatprep.subr.mxu0 0.0
  %66 = vmatpush1.msra.mxu0 0.0
  %67 = vmatprep.subr.mxu0 0.0
  %68 = vmatpush1.msra.mxu0 0.0
  %69 = vmatprep.subr.mxu0 0.0
  %70 = vmatpush1.msra.mxu0 0.0
  %71 = vmatprep.subr.mxu0 0.0
  %72 = vmatpush1.msra.mxu0 0.0
  %73 = vmatprep.subr.mxu0 0.0
  %74 = vmatpush1.msra.mxu0 0.0
  %75 = vmatprep.subr.mxu0 0.0
  %76 = vmatpush1.msra.mxu0 0.0
  %77 = vmatprep.subr.mxu0 0.0
  %78 = vmatpush1.msra.mxu0 0.0
  %79 = vmatprep.subr.mxu0 0.0
  %80 = vmatpush1.msra.mxu0 0.0
  %81 = vmatprep.subr.mxu0 0.0
  %82 = vmatpush1.msra.mxu0 0.0
  %83 = vmatprep.subr.mxu0 0.0
  %84 = vmatpush1.msra.mxu0 0.0
  %85 = vmatprep.subr.mxu0 0.0
  %86 = vmatpush1.msra.mxu0 0.0
  %87 = vmatprep.subr.mxu0 0.0
  %88 = vmatpush1.msra.mxu0 0.0
  %89 = vmatprep.subr.mxu0 0.0
  %90 = vmatpush1.msra.mxu0 0.0
  %91 = vmatprep.subr.mxu0 0.0
  %92 = vmatpush1.msra.mxu0 0.0
  %93 = vmatprep.subr.mxu0 0.0
  %94 = vmatpush1.msra.mxu0 0.0
  %95 = vmatprep.subr.mxu0 0.0
  %96 = vmatpush1.msra.mxu0 0.0
  %97 = vmatprep.subr.mxu0 0.0
  %98 = vmatpush1.msra.mxu0 0.0
  %99 = vmatprep.subr.mxu0 0.0
  %100 = vmatpush1.msra.mxu0 0.0
  %101 = vmatprep.subr.mxu0 0.0
  %102 = vmatpush1.msra.mxu0 0.0
  %103 = vmatprep.subr.mxu0 0.0
  %104 = vmatpush1.msra.mxu0 0.0
  %105 = vmatprep.subr.mxu0 0.0
  %106 = vmatpush1.msra.mxu0 0.0
  %107 = vmatprep.mubr.f32.mxu0 0.0
  %108 = vmatmul.mubr.f32.gmra.mrb[0].mxu0 %v34
  %v109 = vpop.f32.mrb[0].mxu0
  %v110 = vadd.f32 0.0, %v109
  %v111 = vpop.f32.mrb[0].mxu0
  %v112 = vadd.f32 0.0, %v111
  %113 = vdwg.mxu0
  %v114 = vld [vmem:[%s1] sm:$0xff]
  %v115 = vld [vmem:[%s1 + $0x8] sm:$0xff]
  %v116 = vld [vmem:[%s1 + $0x10] sm:$0xff]
  %v117 = vld [vmem:[%s1 + $0x18] sm:$0xff]
  %v118 = vld [vmem:[%s1 + $0x20] sm:$0xff]
  %v119 = vld [vmem:[%s1 + $0x28] sm:$0xff]
  %v120 = vld [vmem:[%s1 + $0x30] sm:$0x7]
  %v121 = vld [vmem:[%s1 + $0x38] sm:$0x7]
  %v123 = vsel %vm36, %v120, 0
  %v126 = vsel %vm36, %v121, 0
  %128 = vmatprep.subr.mxu0 %v115
  %129 = vmatpush1.msra.mxu0 %v114
  %130 = vmatprep.subr.mxu0 %v117
  %131 = vmatpush1.msra.mxu0 %v116
  %132 = vmatprep.subr.mxu0 %v119
  %133 = vmatpush1.msra.mxu0 %v118
  %134 = vmatprep.subr.mxu0 %v126
  %135 = vmatpush1.msra.mxu0 %v123
  %136 = vmatprep.subr.mxu0 0.0
  %137 = vmatpush1.msra.mxu0 0.0
  %138 = vmatprep.subr.mxu0 0.0
  %139 = vmatpush1.msra.mxu0 0.0
  %140 = vmatprep.subr.mxu0 0.0
  %141 = vmatpush1.msra.mxu0 0.0
  %142 = vmatprep.subr.mxu0 0.0
  %143 = vmatpush1.msra.mxu0 0.0
  %144 = vmatprep.subr.mxu0 0.0
  %145 = vmatpush1.msra.mxu0 0.0
  %146 = vmatprep.subr.mxu0 0.0
  %147 = vmatpush1.msra.mxu0 0.0
  %148 = vmatprep.subr.mxu0 0.0
  %149 = vmatpush1.msra.mxu0 0.0
  %150 = vmatprep.subr.mxu0 0.0
  %151 = vmatpush1.msra.mxu0 0.0
  %152 = vmatprep.subr.mxu0 0.0
  %153 = vmatpush1.msra.mxu0 0.0
  %154 = vmatprep.subr.mxu0 0.0
  %155 = vmatpush1.msra.mxu0 0.0
  %156 = vmatprep.subr.mxu0 0.0
  %157 = vmatpush1.msra.mxu0 0.0
  %158 = vmatprep.subr.mxu0 0.0
  %159 = vmatpush1.msra.mxu0 0.0
  %160 = vmatprep.subr.mxu0 0.0
  %161 = vmatpush1.msra.mxu0 0.0
  %162 = vmatprep.subr.mxu0 0.0
  %163 = vmatpush1.msra.mxu0 0.0
  %164 = vmatprep.subr.mxu0 0.0
  %165 = vmatpush1.msra.mxu0 0.0
  %166 = vmatprep.subr.mxu0 0.0
  %167 = vmatpush1.msra.mxu0 0.0
  %168 = vmatprep.subr.mxu0 0.0
  %169 = vmatpush1.msra.mxu0 0.0
  %170 = vmatprep.subr.mxu0 0.0
  %171 = vmatpush1.msra.mxu0 0.0
  %172 = vmatprep.subr.mxu0 0.0
  %173 = vmatpush1.msra.mxu0 0.0
  %174 = vmatprep.subr.mxu0 0.0
  %175 = vmatpush1.msra.mxu0 0.0
  %176 = vmatprep.subr.mxu0 0.0
  %177 = vmatpush1.msra.mxu0 0.0
  %178 = vmatprep.subr.mxu0 0.0
  %179 = vmatpush1.msra.mxu0 0.0
  %180 = vmatprep.subr.mxu0 0.0
  %181 = vmatpush1.msra.mxu0 0.0
  %182 = vmatprep.subr.mxu0 0.0
  %183 = vmatpush1.msra.mxu0 0.0
  %184 = vmatprep.subr.mxu0 0.0
  %185 = vmatpush1.msra.mxu0 0.0
  %186 = vmatprep.subr.mxu0 0.0
  %187 = vmatpush1.msra.mxu0 0.0
  %188 = vmatprep.subr.mxu0 0.0
  %189 = vmatpush1.msra.mxu0 0.0
  %190 = vmatprep.subr.mxu0 0.0
  %191 = vmatpush1.msra.mxu0 0.0
  %192 = vmatprep.mubr.f32.mxu0 0.0
  %193 = vmatmul.mubr.f32.gmra.mrb[0].mxu0 %v34
  %v194 = vpop.f32.mrb[0].mxu0
  %v195 = vadd.f32 0.0, %v194
  %v196 = vpop.f32.mrb[0].mxu0
  %v197 = vadd.f32 0.0, %v196
  %198 = vdwg.mxu0
  %v199 = vmax.f32 %v110, %v195
  %v200 = vmax.f32 %v112, %v197
  %v201 = vld [vmem:[%s2] sm:$0xff]
  %v202 = vld [vmem:[%s2 + $0x8] sm:$0xff]
  %v203 = vld [vmem:[%s2 + $0x10] sm:$0xff]
  %v204 = vld [vmem:[%s2 + $0x18] sm:$0xff]
  %v205 = vld [vmem:[%s2 + $0x20] sm:$0xff]
  %v206 = vld [vmem:[%s2 + $0x28] sm:$0xff]
  %v207 = vld [vmem:[%s2 + $0x30] sm:$0x7]
  %v208 = vld [vmem:[%s2 + $0x38] sm:$0x7]
  %v210 = vsel %vm36, %v207, 0
  %v213 = vsel %vm36, %v208, 0
  %215 = vmatprep.subr.mxu0 %v202
  %216 = vmatpush1.msra.mxu0 %v201
  %217 = vmatprep.subr.mxu0 %v204
  %218 = vmatpush1.msra.mxu0 %v203
  %219 = vmatprep.subr.mxu0 %v206
  %220 = vmatpush1.msra.mxu0 %v205
  %221 = vmatprep.subr.mxu0 %v213
  %222 = vmatpush1.msra.mxu0 %v210
  %223 = vmatprep.subr.mxu0 0.0
  %224 = vmatpush1.msra.mxu0 0.0
  %225 = vmatprep.subr.mxu0 0.0
  %226 = vmatpush1.msra.mxu0 0.0
  %227 = vmatprep.subr.mxu0 0.0
  %228 = vmatpush1.msra.mxu0 0.0
  %229 = vmatprep.subr.mxu0 0.0
  %230 = vmatpush1.msra.mxu0 0.0
  %231 = vmatprep.subr.mxu0 0.0
  %232 = vmatpush1.msra.mxu0 0.0
  %233 = vmatprep.subr.mxu0 0.0
  %234 = vmatpush1.msra.mxu0 0.0
  %235 = vmatprep.subr.mxu0 0.0
  %236 = vmatpush1.msra.mxu0 0.0
  %237 = vmatprep.subr.mxu0 0.0
  %238 = vmatpush1.msra.mxu0 0.0
  %239 = vmatprep.subr.mxu0 0.0
  %240 = vmatpush1.msra.mxu0 0.0
  %241 = vmatprep.subr.mxu0 0.0
  %242 = vmatpush1.msra.mxu0 0.0
  %243 = vmatprep.subr.mxu0 0.0
  %244 = vmatpush1.msra.mxu0 0.0
  %245 = vmatprep.subr.mxu0 0.0
  %246 = vmatpush1.msra.mxu0 0.0
  %247 = vmatprep.subr.mxu0 0.0
  %248 = vmatpush1.msra.mxu0 0.0
  %249 = vmatprep.subr.mxu0 0.0
  %250 = vmatpush1.msra.mxu0 0.0
  %251 = vmatprep.subr.mxu0 0.0
  %252 = vmatpush1.msra.mxu0 0.0
  %253 = vmatprep.subr.mxu0 0.0
  %254 = vmatpush1.msra.mxu0 0.0
  %255 = vmatprep.subr.mxu0 0.0
  %256 = vmatpush1.msra.mxu0 0.0
  %257 = vmatprep.subr.mxu0 0.0
  %258 = vmatpush1.msra.mxu0 0.0
  %259 = vmatprep.subr.mxu0 0.0
  %260 = vmatpush1.msra.mxu0 0.0
  %261 = vmatprep.subr.mxu0 0.0
  %262 = vmatpush1.msra.mxu0 0.0
  %263 = vmatprep.subr.mxu0 0.0
  %264 = vmatpush1.msra.mxu0 0.0
  %265 = vmatprep.subr.mxu0 0.0
  %266 = vmatpush1.msra.mxu0 0.0
  %267 = vmatprep.subr.mxu0 0.0
  %268 = vmatpush1.msra.mxu0 0.0
  %269 = vmatprep.subr.mxu0 0.0
  %270 = vmatpush1.msra.mxu0 0.0
  %271 = vmatprep.subr.mxu0 0.0
  %272 = vmatpush1.msra.mxu0 0.0
  %273 = vmatprep.subr.mxu0 0.0
  %274 = vmatpush1.msra.mxu0 0.0
  %275 = vmatprep.subr.mxu0 0.0
  %276 = vmatpush1.msra.mxu0 0.0
  %277 = vmatprep.subr.mxu0 0.0
  %278 = vmatpush1.msra.mxu0 0.0
  %279 = vmatprep.mubr.f32.mxu0 0.0
  %280 = vmatmul.mubr.f32.gmra.mrb[0].mxu0 %v34
  %v281 = vpop.f32.mrb[0].mxu0
  %v282 = vadd.f32 0.0, %v281
  %v283 = vpop.f32.mrb[0].mxu0
  %v284 = vadd.f32 0.0, %v283
  %285 = vdwg.mxu0
  %v286 = vld [vmem:[%s3] sm:$0xff]
  %v287 = vld [vmem:[%s3 + $0x8] sm:$0xff]
  %v288 = vld [vmem:[%s3 + $0x10] sm:$0xff]
  %v289 = vld [vmem:[%s3 + $0x18] sm:$0xff]
  %v290 = vld [vmem:[%s3 + $0x20] sm:$0xff]
  %v291 = vld [vmem:[%s3 + $0x28] sm:$0xff]
  %v292 = vld [vmem:[%s3 + $0x30] sm:$0x7]
  %v293 = vld [vmem:[%s3 + $0x38] sm:$0x7]
  %v295 = vsel %vm36, %v292, 0
  %v298 = vsel %vm36, %v293, 0
  %300 = vmatprep.subr.mxu0 %v287
  %301 = vmatpush1.msra.mxu0 %v286
  %302 = vmatprep.subr.mxu0 %v289
  %303 = vmatpush1.msra.mxu0 %v288
  %304 = vmatprep.subr.mxu0 %v291
  %305 = vmatpush1.msra.mxu0 %v290
  %306 = vmatprep.subr.mxu0 %v298
  %307 = vmatpush1.msra.mxu0 %v295
  %308 = vmatprep.subr.mxu0 0.0
  %309 = vmatpush1.msra.mxu0 0.0
  %310 = vmatprep.subr.mxu0 0.0
  %311 = vmatpush1.msra.mxu0 0.0
  %312 = vmatprep.subr.mxu0 0.0
  %313 = vmatpush1.msra.mxu0 0.0
  %314 = vmatprep.subr.mxu0 0.0
  %315 = vmatpush1.msra.mxu0 0.0
  %316 = vmatprep.subr.mxu0 0.0
  %317 = vmatpush1.msra.mxu0 0.0
  %318 = vmatprep.subr.mxu0 0.0
  %319 = vmatpush1.msra.mxu0 0.0
  %320 = vmatprep.subr.mxu0 0.0
  %321 = vmatpush1.msra.mxu0 0.0
  %322 = vmatprep.subr.mxu0 0.0
  %323 = vmatpush1.msra.mxu0 0.0
  %324 = vmatprep.subr.mxu0 0.0
  %325 = vmatpush1.msra.mxu0 0.0
  %326 = vmatprep.subr.mxu0 0.0
  %327 = vmatpush1.msra.mxu0 0.0
  %328 = vmatprep.subr.mxu0 0.0
  %329 = vmatpush1.msra.mxu0 0.0
  %330 = vmatprep.subr.mxu0 0.0
  %331 = vmatpush1.msra.mxu0 0.0
  %332 = vmatprep.subr.mxu0 0.0
  %333 = vmatpush1.msra.mxu0 0.0
  %334 = vmatprep.subr.mxu0 0.0
  %335 = vmatpush1.msra.mxu0 0.0
  %336 = vmatprep.subr.mxu0 0.0
  %337 = vmatpush1.msra.mxu0 0.0
  %338 = vmatprep.subr.mxu0 0.0
  %339 = vmatpush1.msra.mxu0 0.0
  %340 = vmatprep.subr.mxu0 0.0
  %341 = vmatpush1.msra.mxu0 0.0
  %342 = vmatprep.subr.mxu0 0.0
  %343 = vmatpush1.msra.mxu0 0.0
  %344 = vmatprep.subr.mxu0 0.0
  %345 = vmatpush1.msra.mxu0 0.0
  %346 = vmatprep.subr.mxu0 0.0
  %347 = vmatpush1.msra.mxu0 0.0
  %348 = vmatprep.subr.mxu0 0.0
  %349 = vmatpush1.msra.mxu0 0.0
  %350 = vmatprep.subr.mxu0 0.0
  %351 = vmatpush1.msra.mxu0 0.0
  %352 = vmatprep.subr.mxu0 0.0
  %353 = vmatpush1.msra.mxu0 0.0
  %354 = vmatprep.subr.mxu0 0.0
  %355 = vmatpush1.msra.mxu0 0.0
  %356 = vmatprep.subr.mxu0 0.0
  %357 = vmatpush1.msra.mxu0 0.0
  %358 = vmatprep.subr.mxu0 0.0
  %359 = vmatpush1.msra.mxu0 0.0
  %360 = vmatprep.subr.mxu0 0.0
  %361 = vmatpush1.msra.mxu0 0.0
  %362 = vmatprep.subr.mxu0 0.0
  %363 = vmatpush1.msra.mxu0 0.0
  %364 = vmatprep.mubr.f32.mxu0 0.0
  %365 = vmatmul.mubr.f32.gmra.mrb[0].mxu0 %v34
  %v366 = vpop.f32.mrb[0].mxu0
  %v367 = vadd.f32 0.0, %v366
  %v368 = vpop.f32.mrb[0].mxu0
  %v369 = vadd.f32 0.0, %v368
  %370 = vdwg.mxu0
  %v371 = vmax.f32 %v282, %v367
  %v372 = vmax.f32 %v284, %v369
  %v373 = vmax.f32 %v199, %v371
  %v374 = vmax.f32 %v200, %v372
  %v375 = vld [vmem:[%s5] sm:$0xf]
  %377 = vset.pattern.permute.xlu0 0
  %378 = vperm.xlu0 %377, %v375
  %v379 = vpop.permute.xlu0 %378
  %v381 = vadd.f32 %v373, %v379
  %v382 = vadd.f32 %v374, %v379
  %v383 = vmax.f32 %v381, 0.0
  %v384 = vmax.f32 %v382, 0.0
  %v387 = vcombine.low %v383, %v384
  %389 = vst [vmem:[%s6] sm:$0xff] %v387
  // Predicated region
  $region26: #{outter_bae_forward.4} parent=0 // pred_check
    _
  $region27: #{outter_bae_forward.4} parent=0 // pred_check_branch
    %391 = sbr.rel (0) target = $region29
  $region28: #{outter_bae_forward.4} parent=0 // pred_region
    _
  $region29: #{outter_bae_forward.4} parent=0 // pred_fallthru
    _
  // Predicated region
  $region30: #{outter_bae_forward.4} parent=0 // pred_check
    _
  $region31: #{outter_bae_forward.4} parent=0 // pred_check_branch
    %393 = sbr.rel (0) target = $region33
  $region32: #{outter_bae_forward.4} parent=0 // pred_region
    _
  $region33: #{outter_bae_forward.4} parent=0 // pred_fallthru
    _

// kernel: outter_bae_forward.5
$region0: #{outter_bae_forward.5}
  #allocation0 [shape = 'u32[]', space=smem, size = 0x4, offset = 0x4, fixed_abs, tag = 'smem constant byte address 0x4 - core index']
  #allocation1 [shape = 'u32[144,128]{1,0:T(1,128)}', space=vmem, size = 0x12000, scoped, tag = 'internal scratch']
  %s0 = inlined_call_operand.vmem [shape: f32[36,64], index: 0, kind: input, shape index: {}]
  %s1 = inlined_call_operand.vmem [shape: f32[36,64], index: 1, kind: input, shape index: {}]
  %s2 = inlined_call_operand.vmem [shape: f32[36,64], index: 2, kind: input, shape index: {}]
  %s3 = inlined_call_operand.vmem [shape: f32[36,64], index: 3, kind: input, shape index: {}]
  %s4 = inlined_call_operand.vmem [shape: f32[8,36], index: 4, kind: input, shape index: {}]
  %s5 = inlined_call_operand.vmem [shape: f32[8,1], index: 5, kind: input, shape index: {}]
  %s6 = inlined_call_operand.vmem [shape: f32[8,64], index: 6, kind: output, shape index: {}]
  %s7 = sld [smem:[#allocation0]]
  $region34: #{outter_bae_forward.5} parent=0
    _
  %s9 = ssub.s32 1, %s7
  %s10 = scalar_select 0, %s9, %s7
  // Predicated region
  $region2: #{outter_bae_forward.5} parent=0 // pred_check
    _
  $region3: #{outter_bae_forward.5} parent=0 // pred_check_branch
    %12 = sbr.rel (0) target = $region5
  $region4: #{outter_bae_forward.5} parent=0 // pred_region
    _
  $region5: #{outter_bae_forward.5} parent=0 // pred_fallthru
    _
  // Predicated region
  $region6: #{outter_bae_forward.5} parent=0 // pred_check
    _
  $region7: #{outter_bae_forward.5} parent=0 // pred_check_branch
    %14 = sbr.rel (0) target = $region9
  $region8: #{outter_bae_forward.5} parent=0 // pred_region
    _
  $region9: #{outter_bae_forward.5} parent=0 // pred_fallthru
    _
  // Predicated region
  $region10: #{outter_bae_forward.5} parent=0 // pred_check
    _
  $region11: #{outter_bae_forward.5} parent=0 // pred_check_branch
    %16 = sbr.rel (0) target = $region13
  $region12: #{outter_bae_forward.5} parent=0 // pred_region
    _
  $region13: #{outter_bae_forward.5} parent=0 // pred_fallthru
    _
  // Predicated region
  $region14: #{outter_bae_forward.5} parent=0 // pred_check
    _
  $region15: #{outter_bae_forward.5} parent=0 // pred_check_branch
    %18 = sbr.rel (0) target = $region17
  $region16: #{outter_bae_forward.5} parent=0 // pred_region
    _
  $region17: #{outter_bae_forward.5} parent=0 // pred_fallthru
    _
  // Predicated region
  $region18: #{outter_bae_forward.5} parent=0 // pred_check
    _
  $region19: #{outter_bae_forward.5} parent=0 // pred_check_branch
    %20 = sbr.rel (0) target = $region21
  $region20: #{outter_bae_forward.5} parent=0 // pred_region
    _
  $region21: #{outter_bae_forward.5} parent=0 // pred_fallthru
    _
  // Predicated region
  $region22: #{outter_bae_forward.5} parent=0 // pred_check
    _
  $region23: #{outter_bae_forward.5} parent=0 // pred_check_branch
    %22 = sbr.rel (0) target = $region25
  $region24: #{outter_bae_forward.5} parent=0 // pred_region
    _
  $region25: #{outter_bae_forward.5} parent=0 // pred_fallthru
    _
  %v23 = vld [vmem:[%s4] sm:$0xff]
  %v24 = vld [vmem:[%s0] sm:$0xff]
  %v25 = vld [vmem:[%s0 + $0x8] sm:$0xff]
  %v26 = vld [vmem:[%s0 + $0x10] sm:$0xff]
  %v27 = vld [vmem:[%s0 + $0x18] sm:$0xff]
  %v28 = vld [vmem:[%s0 + $0x20] sm:$0xf]
  %vm29 = vcmask 293888
  %v31 = vsel %vm29, %v23, 0
  %vm33 = vcmask 1043456
  %v35 = vsel %vm33, %v28, 0
  %37 = vmatprep.subr.mxu0 0.0
  %38 = vmatpush1.msra.mxu0 %v24
  %39 = vmatprep.subr.mxu0 0.0
  %40 = vmatpush1.msra.mxu0 %v25
  %41 = vmatprep.subr.mxu0 0.0
  %42 = vmatpush1.msra.mxu0 %v26
  %43 = vmatprep.subr.mxu0 0.0
  %44 = vmatpush1.msra.mxu0 %v27
  %45 = vmatprep.subr.mxu0 0.0
  %46 = vmatpush1.msra.mxu0 %v35
  %47 = vmatprep.subr.mxu0 0.0
  %48 = vmatpush1.msra.mxu0 0.0
  %49 = vmatprep.subr.mxu0 0.0
  %50 = vmatpush1.msra.mxu0 0.0
  %51 = vmatprep.subr.mxu0 0.0
  %52 = vmatpush1.msra.mxu0 0.0
  %53 = vmatprep.subr.mxu0 0.0
  %54 = vmatpush1.msra.mxu0 0.0
  %55 = vmatprep.subr.mxu0 0.0
  %56 = vmatpush1.msra.mxu0 0.0
  %57 = vmatprep.subr.mxu0 0.0
  %58 = vmatpush1.msra.mxu0 0.0
  %59 = vmatprep.subr.mxu0 0.0
  %60 = vmatpush1.msra.mxu0 0.0
  %61 = vmatprep.subr.mxu0 0.0
  %62 = vmatpush1.msra.mxu0 0.0
  %63 = vmatprep.subr.mxu0 0.0
  %64 = vmatpush1.msra.mxu0 0.0
  %65 = vmatprep.subr.mxu0 0.0
  %66 = vmatpush1.msra.mxu0 0.0
  %67 = vmatprep.subr.mxu0 0.0
  %68 = vmatpush1.msra.mxu0 0.0
  %69 = vmatprep.subr.mxu0 0.0
  %70 = vmatpush1.msra.mxu0 0.0
  %71 = vmatprep.subr.mxu0 0.0
  %72 = vmatpush1.msra.mxu0 0.0
  %73 = vmatprep.subr.mxu0 0.0
  %74 = vmatpush1.msra.mxu0 0.0
  %75 = vmatprep.subr.mxu0 0.0
  %76 = vmatpush1.msra.mxu0 0.0
  %77 = vmatprep.subr.mxu0 0.0
  %78 = vmatpush1.msra.mxu0 0.0
  %79 = vmatprep.subr.mxu0 0.0
  %80 = vmatpush1.msra.mxu0 0.0
  %81 = vmatprep.subr.mxu0 0.0
  %82 = vmatpush1.msra.mxu0 0.0
  %83 = vmatprep.subr.mxu0 0.0
  %84 = vmatpush1.msra.mxu0 0.0
  %85 = vmatprep.subr.mxu0 0.0
  %86 = vmatpush1.msra.mxu0 0.0
  %87 = vmatprep.subr.mxu0 0.0
  %88 = vmatpush1.msra.mxu0 0.0
  %89 = vmatprep.subr.mxu0 0.0
  %90 = vmatpush1.msra.mxu0 0.0
  %91 = vmatprep.subr.mxu0 0.0
  %92 = vmatpush1.msra.mxu0 0.0
  %93 = vmatprep.subr.mxu0 0.0
  %94 = vmatpush1.msra.mxu0 0.0
  %95 = vmatprep.subr.mxu0 0.0
  %96 = vmatpush1.msra.mxu0 0.0
  %97 = vmatprep.subr.mxu0 0.0
  %98 = vmatpush1.msra.mxu0 0.0
  %99 = vmatprep.subr.mxu0 0.0
  %100 = vmatpush1.msra.mxu0 0.0
  %101 = vmatprep.mubr.f32.mxu0 0.0
  %102 = vmatmul.mubr.f32.gmra.mrb[0].mxu0 %v31
  %v103 = vpop.f32.mrb[0].mxu0
  %v104 = vadd.f32 0.0, %v103
  %v105 = vpop.f32.mrb[0].mxu0
  %106 = vdwg.mxu0
  %v107 = vld [vmem:[%s1] sm:$0xff]
  %v108 = vld [vmem:[%s1 + $0x8] sm:$0xff]
  %v109 = vld [vmem:[%s1 + $0x10] sm:$0xff]
  %v110 = vld [vmem:[%s1 + $0x18] sm:$0xff]
  %v111 = vld [vmem:[%s1 + $0x20] sm:$0xf]
  %v113 = vsel %vm33, %v111, 0
  %115 = vmatprep.subr.mxu0 0.0
  %116 = vmatpush1.msra.mxu0 %v107
  %117 = vmatprep.subr.mxu0 0.0
  %118 = vmatpush1.msra.mxu0 %v108
  %119 = vmatprep.subr.mxu0 0.0
  %120 = vmatpush1.msra.mxu0 %v109
  %121 = vmatprep.subr.mxu0 0.0
  %122 = vmatpush1.msra.mxu0 %v110
  %123 = vmatprep.subr.mxu0 0.0
  %124 = vmatpush1.msra.mxu0 %v113
  %125 = vmatprep.subr.mxu0 0.0
  %126 = vmatpush1.msra.mxu0 0.0
  %127 = vmatprep.subr.mxu0 0.0
  %128 = vmatpush1.msra.mxu0 0.0
  %129 = vmatprep.subr.mxu0 0.0
  %130 = vmatpush1.msra.mxu0 0.0
  %131 = vmatprep.subr.mxu0 0.0
  %132 = vmatpush1.msra.mxu0 0.0
  %133 = vmatprep.subr.mxu0 0.0
  %134 = vmatpush1.msra.mxu0 0.0
  %135 = vmatprep.subr.mxu0 0.0
  %136 = vmatpush1.msra.mxu0 0.0
  %137 = vmatprep.subr.mxu0 0.0
  %138 = vmatpush1.msra.mxu0 0.0
  %139 = vmatprep.subr.mxu0 0.0
  %140 = vmatpush1.msra.mxu0 0.0
  %141 = vmatprep.subr.mxu0 0.0
  %142 = vmatpush1.msra.mxu0 0.0
  %143 = vmatprep.subr.mxu0 0.0
  %144 = vmatpush1.msra.mxu0 0.0
  %145 = vmatprep.subr.mxu0 0.0
  %146 = vmatpush1.msra.mxu0 0.0
  %147 = vmatprep.subr.mxu0 0.0
  %148 = vmatpush1.msra.mxu0 0.0
  %149 = vmatprep.subr.mxu0 0.0
  %150 = vmatpush1.msra.mxu0 0.0
  %151 = vmatprep.subr.mxu0 0.0
  %152 = vmatpush1.msra.mxu0 0.0
  %153 = vmatprep.subr.mxu0 0.0
  %154 = vmatpush1.msra.mxu0 0.0
  %155 = vmatprep.subr.mxu0 0.0
  %156 = vmatpush1.msra.mxu0 0.0
  %157 = vmatprep.subr.mxu0 0.0
  %158 = vmatpush1.msra.mxu0 0.0
  %159 = vmatprep.subr.mxu0 0.0
  %160 = vmatpush1.msra.mxu0 0.0
  %161 = vmatprep.subr.mxu0 0.0
  %162 = vmatpush1.msra.mxu0 0.0
  %163 = vmatprep.subr.mxu0 0.0
  %164 = vmatpush1.msra.mxu0 0.0
  %165 = vmatprep.subr.mxu0 0.0
  %166 = vmatpush1.msra.mxu0 0.0
  %167 = vmatprep.subr.mxu0 0.0
  %168 = vmatpush1.msra.mxu0 0.0
  %169 = vmatprep.subr.mxu0 0.0
  %170 = vmatpush1.msra.mxu0 0.0
  %171 = vmatprep.subr.mxu0 0.0
  %172 = vmatpush1.msra.mxu0 0.0
  %173 = vmatprep.subr.mxu0 0.0
  %174 = vmatpush1.msra.mxu0 0.0
  %175 = vmatprep.subr.mxu0 0.0
  %176 = vmatpush1.msra.mxu0 0.0
  %177 = vmatprep.subr.mxu0 0.0
  %178 = vmatpush1.msra.mxu0 0.0
  %179 = vmatprep.mubr.f32.mxu0 0.0
  %180 = vmatmul.mubr.f32.gmra.mrb[0].mxu0 %v31
  %v181 = vpop.f32.mrb[0].mxu0
  %v182 = vadd.f32 0.0, %v181
  %v183 = vpop.f32.mrb[0].mxu0
  %184 = vdwg.mxu0
  %v185 = vmax.f32 %v104, %v182
  %v186 = vld [vmem:[%s2] sm:$0xff]
  %v187 = vld [vmem:[%s2 + $0x8] sm:$0xff]
  %v188 = vld [vmem:[%s2 + $0x10] sm:$0xff]
  %v189 = vld [vmem:[%s2 + $0x18] sm:$0xff]
  %v190 = vld [vmem:[%s2 + $0x20] sm:$0xf]
  %v192 = vsel %vm33, %v190, 0
  %194 = vmatprep.subr.mxu0 0.0
  %195 = vmatpush1.msra.mxu0 %v186
  %196 = vmatprep.subr.mxu0 0.0
  %197 = vmatpush1.msra.mxu0 %v187
  %198 = vmatprep.subr.mxu0 0.0
  %199 = vmatpush1.msra.mxu0 %v188
  %200 = vmatprep.subr.mxu0 0.0
  %201 = vmatpush1.msra.mxu0 %v189
  %202 = vmatprep.subr.mxu0 0.0
  %203 = vmatpush1.msra.mxu0 %v192
  %204 = vmatprep.subr.mxu0 0.0
  %205 = vmatpush1.msra.mxu0 0.0
  %206 = vmatprep.subr.mxu0 0.0
  %207 = vmatpush1.msra.mxu0 0.0
  %208 = vmatprep.subr.mxu0 0.0
  %209 = vmatpush1.msra.mxu0 0.0
  %210 = vmatprep.subr.mxu0 0.0
  %211 = vmatpush1.msra.mxu0 0.0
  %212 = vmatprep.subr.mxu0 0.0
  %213 = vmatpush1.msra.mxu0 0.0
  %214 = vmatprep.subr.mxu0 0.0
  %215 = vmatpush1.msra.mxu0 0.0
  %216 = vmatprep.subr.mxu0 0.0
  %217 = vmatpush1.msra.mxu0 0.0
  %218 = vmatprep.subr.mxu0 0.0
  %219 = vmatpush1.msra.mxu0 0.0
  %220 = vmatprep.subr.mxu0 0.0
  %221 = vmatpush1.msra.mxu0 0.0
  %222 = vmatprep.subr.mxu0 0.0
  %223 = vmatpush1.msra.mxu0 0.0
  %224 = vmatprep.subr.mxu0 0.0
  %225 = vmatpush1.msra.mxu0 0.0
  %226 = vmatprep.subr.mxu0 0.0
  %227 = vmatpush1.msra.mxu0 0.0
  %228 = vmatprep.subr.mxu0 0.0
  %229 = vmatpush1.msra.mxu0 0.0
  %230 = vmatprep.subr.mxu0 0.0
  %231 = vmatpush1.msra.mxu0 0.0
  %232 = vmatprep.subr.mxu0 0.0
  %233 = vmatpush1.msra.mxu0 0.0
  %234 = vmatprep.subr.mxu0 0.0
  %235 = vmatpush1.msra.mxu0 0.0
  %236 = vmatprep.subr.mxu0 0.0
  %237 = vmatpush1.msra.mxu0 0.0
  %238 = vmatprep.subr.mxu0 0.0
  %239 = vmatpush1.msra.mxu0 0.0
  %240 = vmatprep.subr.mxu0 0.0
  %241 = vmatpush1.msra.mxu0 0.0
  %242 = vmatprep.subr.mxu0 0.0
  %243 = vmatpush1.msra.mxu0 0.0
  %244 = vmatprep.subr.mxu0 0.0
  %245 = vmatpush1.msra.mxu0 0.0
  %246 = vmatprep.subr.mxu0 0.0
  %247 = vmatpush1.msra.mxu0 0.0
  %248 = vmatprep.subr.mxu0 0.0
  %249 = vmatpush1.msra.mxu0 0.0
  %250 = vmatprep.subr.mxu0 0.0
  %251 = vmatpush1.msra.mxu0 0.0
  %252 = vmatprep.subr.mxu0 0.0
  %253 = vmatpush1.msra.mxu0 0.0
  %254 = vmatprep.subr.mxu0 0.0
  %255 = vmatpush1.msra.mxu0 0.0
  %256 = vmatprep.subr.mxu0 0.0
  %257 = vmatpush1.msra.mxu0 0.0
  %258 = vmatprep.mubr.f32.mxu0 0.0
  %259 = vmatmul.mubr.f32.gmra.mrb[0].mxu0 %v31
  %v260 = vpop.f32.mrb[0].mxu0
  %v261 = vadd.f32 0.0, %v260
  %v262 = vpop.f32.mrb[0].mxu0
  %263 = vdwg.mxu0
  %v264 = vld [vmem:[%s3] sm:$0xff]
  %v265 = vld [vmem:[%s3 + $0x8] sm:$0xff]
  %v266 = vld [vmem:[%s3 + $0x10] sm:$0xff]
  %v267 = vld [vmem:[%s3 + $0x18] sm:$0xff]
  %v268 = vld [vmem:[%s3 + $0x20] sm:$0xf]
  %v270 = vsel %vm33, %v268, 0
  %272 = vmatprep.subr.mxu0 0.0
  %273 = vmatpush1.msra.mxu0 %v264
  %274 = vmatprep.subr.mxu0 0.0
  %275 = vmatpush1.msra.mxu0 %v265
  %276 = vmatprep.subr.mxu0 0.0
  %277 = vmatpush1.msra.mxu0 %v266
  %278 = vmatprep.subr.mxu0 0.0
  %279 = vmatpush1.msra.mxu0 %v267
  %280 = vmatprep.subr.mxu0 0.0
  %281 = vmatpush1.msra.mxu0 %v270
  %282 = vmatprep.subr.mxu0 0.0
  %283 = vmatpush1.msra.mxu0 0.0
  %284 = vmatprep.subr.mxu0 0.0
  %285 = vmatpush1.msra.mxu0 0.0
  %286 = vmatprep.subr.mxu0 0.0
  %287 = vmatpush1.msra.mxu0 0.0
  %288 = vmatprep.subr.mxu0 0.0
  %289 = vmatpush1.msra.mxu0 0.0
  %290 = vmatprep.subr.mxu0 0.0
  %291 = vmatpush1.msra.mxu0 0.0
  %292 = vmatprep.subr.mxu0 0.0
  %293 = vmatpush1.msra.mxu0 0.0
  %294 = vmatprep.subr.mxu0 0.0
  %295 = vmatpush1.msra.mxu0 0.0
  %296 = vmatprep.subr.mxu0 0.0
  %297 = vmatpush1.msra.mxu0 0.0
  %298 = vmatprep.subr.mxu0 0.0
  %299 = vmatpush1.msra.mxu0 0.0
  %300 = vmatprep.subr.mxu0 0.0
  %301 = vmatpush1.msra.mxu0 0.0
  %302 = vmatprep.subr.mxu0 0.0
  %303 = vmatpush1.msra.mxu0 0.0
  %304 = vmatprep.subr.mxu0 0.0
  %305 = vmatpush1.msra.mxu0 0.0
  %306 = vmatprep.subr.mxu0 0.0
  %307 = vmatpush1.msra.mxu0 0.0
  %308 = vmatprep.subr.mxu0 0.0
  %309 = vmatpush1.msra.mxu0 0.0
  %310 = vmatprep.subr.mxu0 0.0
  %311 = vmatpush1.msra.mxu0 0.0
  %312 = vmatprep.subr.mxu0 0.0
  %313 = vmatpush1.msra.mxu0 0.0
  %314 = vmatprep.subr.mxu0 0.0
  %315 = vmatpush1.msra.mxu0 0.0
  %316 = vmatprep.subr.mxu0 0.0
  %317 = vmatpush1.msra.mxu0 0.0
  %318 = vmatprep.subr.mxu0 0.0
  %319 = vmatpush1.msra.mxu0 0.0
  %320 = vmatprep.subr.mxu0 0.0
  %321 = vmatpush1.msra.mxu0 0.0
  %322 = vmatprep.subr.mxu0 0.0
  %323 = vmatpush1.msra.mxu0 0.0
  %324 = vmatprep.subr.mxu0 0.0
  %325 = vmatpush1.msra.mxu0 0.0
  %326 = vmatprep.subr.mxu0 0.0
  %327 = vmatpush1.msra.mxu0 0.0
  %328 = vmatprep.subr.mxu0 0.0
  %329 = vmatpush1.msra.mxu0 0.0
  %330 = vmatprep.subr.mxu0 0.0
  %331 = vmatpush1.msra.mxu0 0.0
  %332 = vmatprep.subr.mxu0 0.0
  %333 = vmatpush1.msra.mxu0 0.0
  %334 = vmatprep.subr.mxu0 0.0
  %335 = vmatpush1.msra.mxu0 0.0
  %336 = vmatprep.mubr.f32.mxu0 0.0
  %337 = vmatmul.mubr.f32.gmra.mrb[0].mxu0 %v31
  %v338 = vpop.f32.mrb[0].mxu0
  %v339 = vadd.f32 0.0, %v338
  %v340 = vpop.f32.mrb[0].mxu0
  %341 = vdwg.mxu0
  %v342 = vmax.f32 %v261, %v339
  %v343 = vmax.f32 %v185, %v342
  %v344 = vld [vmem:[%s5] sm:$0xff]
  %346 = vset.pattern.permute.xlu0 0
  %347 = vperm.xlu0 %346, %v344
  %v348 = vpop.permute.xlu0 %347
  %v350 = vadd.f32 %v343, %v348
  %v351 = vmax.f32 %v350, 0.0
  %vm352 = vcmask 523264
  %353 = vst.msk [vmem:[%s6] sm:$0xff] %vm352, %v351
  // Predicated region
  $region26: #{outter_bae_forward.5} parent=0 // pred_check
    _
  $region27: #{outter_bae_forward.5} parent=0 // pred_check_branch
    %355 = sbr.rel (0) target = $region29
  $region28: #{outter_bae_forward.5} parent=0 // pred_region
    _
  $region29: #{outter_bae_forward.5} parent=0 // pred_fallthru
    _
  // Predicated region
  $region30: #{outter_bae_forward.5} parent=0 // pred_check
    _
  $region31: #{outter_bae_forward.5} parent=0 // pred_check_branch
    %357 = sbr.rel (0) target = $region33
  $region32: #{outter_bae_forward.5} parent=0 // pred_region
    _
  $region33: #{outter_bae_forward.5} parent=0 // pred_fallthru
    _

// kernel: outter_bae_forward.6
$region0: #{outter_bae_forward.6}
  #allocation0 [shape = 'u32[]', space=smem, size = 0x4, offset = 0x4, fixed_abs, tag = 'smem constant byte address 0x4 - core index']
  #allocation1 [shape = 'u32[144,128]{1,0:T(1,128)}', space=vmem, size = 0x12000, scoped, tag = 'internal scratch']
  %s0 = inlined_call_operand.vmem [shape: f32[72,16], index: 0, kind: input, shape index: {}]
  %s1 = inlined_call_operand.vmem [shape: f32[72,16], index: 1, kind: input, shape index: {}]
  %s2 = inlined_call_operand.vmem [shape: f32[72,16], index: 2, kind: input, shape index: {}]
  %s3 = inlined_call_operand.vmem [shape: f32[72,16], index: 3, kind: input, shape index: {}]
  %s4 = inlined_call_operand.vmem [shape: f32[8,72], index: 4, kind: input, shape index: {}]
  %s5 = inlined_call_operand.vmem [shape: f32[8,1], index: 5, kind: input, shape index: {}]
  %s6 = inlined_call_operand.vmem [shape: f32[8,16], index: 6, kind: output, shape index: {}]
  %s7 = sld [smem:[#allocation0]]
  $region34: #{outter_bae_forward.6} parent=0
    _
  %s9 = ssub.s32 1, %s7
  %s10 = scalar_select 0, %s9, %s7
  // Predicated region
  $region2: #{outter_bae_forward.6} parent=0 // pred_check
    _
  $region3: #{outter_bae_forward.6} parent=0 // pred_check_branch
    %12 = sbr.rel (0) target = $region5
  $region4: #{outter_bae_forward.6} parent=0 // pred_region
    _
  $region5: #{outter_bae_forward.6} parent=0 // pred_fallthru
    _
  // Predicated region
  $region6: #{outter_bae_forward.6} parent=0 // pred_check
    _
  $region7: #{outter_bae_forward.6} parent=0 // pred_check_branch
    %14 = sbr.rel (0) target = $region9
  $region8: #{outter_bae_forward.6} parent=0 // pred_region
    _
  $region9: #{outter_bae_forward.6} parent=0 // pred_fallthru
    _
  // Predicated region
  $region10: #{outter_bae_forward.6} parent=0 // pred_check
    _
  $region11: #{outter_bae_forward.6} parent=0 // pred_check_branch
    %16 = sbr.rel (0) target = $region13
  $region12: #{outter_bae_forward.6} parent=0 // pred_region
    _
  $region13: #{outter_bae_forward.6} parent=0 // pred_fallthru
    _
  // Predicated region
  $region14: #{outter_bae_forward.6} parent=0 // pred_check
    _
  $region15: #{outter_bae_forward.6} parent=0 // pred_check_branch
    %18 = sbr.rel (0) target = $region17
  $region16: #{outter_bae_forward.6} parent=0 // pred_region
    _
  $region17: #{outter_bae_forward.6} parent=0 // pred_fallthru
    _
  // Predicated region
  $region18: #{outter_bae_forward.6} parent=0 // pred_check
    _
  $region19: #{outter_bae_forward.6} parent=0 // pred_check_branch
    %20 = sbr.rel (0) target = $region21
  $region20: #{outter_bae_forward.6} parent=0 // pred_region
    _
  $region21: #{outter_bae_forward.6} parent=0 // pred_fallthru
    _
  // Predicated region
  $region22: #{outter_bae_forward.6} parent=0 // pred_check
    _
  $region23: #{outter_bae_forward.6} parent=0 // pred_check_branch
    %22 = sbr.rel (0) target = $region25
  $region24: #{outter_bae_forward.6} parent=0 // pred_region
    _
  $region25: #{outter_bae_forward.6} parent=0 // pred_fallthru
    _
  %v23 = vld [vmem:[%s4] sm:$0xff]
  %v24 = vld [vmem:[%s0] sm:$0xff]
  %v25 = vld [vmem:[%s0 + $0x8] sm:$0xff]
  %v26 = vld [vmem:[%s0 + $0x10] sm:$0xff]
  %v27 = vld [vmem:[%s0 + $0x18] sm:$0xff]
  %v28 = vld [vmem:[%s0 + $0x20] sm:$0xff]
  %v29 = vld [vmem:[%s0 + $0x28] sm:$0xff]
  %v30 = vld [vmem:[%s0 + $0x30] sm:$0xff]
  %v31 = vld [vmem:[%s0 + $0x38] sm:$0xff]
  %v32 = vld [vmem:[%s0 + $0x40] sm:$0xff]
  %vm33 = vcmask 588800
  %v35 = vsel %vm33, %v23, 0
  %37 = vmatprep.subr.mxu0 0.0
  %38 = vmatpush1.msra.mxu0 %v24
  %39 = vmatprep.subr.mxu0 0.0
  %40 = vmatpush1.msra.mxu0 %v25
  %41 = vmatprep.subr.mxu0 0.0
  %42 = vmatpush1.msra.mxu0 %v26
  %43 = vmatprep.subr.mxu0 0.0
  %44 = vmatpush1.msra.mxu0 %v27
  %45 = vmatprep.subr.mxu0 0.0
  %46 = vmatpush1.msra.mxu0 %v28
  %47 = vmatprep.subr.mxu0 0.0
  %48 = vmatpush1.msra.mxu0 %v29
  %49 = vmatprep.subr.mxu0 0.0
  %50 = vmatpush1.msra.mxu0 %v30
  %51 = vmatprep.subr.mxu0 0.0
  %52 = vmatpush1.msra.mxu0 %v31
  %53 = vmatprep.subr.mxu0 0.0
  %54 = vmatpush1.msra.mxu0 %v32
  %55 = vmatprep.subr.mxu0 0.0
  %56 = vmatpush1.msra.mxu0 0.0
  %57 = vmatprep.subr.mxu0 0.0
  %58 = vmatpush1.msra.mxu0 0.0
  %59 = vmatprep.subr.mxu0 0.0
  %60 = vmatpush1.msra.mxu0 0.0
  %61 = vmatprep.subr.mxu0 0.0
  %62 = vmatpush1.msra.mxu0 0.0
  %63 = vmatprep.subr.mxu0 0.0
  %64 = vmatpush1.msra.mxu0 0.0
  %65 = vmatprep.subr.mxu0 0.0
  %66 = vmatpush1.msra.mxu0 0.0
  %67 = vmatprep.subr.mxu0 0.0
  %68 = vmatpush1.msra.mxu0 0.0
  %69 = vmatprep.subr.mxu0 0.0
  %70 = vmatpush1.msra.mxu0 0.0
  %71 = vmatprep.subr.mxu0 0.0
  %72 = vmatpush1.msra.mxu0 0.0
  %73 = vmatprep.subr.mxu0 0.0
  %74 = vmatpush1.msra.mxu0 0.0
  %75 = vmatprep.subr.mxu0 0.0
  %76 = vmatpush1.msra.mxu0 0.0
  %77 = vmatprep.subr.mxu0 0.0
  %78 = vmatpush1.msra.mxu0 0.0
  %79 = vmatprep.subr.mxu0 0.0
  %80 = vmatpush1.msra.mxu0 0.0
  %81 = vmatprep.subr.mxu0 0.0
  %82 = vmatpush1.msra.mxu0 0.0
  %83 = vmatprep.subr.mxu0 0.0
  %84 = vmatpush1.msra.mxu0 0.0
  %85 = vmatprep.subr.mxu0 0.0
  %86 = vmatpush1.msra.mxu0 0.0
  %87 = vmatprep.subr.mxu0 0.0
  %88 = vmatpush1.msra.mxu0 0.0
  %89 = vmatprep.subr.mxu0 0.0
  %90 = vmatpush1.msra.mxu0 0.0
  %91 = vmatprep.subr.mxu0 0.0
  %92 = vmatpush1.msra.mxu0 0.0
  %93 = vmatprep.subr.mxu0 0.0
  %94 = vmatpush1.msra.mxu0 0.0
  %95 = vmatprep.subr.mxu0 0.0
  %96 = vmatpush1.msra.mxu0 0.0
  %97 = vmatprep.subr.mxu0 0.0
  %98 = vmatpush1.msra.mxu0 0.0
  %99 = vmatprep.subr.mxu0 0.0
  %100 = vmatpush1.msra.mxu0 0.0
  %101 = vmatprep.mubr.f32.mxu0 0.0
  %102 = vmatmul.mubr.f32.gmra.mrb[0].mxu0 %v35
  %v103 = vpop.f32.mrb[0].mxu0
  %v104 = vadd.f32 0.0, %v103
  %v105 = vpop.f32.mrb[0].mxu0
  %106 = vdwg.mxu0
  %v107 = vld [vmem:[%s1] sm:$0xff]
  %v108 = vld [vmem:[%s1 + $0x8] sm:$0xff]
  %v109 = vld [vmem:[%s1 + $0x10] sm:$0xff]
  %v110 = vld [vmem:[%s1 + $0x18] sm:$0xff]
  %v111 = vld [vmem:[%s1 + $0x20] sm:$0xff]
  %v112 = vld [vmem:[%s1 + $0x28] sm:$0xff]
  %v113 = vld [vmem:[%s1 + $0x30] sm:$0xff]
  %v114 = vld [vmem:[%s1 + $0x38] sm:$0xff]
  %v115 = vld [vmem:[%s1 + $0x40] sm:$0xff]
  %116 = vmatprep.subr.mxu0 0.0
  %117 = vmatpush1.msra.mxu0 %v107
  %118 = vmatprep.subr.mxu0 0.0
  %119 = vmatpush1.msra.mxu0 %v108
  %120 = vmatprep.subr.mxu0 0.0
  %121 = vmatpush1.msra.mxu0 %v109
  %122 = vmatprep.subr.mxu0 0.0
  %123 = vmatpush1.msra.mxu0 %v110
  %124 = vmatprep.subr.mxu0 0.0
  %125 = vmatpush1.msra.mxu0 %v111
  %126 = vmatprep.subr.mxu0 0.0
  %127 = vmatpush1.msra.mxu0 %v112
  %128 = vmatprep.subr.mxu0 0.0
  %129 = vmatpush1.msra.mxu0 %v113
  %130 = vmatprep.subr.mxu0 0.0
  %131 = vmatpush1.msra.mxu0 %v114
  %132 = vmatprep.subr.mxu0 0.0
  %133 = vmatpush1.msra.mxu0 %v115
  %134 = vmatprep.subr.mxu0 0.0
  %135 = vmatpush1.msra.mxu0 0.0
  %136 = vmatprep.subr.mxu0 0.0
  %137 = vmatpush1.msra.mxu0 0.0
  %138 = vmatprep.subr.mxu0 0.0
  %139 = vmatpush1.msra.mxu0 0.0
  %140 = vmatprep.subr.mxu0 0.0
  %141 = vmatpush1.msra.mxu0 0.0
  %142 = vmatprep.subr.mxu0 0.0
  %143 = vmatpush1.msra.mxu0 0.0
  %144 = vmatprep.subr.mxu0 0.0
  %145 = vmatpush1.msra.mxu0 0.0
  %146 = vmatprep.subr.mxu0 0.0
  %147 = vmatpush1.msra.mxu0 0.0
  %148 = vmatprep.subr.mxu0 0.0
  %149 = vmatpush1.msra.mxu0 0.0
  %150 = vmatprep.subr.mxu0 0.0
  %151 = vmatpush1.msra.mxu0 0.0
  %152 = vmatprep.subr.mxu0 0.0
  %153 = vmatpush1.msra.mxu0 0.0
  %154 = vmatprep.subr.mxu0 0.0
  %155 = vmatpush1.msra.mxu0 0.0
  %156 = vmatprep.subr.mxu0 0.0
  %157 = vmatpush1.msra.mxu0 0.0
  %158 = vmatprep.subr.mxu0 0.0
  %159 = vmatpush1.msra.mxu0 0.0
  %160 = vmatprep.subr.mxu0 0.0
  %161 = vmatpush1.msra.mxu0 0.0
  %162 = vmatprep.subr.mxu0 0.0
  %163 = vmatpush1.msra.mxu0 0.0
  %164 = vmatprep.subr.mxu0 0.0
  %165 = vmatpush1.msra.mxu0 0.0
  %166 = vmatprep.subr.mxu0 0.0
  %167 = vmatpush1.msra.mxu0 0.0
  %168 = vmatprep.subr.mxu0 0.0
  %169 = vmatpush1.msra.mxu0 0.0
  %170 = vmatprep.subr.mxu0 0.0
  %171 = vmatpush1.msra.mxu0 0.0
  %172 = vmatprep.subr.mxu0 0.0
  %173 = vmatpush1.msra.mxu0 0.0
  %174 = vmatprep.subr.mxu0 0.0
  %175 = vmatpush1.msra.mxu0 0.0
  %176 = vmatprep.subr.mxu0 0.0
  %177 = vmatpush1.msra.mxu0 0.0
  %178 = vmatprep.subr.mxu0 0.0
  %179 = vmatpush1.msra.mxu0 0.0
  %180 = vmatprep.mubr.f32.mxu0 0.0
  %181 = vmatmul.mubr.f32.gmra.mrb[0].mxu0 %v35
  %v182 = vpop.f32.mrb[0].mxu0
  %v183 = vadd.f32 0.0, %v182
  %v184 = vpop.f32.mrb[0].mxu0
  %185 = vdwg.mxu0
  %v186 = vmax.f32 %v104, %v183
  %v187 = vld [vmem:[%s2] sm:$0xff]
  %v188 = vld [vmem:[%s2 + $0x8] sm:$0xff]
  %v189 = vld [vmem:[%s2 + $0x10] sm:$0xff]
  %v190 = vld [vmem:[%s2 + $0x18] sm:$0xff]
  %v191 = vld [vmem:[%s2 + $0x20] sm:$0xff]
  %v192 = vld [vmem:[%s2 + $0x28] sm:$0xff]
  %v193 = vld [vmem:[%s2 + $0x30] sm:$0xff]
  %v194 = vld [vmem:[%s2 + $0x38] sm:$0xff]
  %v195 = vld [vmem:[%s2 + $0x40] sm:$0xff]
  %196 = vmatprep.subr.mxu0 0.0
  %197 = vmatpush1.msra.mxu0 %v187
  %198 = vmatprep.subr.mxu0 0.0
  %199 = vmatpush1.msra.mxu0 %v188
  %200 = vmatprep.subr.mxu0 0.0
  %201 = vmatpush1.msra.mxu0 %v189
  %202 = vmatprep.subr.mxu0 0.0
  %203 = vmatpush1.msra.mxu0 %v190
  %204 = vmatprep.subr.mxu0 0.0
  %205 = vmatpush1.msra.mxu0 %v191
  %206 = vmatprep.subr.mxu0 0.0
  %207 = vmatpush1.msra.mxu0 %v192
  %208 = vmatprep.subr.mxu0 0.0
  %209 = vmatpush1.msra.mxu0 %v193
  %210 = vmatprep.subr.mxu0 0.0
  %211 = vmatpush1.msra.mxu0 %v194
  %212 = vmatprep.subr.mxu0 0.0
  %213 = vmatpush1.msra.mxu0 %v195
  %214 = vmatprep.subr.mxu0 0.0
  %215 = vmatpush1.msra.mxu0 0.0
  %216 = vmatprep.subr.mxu0 0.0
  %217 = vmatpush1.msra.mxu0 0.0
  %218 = vmatprep.subr.mxu0 0.0
  %219 = vmatpush1.msra.mxu0 0.0
  %220 = vmatprep.subr.mxu0 0.0
  %221 = vmatpush1.msra.mxu0 0.0
  %222 = vmatprep.subr.mxu0 0.0
  %223 = vmatpush1.msra.mxu0 0.0
  %224 = vmatprep.subr.mxu0 0.0
  %225 = vmatpush1.msra.mxu0 0.0
  %226 = vmatprep.subr.mxu0 0.0
  %227 = vmatpush1.msra.mxu0 0.0
  %228 = vmatprep.subr.mxu0 0.0
  %229 = vmatpush1.msra.mxu0 0.0
  %230 = vmatprep.subr.mxu0 0.0
  %231 = vmatpush1.msra.mxu0 0.0
  %232 = vmatprep.subr.mxu0 0.0
  %233 = vmatpush1.msra.mxu0 0.0
  %234 = vmatprep.subr.mxu0 0.0
  %235 = vmatpush1.msra.mxu0 0.0
  %236 = vmatprep.subr.mxu0 0.0
  %237 = vmatpush1.msra.mxu0 0.0
  %238 = vmatprep.subr.mxu0 0.0
  %239 = vmatpush1.msra.mxu0 0.0
  %240 = vmatprep.subr.mxu0 0.0
  %241 = vmatpush1.msra.mxu0 0.0
  %242 = vmatprep.subr.mxu0 0.0
  %243 = vmatpush1.msra.mxu0 0.0
  %244 = vmatprep.subr.mxu0 0.0
  %245 = vmatpush1.msra.mxu0 0.0
  %246 = vmatprep.subr.mxu0 0.0
  %247 = vmatpush1.msra.mxu0 0.0
  %248 = vmatprep.subr.mxu0 0.0
  %249 = vmatpush1.msra.mxu0 0.0
  %250 = vmatprep.subr.mxu0 0.0
  %251 = vmatpush1.msra.mxu0 0.0
  %252 = vmatprep.subr.mxu0 0.0
  %253 = vmatpush1.msra.mxu0 0.0
  %254 = vmatprep.subr.mxu0 0.0
  %255 = vmatpush1.msra.mxu0 0.0
  %256 = vmatprep.subr.mxu0 0.0
  %257 = vmatpush1.msra.mxu0 0.0
  %258 = vmatprep.subr.mxu0 0.0
  %259 = vmatpush1.msra.mxu0 0.0
  %260 = vmatprep.mubr.f32.mxu0 0.0
  %261 = vmatmul.mubr.f32.gmra.mrb[0].mxu0 %v35
  %v262 = vpop.f32.mrb[0].mxu0
  %v263 = vadd.f32 0.0, %v262
  %v264 = vpop.f32.mrb[0].mxu0
  %265 = vdwg.mxu0
  %v266 = vld [vmem:[%s3] sm:$0xff]
  %v267 = vld [vmem:[%s3 + $0x8] sm:$0xff]
  %v268 = vld [vmem:[%s3 + $0x10] sm:$0xff]
  %v269 = vld [vmem:[%s3 + $0x18] sm:$0xff]
  %v270 = vld [vmem:[%s3 + $0x20] sm:$0xff]
  %v271 = vld [vmem:[%s3 + $0x28] sm:$0xff]
  %v272 = vld [vmem:[%s3 + $0x30] sm:$0xff]
  %v273 = vld [vmem:[%s3 + $0x38] sm:$0xff]
  %v274 = vld [vmem:[%s3 + $0x40] sm:$0xff]
  %275 = vmatprep.subr.mxu0 0.0
  %276 = vmatpush1.msra.mxu0 %v266
  %277 = vmatprep.subr.mxu0 0.0
  %278 = vmatpush1.msra.mxu0 %v267
  %279 = vmatprep.subr.mxu0 0.0
  %280 = vmatpush1.msra.mxu0 %v268
  %281 = vmatprep.subr.mxu0 0.0
  %282 = vmatpush1.msra.mxu0 %v269
  %283 = vmatprep.subr.mxu0 0.0
  %284 = vmatpush1.msra.mxu0 %v270
  %285 = vmatprep.subr.mxu0 0.0
  %286 = vmatpush1.msra.mxu0 %v271
  %287 = vmatprep.subr.mxu0 0.0
  %288 = vmatpush1.msra.mxu0 %v272
  %289 = vmatprep.subr.mxu0 0.0
  %290 = vmatpush1.msra.mxu0 %v273
  %291 = vmatprep.subr.mxu0 0.0
  %292 = vmatpush1.msra.mxu0 %v274
  %293 = vmatprep.subr.mxu0 0.0
  %294 = vmatpush1.msra.mxu0 0.0
  %295 = vmatprep.subr.mxu0 0.0
  %296 = vmatpush1.msra.mxu0 0.0
  %297 = vmatprep.subr.mxu0 0.0
  %298 = vmatpush1.msra.mxu0 0.0
  %299 = vmatprep.subr.mxu0 0.0
  %300 = vmatpush1.msra.mxu0 0.0
  %301 = vmatprep.subr.mxu0 0.0
  %302 = vmatpush1.msra.mxu0 0.0
  %303 = vmatprep.subr.mxu0 0.0
  %304 = vmatpush1.msra.mxu0 0.0
  %305 = vmatprep.subr.mxu0 0.0
  %306 = vmatpush1.msra.mxu0 0.0
  %307 = vmatprep.subr.mxu0 0.0
  %308 = vmatpush1.msra.mxu0 0.0
  %309 = vmatprep.subr.mxu0 0.0
  %310 = vmatpush1.msra.mxu0 0.0
  %311 = vmatprep.subr.mxu0 0.0
  %312 = vmatpush1.msra.mxu0 0.0
  %313 = vmatprep.subr.mxu0 0.0
  %314 = vmatpush1.msra.mxu0 0.0
  %315 = vmatprep.subr.mxu0 0.0
  %316 = vmatpush1.msra.mxu0 0.0
  %317 = vmatprep.subr.mxu0 0.0
  %318 = vmatpush1.msra.mxu0 0.0
  %319 = vmatprep.subr.mxu0 0.0
  %320 = vmatpush1.msra.mxu0 0.0
  %321 = vmatprep.subr.mxu0 0.0
  %322 = vmatpush1.msra.mxu0 0.0
  %323 = vmatprep.subr.mxu0 0.0
  %324 = vmatpush1.msra.mxu0 0.0
  %325 = vmatprep.subr.mxu0 0.0
  %326 = vmatpush1.msra.mxu0 0.0
  %327 = vmatprep.subr.mxu0 0.0
  %328 = vmatpush1.msra.mxu0 0.0
  %329 = vmatprep.subr.mxu0 0.0
  %330 = vmatpush1.msra.mxu0 0.0
  %331 = vmatprep.subr.mxu0 0.0
  %332 = vmatpush1.msra.mxu0 0.0
  %333 = vmatprep.subr.mxu0 0.0
  %334 = vmatpush1.msra.mxu0 0.0
  %335 = vmatprep.subr.mxu0 0.0
  %336 = vmatpush1.msra.mxu0 0.0
  %337 = vmatprep.subr.mxu0 0.0
  %338 = vmatpush1.msra.mxu0 0.0
  %339 = vmatprep.mubr.f32.mxu0 0.0
  %340 = vmatmul.mubr.f32.gmra.mrb[0].mxu0 %v35
  %v341 = vpop.f32.mrb[0].mxu0
  %v342 = vadd.f32 0.0, %v341
  %v343 = vpop.f32.mrb[0].mxu0
  %344 = vdwg.mxu0
  %v345 = vmax.f32 %v263, %v342
  %v346 = vmax.f32 %v186, %v345
  %v347 = vld [vmem:[%s5] sm:$0xff]
  %349 = vset.pattern.permute.xlu0 0
  %350 = vperm.xlu0 %349, %v347
  %v351 = vpop.permute.xlu0 %350
  %v353 = vadd.f32 %v346, %v351
  %v354 = vmax.f32 %v353, 0.0
  %vm355 = vcmask 130048
  %356 = vst.msk [vmem:[%s6] sm:$0xff] %vm355, %v354
  // Predicated region
  $region26: #{outter_bae_forward.6} parent=0 // pred_check
    _
  $region27: #{outter_bae_forward.6} parent=0 // pred_check_branch
    %358 = sbr.rel (0) target = $region29
  $region28: #{outter_bae_forward.6} parent=0 // pred_region
    _
  $region29: #{outter_bae_forward.6} parent=0 // pred_fallthru
    _
  // Predicated region
  $region30: #{outter_bae_forward.6} parent=0 // pred_check
    _
  $region31: #{outter_bae_forward.6} parent=0 // pred_check_branch
    %360 = sbr.rel (0) target = $region33
  $region32: #{outter_bae_forward.6} parent=0 // pred_region
    _
  $region33: #{outter_bae_forward.6} parent=0 // pred_fallthru
    _

// kernel: outter_bae_forward.7
$region0: #{outter_bae_forward.7}
  #allocation0 [shape = 'u32[]', space=smem, size = 0x4, offset = 0x4, fixed_abs, tag = 'smem constant byte address 0x4 - core index']
  #allocation1 [shape = 'u32[144,128]{1,0:T(1,128)}', space=vmem, size = 0x12000, scoped, tag = 'internal scratch']
  %s0 = inlined_call_operand.vmem [shape: f32[2,32], index: 0, kind: input, shape index: {}]
  %s1 = inlined_call_operand.vmem [shape: f32[2,32], index: 1, kind: input, shape index: {}]
  %s2 = inlined_call_operand.vmem [shape: f32[2,9], index: 2, kind: input, shape index: {}]
  %s3 = inlined_call_operand.vmem [shape: f32[32,32], index: 3, kind: input, shape index: {}]
  %s4 = inlined_call_operand.vmem [shape: f32[1,32], index: 4, kind: input, shape index: {}]
  %s5 = inlined_call_operand.vmem [shape: f32[32,16], index: 5, kind: input, shape index: {}]
  %s6 = inlined_call_operand.vmem [shape: f32[1,16], index: 6, kind: input, shape index: {}]
  %s7 = inlined_call_operand.vmem [shape: f32[16,32], index: 7, kind: input, shape index: {}]
  %s8 = inlined_call_operand.vmem [shape: f32[1,32], index: 8, kind: input, shape index: {}]
  %s9 = inlined_call_operand.vmem [shape: f32[32,900], index: 9, kind: input, shape index: {}]
  %s10 = inlined_call_operand.vmem [shape: f32[1,900], index: 10, kind: input, shape index: {}]
  %s11 = inlined_call_operand.vmem [shape: f32[32,120], index: 11, kind: input, shape index: {}]
  %s12 = inlined_call_operand.vmem [shape: f32[1,120], index: 12, kind: input, shape index: {}]
  %s13 = inlined_call_operand.vmem [shape: f32[32,1034], index: 13, kind: input, shape index: {}]
  %s14 = inlined_call_operand.vmem [shape: f32[1,1034], index: 14, kind: input, shape index: {}]
  %s15 = inlined_call_operand.vmem [shape: f32[32,1079], index: 15, kind: input, shape index: {}]
  %s16 = inlined_call_operand.vmem [shape: f32[1,1079], index: 16, kind: input, shape index: {}]
  %s17 = inlined_call_operand.vmem [shape: f32[9,268], index: 17, kind: input, shape index: {}]
  %s18 = inlined_call_operand.vmem [shape: f32[1,268], index: 18, kind: input, shape index: {}]
  %s19 = inlined_call_operand.vmem [shape: f32[9,334], index: 19, kind: input, shape index: {}]
  %s20 = inlined_call_operand.vmem [shape: f32[1,334], index: 20, kind: input, shape index: {}]
  %s21 = inlined_call_operand.vmem [shape: f32[10,120], index: 21, kind: input, shape index: {}]
  %s22 = inlined_call_operand.vmem [shape: f32[55,900], index: 22, kind: input, shape index: {}]
  %s23 = inlined_call_operand.vmem [shape: f32[12,120], index: 23, kind: input, shape index: {}]
  %s24 = inlined_call_operand.vmem [shape: f32[78,900], index: 24, kind: input, shape index: {}]
  %s25 = inlined_call_operand.vmem [shape: f32[2,900], index: 25, kind: output, shape index: {0}]
  %s26 = inlined_call_operand.vmem [shape: f32[2,900], index: 26, kind: output, shape index: {1}]
  %s27 = inlined_call_operand.vmem [shape: f32[2,120], index: 27, kind: output, shape index: {2}]
  %28 = xla_tuple %s25, %s26, %s27
  %s29 = sld [smem:[#allocation0]]
  $region126: #{outter_bae_forward.7} parent=0
    _
  %s31 = ssub.s32 1, %s29
  %s32 = scalar_select 0, %s31, %s29
  // Predicated region
  $region2: #{outter_bae_forward.7} parent=0 // pred_check
    _
  $region3: #{outter_bae_forward.7} parent=0 // pred_check_branch
    %34 = sbr.rel (0) target = $region5
  $region4: #{outter_bae_forward.7} parent=0 // pred_region
    _
  $region5: #{outter_bae_forward.7} parent=0 // pred_fallthru
    _
  // Predicated region
  $region6: #{outter_bae_forward.7} parent=0 // pred_check
    _
  $region7: #{outter_bae_forward.7} parent=0 // pred_check_branch
    %36 = sbr.rel (0) target = $region9
  $region8: #{outter_bae_forward.7} parent=0 // pred_region
    _
  $region9: #{outter_bae_forward.7} parent=0 // pred_fallthru
    _
  // Predicated region
  $region10: #{outter_bae_forward.7} parent=0 // pred_check
    _
  $region11: #{outter_bae_forward.7} parent=0 // pred_check_branch
    %38 = sbr.rel (0) target = $region13
  $region12: #{outter_bae_forward.7} parent=0 // pred_region
    _
  $region13: #{outter_bae_forward.7} parent=0 // pred_fallthru
    _
  // Predicated region
  $region14: #{outter_bae_forward.7} parent=0 // pred_check
    _
  $region15: #{outter_bae_forward.7} parent=0 // pred_check_branch
    %40 = sbr.rel (0) target = $region17
  $region16: #{outter_bae_forward.7} parent=0 // pred_region
    _
  $region17: #{outter_bae_forward.7} parent=0 // pred_fallthru
    _
  // Predicated region
  $region18: #{outter_bae_forward.7} parent=0 // pred_check
    _
  $region19: #{outter_bae_forward.7} parent=0 // pred_check_branch
    %42 = sbr.rel (0) target = $region21
  $region20: #{outter_bae_forward.7} parent=0 // pred_region
    _
  $region21: #{outter_bae_forward.7} parent=0 // pred_fallthru
    _
  // Predicated region
  $region22: #{outter_bae_forward.7} parent=0 // pred_check
    _
  $region23: #{outter_bae_forward.7} parent=0 // pred_check_branch
    %44 = sbr.rel (0) target = $region25
  $region24: #{outter_bae_forward.7} parent=0 // pred_region
    _
  $region25: #{outter_bae_forward.7} parent=0 // pred_fallthru
    _
  // Predicated region
  $region26: #{outter_bae_forward.7} parent=0 // pred_check
    _
  $region27: #{outter_bae_forward.7} parent=0 // pred_check_branch
    %46 = sbr.rel (0) target = $region29
  $region28: #{outter_bae_forward.7} parent=0 // pred_region
    _
  $region29: #{outter_bae_forward.7} parent=0 // pred_fallthru
    _
  // Predicated region
  $region30: #{outter_bae_forward.7} parent=0 // pred_check
    _
  $region31: #{outter_bae_forward.7} parent=0 // pred_check_branch
    %48 = sbr.rel (0) target = $region33
  $region32: #{outter_bae_forward.7} parent=0 // pred_region
    _
  $region33: #{outter_bae_forward.7} parent=0 // pred_fallthru
    _
  // Predicated region
  $region34: #{outter_bae_forward.7} parent=0 // pred_check
    _
  $region35: #{outter_bae_forward.7} parent=0 // pred_check_branch
    %50 = sbr.rel (0) target = $region37
  $region36: #{outter_bae_forward.7} parent=0 // pred_region
    _
  $region37: #{outter_bae_forward.7} parent=0 // pred_fallthru
    _
  // Predicated region
  $region38: #{outter_bae_forward.7} parent=0 // pred_check
    _
  $region39: #{outter_bae_forward.7} parent=0 // pred_check_branch
    %52 = sbr.rel (0) target = $region41
  $region40: #{outter_bae_forward.7} parent=0 // pred_region
    _
  $region41: #{outter_bae_forward.7} parent=0 // pred_fallthru
    _
  // Predicated region
  $region42: #{outter_bae_forward.7} parent=0 // pred_check
    _
  $region43: #{outter_bae_forward.7} parent=0 // pred_check_branch
    %54 = sbr.rel (0) target = $region45
  $region44: #{outter_bae_forward.7} parent=0 // pred_region
    _
  $region45: #{outter_bae_forward.7} parent=0 // pred_fallthru
    _
  // Predicated region
  $region46: #{outter_bae_forward.7} parent=0 // pred_check
    _
  $region47: #{outter_bae_forward.7} parent=0 // pred_check_branch
    %56 = sbr.rel (0) target = $region49
  $region48: #{outter_bae_forward.7} parent=0 // pred_region
    _
  $region49: #{outter_bae_forward.7} parent=0 // pred_fallthru
    _
  // Predicated region
  $region50: #{outter_bae_forward.7} parent=0 // pred_check
    _
  $region51: #{outter_bae_forward.7} parent=0 // pred_check_branch
    %58 = sbr.rel (0) target = $region53
  $region52: #{outter_bae_forward.7} parent=0 // pred_region
    _
  $region53: #{outter_bae_forward.7} parent=0 // pred_fallthru
    _
  // Predicated region
  $region54: #{outter_bae_forward.7} parent=0 // pred_check
    _
  $region55: #{outter_bae_forward.7} parent=0 // pred_check_branch
    %60 = sbr.rel (0) target = $region57
  $region56: #{outter_bae_forward.7} parent=0 // pred_region
    _
  $region57: #{outter_bae_forward.7} parent=0 // pred_fallthru
    _
  // Predicated region
  $region58: #{outter_bae_forward.7} parent=0 // pred_check
    _
  $region59: #{outter_bae_forward.7} parent=0 // pred_check_branch
    %62 = sbr.rel (0) target = $region61
  $region60: #{outter_bae_forward.7} parent=0 // pred_region
    _
  $region61: #{outter_bae_forward.7} parent=0 // pred_fallthru
    _
  // Predicated region
  $region62: #{outter_bae_forward.7} parent=0 // pred_check
    _
  $region63: #{outter_bae_forward.7} parent=0 // pred_check_branch
    %64 = sbr.rel (0) target = $region65
  $region64: #{outter_bae_forward.7} parent=0 // pred_region
    _
  $region65: #{outter_bae_forward.7} parent=0 // pred_fallthru
    _
  // Predicated region
  $region66: #{outter_bae_forward.7} parent=0 // pred_check
    _
  $region67: #{outter_bae_forward.7} parent=0 // pred_check_branch
    %66 = sbr.rel (0) target = $region69
  $region68: #{outter_bae_forward.7} parent=0 // pred_region
    _
  $region69: #{outter_bae_forward.7} parent=0 // pred_fallthru
    _
  // Predicated region
  $region70: #{outter_bae_forward.7} parent=0 // pred_check
    _
  $region71: #{outter_bae_forward.7} parent=0 // pred_check_branch
    %68 = sbr.rel (0) target = $region73
  $region72: #{outter_bae_forward.7} parent=0 // pred_region
    _
  $region73: #{outter_bae_forward.7} parent=0 // pred_fallthru
    _
  // Predicated region
  $region74: #{outter_bae_forward.7} parent=0 // pred_check
    _
  $region75: #{outter_bae_forward.7} parent=0 // pred_check_branch
    %70 = sbr.rel (0) target = $region77
  $region76: #{outter_bae_forward.7} parent=0 // pred_region
    _
  $region77: #{outter_bae_forward.7} parent=0 // pred_fallthru
    _
  // Predicated region
  $region78: #{outter_bae_forward.7} parent=0 // pred_check
    _
  $region79: #{outter_bae_forward.7} parent=0 // pred_check_branch
    %72 = sbr.rel (0) target = $region81
  $region80: #{outter_bae_forward.7} parent=0 // pred_region
    _
  $region81: #{outter_bae_forward.7} parent=0 // pred_fallthru
    _
  // Predicated region
  $region82: #{outter_bae_forward.7} parent=0 // pred_check
    _
  $region83: #{outter_bae_forward.7} parent=0 // pred_check_branch
    %74 = sbr.rel (0) target = $region85
  $region84: #{outter_bae_forward.7} parent=0 // pred_region
    _
  $region85: #{outter_bae_forward.7} parent=0 // pred_fallthru
    _
  // Predicated region
  $region86: #{outter_bae_forward.7} parent=0 // pred_check
    _
  $region87: #{outter_bae_forward.7} parent=0 // pred_check_branch
    %76 = sbr.rel (0) target = $region89
  $region88: #{outter_bae_forward.7} parent=0 // pred_region
    _
  $region89: #{outter_bae_forward.7} parent=0 // pred_fallthru
    _
  // Predicated region
  $region90: #{outter_bae_forward.7} parent=0 // pred_check
    _
  $region91: #{outter_bae_forward.7} parent=0 // pred_check_branch
    %78 = sbr.rel (0) target = $region93
  $region92: #{outter_bae_forward.7} parent=0 // pred_region
    _
  $region93: #{outter_bae_forward.7} parent=0 // pred_fallthru
    _
  // Predicated region
  $region94: #{outter_bae_forward.7} parent=0 // pred_check
    _
  $region95: #{outter_bae_forward.7} parent=0 // pred_check_branch
    %80 = sbr.rel (0) target = $region97
  $region96: #{outter_bae_forward.7} parent=0 // pred_region
    _
  $region97: #{outter_bae_forward.7} parent=0 // pred_fallthru
    _
  // Predicated region
  $region98: #{outter_bae_forward.7} parent=0 // pred_check
    _
  $region99: #{outter_bae_forward.7} parent=0 // pred_check_branch
    %82 = sbr.rel (0) target = $region101
  $region100: #{outter_bae_forward.7} parent=0 // pred_region
    _
  $region101: #{outter_bae_forward.7} parent=0 // pred_fallthru
    _
  %v83 = vld [vmem:[%s0] sm:$0x3]
  %v84 = vld [vmem:[%s3] sm:$0xff]
  %v85 = vld [vmem:[%s3 + $0x8] sm:$0xff]
  %v86 = vld [vmem:[%s3 + $0x10] sm:$0xff]
  %v87 = vld [vmem:[%s3 + $0x18] sm:$0xff]
  %v88 = vld [vmem:[%s4] sm:$0x1]
  %v90 = vlaneseq
  %v91 = vshrl.u32 %v90, 7
  %v92 = vsub.s32 0, %v91
  %v93 = vrot.slane %v88, %v92
  %vm95 = vcmask 261120
  %v97 = vsel %vm95, %v83, 0
  %99 = vmatprep.subr.mxu0 0.0
  %100 = vmatpush1.msra.mxu0 %v84
  %101 = vmatprep.subr.mxu0 0.0
  %102 = vmatpush1.msra.mxu0 %v85
  %103 = vmatprep.subr.mxu0 0.0
  %104 = vmatpush1.msra.mxu0 %v86
  %105 = vmatprep.subr.mxu0 0.0
  %106 = vmatpush1.msra.mxu0 %v87
  %107 = vmatprep.subr.mxu0 0.0
  %108 = vmatpush1.msra.mxu0 0.0
  %109 = vmatprep.subr.mxu0 0.0
  %110 = vmatpush1.msra.mxu0 0.0
  %111 = vmatprep.subr.mxu0 0.0
  %112 = vmatpush1.msra.mxu0 0.0
  %113 = vmatprep.subr.mxu0 0.0
  %114 = vmatpush1.msra.mxu0 0.0
  %115 = vmatprep.subr.mxu0 0.0
  %116 = vmatpush1.msra.mxu0 0.0
  %117 = vmatprep.subr.mxu0 0.0
  %118 = vmatpush1.msra.mxu0 0.0
  %119 = vmatprep.subr.mxu0 0.0
  %120 = vmatpush1.msra.mxu0 0.0
  %121 = vmatprep.subr.mxu0 0.0
  %122 = vmatpush1.msra.mxu0 0.0
  %123 = vmatprep.subr.mxu0 0.0
  %124 = vmatpush1.msra.mxu0 0.0
  %125 = vmatprep.subr.mxu0 0.0
  %126 = vmatpush1.msra.mxu0 0.0
  %127 = vmatprep.subr.mxu0 0.0
  %128 = vmatpush1.msra.mxu0 0.0
  %129 = vmatprep.subr.mxu0 0.0
  %130 = vmatpush1.msra.mxu0 0.0
  %131 = vmatprep.subr.mxu0 0.0
  %132 = vmatpush1.msra.mxu0 0.0
  %133 = vmatprep.subr.mxu0 0.0
  %134 = vmatpush1.msra.mxu0 0.0
  %135 = vmatprep.subr.mxu0 0.0
  %136 = vmatpush1.msra.mxu0 0.0
  %137 = vmatprep.subr.mxu0 0.0
  %138 = vmatpush1.msra.mxu0 0.0
  %139 = vmatprep.subr.mxu0 0.0
  %140 = vmatpush1.msra.mxu0 0.0
  %141 = vmatprep.subr.mxu0 0.0
  %142 = vmatpush1.msra.mxu0 0.0
  %143 = vmatprep.subr.mxu0 0.0
  %144 = vmatpush1.msra.mxu0 0.0
  %145 = vmatprep.subr.mxu0 0.0
  %146 = vmatpush1.msra.mxu0 0.0
  %147 = vmatprep.subr.mxu0 0.0
  %148 = vmatpush1.msra.mxu0 0.0
  %149 = vmatprep.subr.mxu0 0.0
  %150 = vmatpush1.msra.mxu0 0.0
  %151 = vmatprep.subr.mxu0 0.0
  %152 = vmatpush1.msra.mxu0 0.0
  %153 = vmatprep.subr.mxu0 0.0
  %154 = vmatpush1.msra.mxu0 0.0
  %155 = vmatprep.subr.mxu0 0.0
  %156 = vmatpush1.msra.mxu0 0.0
  %157 = vmatprep.subr.mxu0 0.0
  %158 = vmatpush1.msra.mxu0 0.0
  %159 = vmatprep.subr.mxu0 0.0
  %160 = vmatpush1.msra.mxu0 0.0
  %161 = vmatprep.subr.mxu0 0.0
  %162 = vmatpush1.msra.mxu0 0.0
  %163 = vmatprep.mubr.f32.mxu0 0.0
  %164 = vmatmul.mubr.f32.gmra.mrb[0].mxu0 %v97
  %v165 = vpop.f32.mrb[0].mxu0
  %v166 = vadd.f32 %v93, %v165
  %v167 = vpop.f32.mrb[0].mxu0
  %168 = vdwg.mxu0
  %v169 = vmax.f32 %v166, 0.0
  %v170 = vld [vmem:[%s5] sm:$0xff]
  %v171 = vld [vmem:[%s5 + $0x8] sm:$0xff]
  %v172 = vld [vmem:[%s5 + $0x10] sm:$0xff]
  %v173 = vld [vmem:[%s5 + $0x18] sm:$0xff]
  %v174 = vld [vmem:[%s6] sm:$0x1]
  %v176 = vlaneseq
  %v177 = vshrl.u32 %v176, 7
  %v178 = vsub.s32 0, %v177
  %v179 = vrot.slane %v174, %v178
  %v182 = vsel %vm95, %v169, 0
  %184 = vmatprep.subr.mxu0 0.0
  %185 = vmatpush1.msra.mxu0 %v170
  %186 = vmatprep.subr.mxu0 0.0
  %187 = vmatpush1.msra.mxu0 %v171
  %188 = vmatprep.subr.mxu0 0.0
  %189 = vmatpush1.msra.mxu0 %v172
  %190 = vmatprep.subr.mxu0 0.0
  %191 = vmatpush1.msra.mxu0 %v173
  %192 = vmatprep.subr.mxu0 0.0
  %193 = vmatpush1.msra.mxu0 0.0
  %194 = vmatprep.subr.mxu0 0.0
  %195 = vmatpush1.msra.mxu0 0.0
  %196 = vmatprep.subr.mxu0 0.0
  %197 = vmatpush1.msra.mxu0 0.0
  %198 = vmatprep.subr.mxu0 0.0
  %199 = vmatpush1.msra.mxu0 0.0
  %200 = vmatprep.subr.mxu0 0.0
  %201 = vmatpush1.msra.mxu0 0.0
  %202 = vmatprep.subr.mxu0 0.0
  %203 = vmatpush1.msra.mxu0 0.0
  %204 = vmatprep.subr.mxu0 0.0
  %205 = vmatpush1.msra.mxu0 0.0
  %206 = vmatprep.subr.mxu0 0.0
  %207 = vmatpush1.msra.mxu0 0.0
  %208 = vmatprep.subr.mxu0 0.0
  %209 = vmatpush1.msra.mxu0 0.0
  %210 = vmatprep.subr.mxu0 0.0
  %211 = vmatpush1.msra.mxu0 0.0
  %212 = vmatprep.subr.mxu0 0.0
  %213 = vmatpush1.msra.mxu0 0.0
  %214 = vmatprep.subr.mxu0 0.0
  %215 = vmatpush1.msra.mxu0 0.0
  %216 = vmatprep.subr.mxu0 0.0
  %217 = vmatpush1.msra.mxu0 0.0
  %218 = vmatprep.subr.mxu0 0.0
  %219 = vmatpush1.msra.mxu0 0.0
  %220 = vmatprep.subr.mxu0 0.0
  %221 = vmatpush1.msra.mxu0 0.0
  %222 = vmatprep.subr.mxu0 0.0
  %223 = vmatpush1.msra.mxu0 0.0
  %224 = vmatprep.subr.mxu0 0.0
  %225 = vmatpush1.msra.mxu0 0.0
  %226 = vmatprep.subr.mxu0 0.0
  %227 = vmatpush1.msra.mxu0 0.0
  %228 = vmatprep.subr.mxu0 0.0
  %229 = vmatpush1.msra.mxu0 0.0
  %230 = vmatprep.subr.mxu0 0.0
  %231 = vmatpush1.msra.mxu0 0.0
  %232 = vmatprep.subr.mxu0 0.0
  %233 = vmatpush1.msra.mxu0 0.0
  %234 = vmatprep.subr.mxu0 0.0
  %235 = vmatpush1.msra.mxu0 0.0
  %236 = vmatprep.subr.mxu0 0.0
  %237 = vmatpush1.msra.mxu0 0.0
  %238 = vmatprep.subr.mxu0 0.0
  %239 = vmatpush1.msra.mxu0 0.0
  %240 = vmatprep.subr.mxu0 0.0
  %241 = vmatpush1.msra.mxu0 0.0
  %242 = vmatprep.subr.mxu0 0.0
  %243 = vmatpush1.msra.mxu0 0.0
  %244 = vmatprep.subr.mxu0 0.0
  %245 = vmatpush1.msra.mxu0 0.0
  %246 = vmatprep.subr.mxu0 0.0
  %247 = vmatpush1.msra.mxu0 0.0
  %248 = vmatprep.mubr.f32.mxu0 0.0
  %249 = vmatmul.mubr.f32.gmra.mrb[0].mxu0 %v182
  %v250 = vpop.f32.mrb[0].mxu0
  %v251 = vadd.f32 %v179, %v250
  %v252 = vpop.f32.mrb[0].mxu0
  %253 = vdwg.mxu0
  %v254 = vld [vmem:[%s7] sm:$0xff]
  %v255 = vld [vmem:[%s7 + $0x8] sm:$0xff]
  %v256 = vld [vmem:[%s8] sm:$0x1]
  %v258 = vlaneseq
  %v259 = vshrl.u32 %v258, 7
  %v260 = vsub.s32 0, %v259
  %v261 = vrot.slane %v256, %v260
  %vm263 = vcmask 130048
  %v265 = vsel %vm263, %v251, 0
  %267 = vmatprep.subr.mxu0 0.0
  %268 = vmatpush1.msra.mxu0 %v254
  %269 = vmatprep.subr.mxu0 0.0
  %270 = vmatpush1.msra.mxu0 %v255
  %271 = vmatprep.subr.mxu0 0.0
  %272 = vmatpush1.msra.mxu0 0.0
  %273 = vmatprep.subr.mxu0 0.0
  %274 = vmatpush1.msra.mxu0 0.0
  %275 = vmatprep.subr.mxu0 0.0
  %276 = vmatpush1.msra.mxu0 0.0
  %277 = vmatprep.subr.mxu0 0.0
  %278 = vmatpush1.msra.mxu0 0.0
  %279 = vmatprep.subr.mxu0 0.0
  %280 = vmatpush1.msra.mxu0 0.0
  %281 = vmatprep.subr.mxu0 0.0
  %282 = vmatpush1.msra.mxu0 0.0
  %283 = vmatprep.subr.mxu0 0.0
  %284 = vmatpush1.msra.mxu0 0.0
  %285 = vmatprep.subr.mxu0 0.0
  %286 = vmatpush1.msra.mxu0 0.0
  %287 = vmatprep.subr.mxu0 0.0
  %288 = vmatpush1.msra.mxu0 0.0
  %289 = vmatprep.subr.mxu0 0.0
  %290 = vmatpush1.msra.mxu0 0.0
  %291 = vmatprep.subr.mxu0 0.0
  %292 = vmatpush1.msra.mxu0 0.0
  %293 = vmatprep.subr.mxu0 0.0
  %294 = vmatpush1.msra.mxu0 0.0
  %295 = vmatprep.subr.mxu0 0.0
  %296 = vmatpush1.msra.mxu0 0.0
  %297 = vmatprep.subr.mxu0 0.0
  %298 = vmatpush1.msra.mxu0 0.0
  %299 = vmatprep.subr.mxu0 0.0
  %300 = vmatpush1.msra.mxu0 0.0
  %301 = vmatprep.subr.mxu0 0.0
  %302 = vmatpush1.msra.mxu0 0.0
  %303 = vmatprep.subr.mxu0 0.0
  %304 = vmatpush1.msra.mxu0 0.0
  %305 = vmatprep.subr.mxu0 0.0
  %306 = vmatpush1.msra.mxu0 0.0
  %307 = vmatprep.subr.mxu0 0.0
  %308 = vmatpush1.msra.mxu0 0.0
  %309 = vmatprep.subr.mxu0 0.0
  %310 = vmatpush1.msra.mxu0 0.0
  %311 = vmatprep.subr.mxu0 0.0
  %312 = vmatpush1.msra.mxu0 0.0
  %313 = vmatprep.subr.mxu0 0.0
  %314 = vmatpush1.msra.mxu0 0.0
  %315 = vmatprep.subr.mxu0 0.0
  %316 = vmatpush1.msra.mxu0 0.0
  %317 = vmatprep.subr.mxu0 0.0
  %318 = vmatpush1.msra.mxu0 0.0
  %319 = vmatprep.subr.mxu0 0.0
  %320 = vmatpush1.msra.mxu0 0.0
  %321 = vmatprep.subr.mxu0 0.0
  %322 = vmatpush1.msra.mxu0 0.0
  %323 = vmatprep.subr.mxu0 0.0
  %324 = vmatpush1.msra.mxu0 0.0
  %325 = vmatprep.subr.mxu0 0.0
  %326 = vmatpush1.msra.mxu0 0.0
  %327 = vmatprep.subr.mxu0 0.0
  %328 = vmatpush1.msra.mxu0 0.0
  %329 = vmatprep.subr.mxu0 0.0
  %330 = vmatpush1.msra.mxu0 0.0
  %331 = vmatprep.mubr.f32.mxu0 0.0
  %332 = vmatmul.mubr.f32.gmra.mrb[0].mxu0 %v265
  %v333 = vpop.f32.mrb[0].mxu0
  %v334 = vadd.f32 %v261, %v333
  %v335 = vpop.f32.mrb[0].mxu0
  %336 = vdwg.mxu0
  %v337 = vmax.f32 %v334, 0.0
  %v338 = vld [vmem:[%s9] sm:$0xff]
  %v339 = vld [vmem:[%s9 + $0x8] sm:$0xff]
  %v340 = vld [vmem:[%s9 + $0x10] sm:$0xff]
  %v341 = vld [vmem:[%s9 + $0x18] sm:$0xff]
  %v342 = vld [vmem:[%s9 + $0x20] sm:$0xff]
  %v343 = vld [vmem:[%s9 + $0x28] sm:$0xff]
  %v344 = vld [vmem:[%s9 + $0x30] sm:$0xff]
  %v345 = vld [vmem:[%s9 + $0x38] sm:$0xff]
  %v346 = vld [vmem:[%s9 + $0x40] sm:$0xff]
  %v347 = vld [vmem:[%s9 + $0x48] sm:$0xff]
  %v348 = vld [vmem:[%s9 + $0x50] sm:$0xff]
  %v349 = vld [vmem:[%s9 + $0x58] sm:$0xff]
  %v350 = vld [vmem:[%s9 + $0x60] sm:$0xff]
  %v351 = vld [vmem:[%s9 + $0x68] sm:$0xff]
  %v352 = vld [vmem:[%s9 + $0x70] sm:$0xff]
  %v353 = vld [vmem:[%s9 + $0x78] sm:$0xff]
  %v354 = vld [vmem:[%s9 + $0x80] sm:$0xff]
  %v355 = vld [vmem:[%s9 + $0x88] sm:$0xff]
  %v356 = vld [vmem:[%s9 + $0x90] sm:$0xff]
  %v357 = vld [vmem:[%s9 + $0x98] sm:$0xff]
  %v358 = vld [vmem:[%s9 + $0xa0] sm:$0xff]
  %v359 = vld [vmem:[%s9 + $0xa8] sm:$0xff]
  %v360 = vld [vmem:[%s9 + $0xb0] sm:$0xff]
  %v361 = vld [vmem:[%s9 + $0xb8] sm:$0xff]
  %v362 = vld [vmem:[%s9 + $0xc0] sm:$0xff]
  %v363 = vld [vmem:[%s9 + $0xc8] sm:$0xff]
  %v364 = vld [vmem:[%s9 + $0xd0] sm:$0xff]
  %v365 = vld [vmem:[%s9 + $0xd8] sm:$0xff]
  %v366 = vld [vmem:[%s9 + $0xe0] sm:$0xff]
  %v367 = vld [vmem:[%s9 + $0xe8] sm:$0xff]
  %v368 = vld [vmem:[%s9 + $0xf0] sm:$0xff]
  %v369 = vld [vmem:[%s9 + $0xf8] sm:$0xff]
  %v370 = vld [vmem:[%s10] sm:$0xff]
  %v372 = vlaneseq
  %v373 = vshrl.u32 %v372, 7
  %v374 = vsub.s32 0, %v373
  %v375 = vrot.slane %v370, %v374
  %v376 = vlaneseq
  %v377 = vshrl.u32 %v376, 7
  %v378 = vsub.s32 1, %v377
  %v379 = vrot.slane %v370, %v378
  %v380 = vlaneseq
  %v381 = vshrl.u32 %v380, 7
  %v382 = vsub.s32 2, %v381
  %v383 = vrot.slane %v370, %v382
  %v384 = vlaneseq
  %v385 = vshrl.u32 %v384, 7
  %v386 = vsub.s32 3, %v385
  %v387 = vrot.slane %v370, %v386
  %v388 = vlaneseq
  %v389 = vshrl.u32 %v388, 7
  %v390 = vsub.s32 4, %v389
  %v391 = vrot.slane %v370, %v390
  %v392 = vlaneseq
  %v393 = vshrl.u32 %v392, 7
  %v394 = vsub.s32 5, %v393
  %v395 = vrot.slane %v370, %v394
  %v396 = vlaneseq
  %v397 = vshrl.u32 %v396, 7
  %v398 = vsub.s32 6, %v397
  %v399 = vrot.slane %v370, %v398
  %v400 = vlaneseq
  %v401 = vshrl.u32 %v400, 7
  %v402 = vsub.s32 7, %v401
  %v403 = vrot.slane %v370, %v402
  %v413 = vsel %vm95, %v337, 0
  %415 = vmatprep.subr.mxu0 %v339
  %416 = vmatpush1.msra.mxu0 %v338
  %417 = vmatprep.subr.mxu0 %v347
  %418 = vmatpush1.msra.mxu0 %v346
  %419 = vmatprep.subr.mxu0 %v355
  %420 = vmatpush1.msra.mxu0 %v354
  %421 = vmatprep.subr.mxu0 %v363
  %422 = vmatpush1.msra.mxu0 %v362
  %423 = vmatprep.subr.mxu0 0.0
  %424 = vmatpush1.msra.mxu0 0.0
  %425 = vmatprep.subr.mxu0 0.0
  %426 = vmatpush1.msra.mxu0 0.0
  %427 = vmatprep.subr.mxu0 0.0
  %428 = vmatpush1.msra.mxu0 0.0
  %429 = vmatprep.subr.mxu0 0.0
  %430 = vmatpush1.msra.mxu0 0.0
  %431 = vmatprep.subr.mxu0 0.0
  %432 = vmatpush1.msra.mxu0 0.0
  %433 = vmatprep.subr.mxu0 0.0
  %434 = vmatpush1.msra.mxu0 0.0
  %435 = vmatprep.subr.mxu0 0.0
  %436 = vmatpush1.msra.mxu0 0.0
  %437 = vmatprep.subr.mxu0 0.0
  %438 = vmatpush1.msra.mxu0 0.0
  %439 = vmatprep.subr.mxu0 0.0
  %440 = vmatpush1.msra.mxu0 0.0
  %441 = vmatprep.subr.mxu0 0.0
  %442 = vmatpush1.msra.mxu0 0.0
  %443 = vmatprep.subr.mxu0 0.0
  %444 = vmatpush1.msra.mxu0 0.0
  %445 = vmatprep.subr.mxu0 0.0
  %446 = vmatpush1.msra.mxu0 0.0
  %447 = vmatprep.subr.mxu0 0.0
  %448 = vmatpush1.msra.mxu0 0.0
  %449 = vmatprep.subr.mxu0 0.0
  %450 = vmatpush1.msra.mxu0 0.0
  %451 = vmatprep.subr.mxu0 0.0
  %452 = vmatpush1.msra.mxu0 0.0
  %453 = vmatprep.subr.mxu0 0.0
  %454 = vmatpush1.msra.mxu0 0.0
  %455 = vmatprep.subr.mxu0 0.0
  %456 = vmatpush1.msra.mxu0 0.0
  %457 = vmatprep.subr.mxu0 0.0
  %458 = vmatpush1.msra.mxu0 0.0
  %459 = vmatprep.subr.mxu0 0.0
  %460 = vmatpush1.msra.mxu0 0.0
  %461 = vmatprep.subr.mxu0 0.0
  %462 = vmatpush1.msra.mxu0 0.0
  %463 = vmatprep.subr.mxu0 0.0
  %464 = vmatpush1.msra.mxu0 0.0
  %465 = vmatprep.subr.mxu0 0.0
  %466 = vmatpush1.msra.mxu0 0.0
  %467 = vmatprep.subr.mxu0 0.0
  %468 = vmatpush1.msra.mxu0 0.0
  %469 = vmatprep.subr.mxu0 0.0
  %470 = vmatpush1.msra.mxu0 0.0
  %471 = vmatprep.subr.mxu0 0.0
  %472 = vmatpush1.msra.mxu0 0.0
  %473 = vmatprep.subr.mxu0 0.0
  %474 = vmatpush1.msra.mxu0 0.0
  %475 = vmatprep.subr.mxu0 0.0
  %476 = vmatpush1.msra.mxu0 0.0
  %477 = vmatprep.subr.mxu0 0.0
  %478 = vmatpush1.msra.mxu0 0.0
  %479 = vmatprep.mubr.f32.mxu0 0.0
  %480 = vmatmul.mubr.f32.gmra.mrb[0].mxu0 %v413
  %v481 = vpop.f32.mrb[0].mxu0
  %v482 = vadd.f32 %v375, %v481
  %v483 = vpop.f32.mrb[0].mxu0
  %v484 = vadd.f32 %v379, %v483
  %485 = vdwg.mxu0
  %486 = vmatprep.subr.mxu0 %v341
  %487 = vmatpush1.msra.mxu0 %v340
  %488 = vmatprep.subr.mxu0 %v349
  %489 = vmatpush1.msra.mxu0 %v348
  %490 = vmatprep.subr.mxu0 %v357
  %491 = vmatpush1.msra.mxu0 %v356
  %492 = vmatprep.subr.mxu0 %v365
  %493 = vmatpush1.msra.mxu0 %v364
  %494 = vmatprep.subr.mxu0 0.0
  %495 = vmatpush1.msra.mxu0 0.0
  %496 = vmatprep.subr.mxu0 0.0
  %497 = vmatpush1.msra.mxu0 0.0
  %498 = vmatprep.subr.mxu0 0.0
  %499 = vmatpush1.msra.mxu0 0.0
  %500 = vmatprep.subr.mxu0 0.0
  %501 = vmatpush1.msra.mxu0 0.0
  %502 = vmatprep.subr.mxu0 0.0
  %503 = vmatpush1.msra.mxu0 0.0
  %504 = vmatprep.subr.mxu0 0.0
  %505 = vmatpush1.msra.mxu0 0.0
  %506 = vmatprep.subr.mxu0 0.0
  %507 = vmatpush1.msra.mxu0 0.0
  %508 = vmatprep.subr.mxu0 0.0
  %509 = vmatpush1.msra.mxu0 0.0
  %510 = vmatprep.subr.mxu0 0.0
  %511 = vmatpush1.msra.mxu0 0.0
  %512 = vmatprep.subr.mxu0 0.0
  %513 = vmatpush1.msra.mxu0 0.0
  %514 = vmatprep.subr.mxu0 0.0
  %515 = vmatpush1.msra.mxu0 0.0
  %516 = vmatprep.subr.mxu0 0.0
  %517 = vmatpush1.msra.mxu0 0.0
  %518 = vmatprep.subr.mxu0 0.0
  %519 = vmatpush1.msra.mxu0 0.0
  %520 = vmatprep.subr.mxu0 0.0
  %521 = vmatpush1.msra.mxu0 0.0
  %522 = vmatprep.subr.mxu0 0.0
  %523 = vmatpush1.msra.mxu0 0.0
  %524 = vmatprep.subr.mxu0 0.0
  %525 = vmatpush1.msra.mxu0 0.0
  %526 = vmatprep.subr.mxu0 0.0
  %527 = vmatpush1.msra.mxu0 0.0
  %528 = vmatprep.subr.mxu0 0.0
  %529 = vmatpush1.msra.mxu0 0.0
  %530 = vmatprep.subr.mxu0 0.0
  %531 = vmatpush1.msra.mxu0 0.0
  %532 = vmatprep.subr.mxu0 0.0
  %533 = vmatpush1.msra.mxu0 0.0
  %534 = vmatprep.subr.mxu0 0.0
  %535 = vmatpush1.msra.mxu0 0.0
  %536 = vmatprep.subr.mxu0 0.0
  %537 = vmatpush1.msra.mxu0 0.0
  %538 = vmatprep.subr.mxu0 0.0
  %539 = vmatpush1.msra.mxu0 0.0
  %540 = vmatprep.subr.mxu0 0.0
  %541 = vmatpush1.msra.mxu0 0.0
  %542 = vmatprep.subr.mxu0 0.0
  %543 = vmatpush1.msra.mxu0 0.0
  %544 = vmatprep.subr.mxu0 0.0
  %545 = vmatpush1.msra.mxu0 0.0
  %546 = vmatprep.subr.mxu0 0.0
  %547 = vmatpush1.msra.mxu0 0.0
  %548 = vmatprep.subr.mxu0 0.0
  %549 = vmatpush1.msra.mxu0 0.0
  %550 = vmatprep.mubr.f32.mxu0 0.0
  %551 = vmatmul.mubr.f32.gmra.mrb[0].mxu0 %v413
  %v552 = vpop.f32.mrb[0].mxu0
  %v553 = vadd.f32 %v383, %v552
  %v554 = vpop.f32.mrb[0].mxu0
  %v555 = vadd.f32 %v387, %v554
  %556 = vdwg.mxu0
  %557 = vmatprep.subr.mxu0 %v343
  %558 = vmatpush1.msra.mxu0 %v342
  %559 = vmatprep.subr.mxu0 %v351
  %560 = vmatpush1.msra.mxu0 %v350
  %561 = vmatprep.subr.mxu0 %v359
  %562 = vmatpush1.msra.mxu0 %v358
  %563 = vmatprep.subr.mxu0 %v367
  %564 = vmatpush1.msra.mxu0 %v366
  %565 = vmatprep.subr.mxu0 0.0
  %566 = vmatpush1.msra.mxu0 0.0
  %567 = vmatprep.subr.mxu0 0.0
  %568 = vmatpush1.msra.mxu0 0.0
  %569 = vmatprep.subr.mxu0 0.0
  %570 = vmatpush1.msra.mxu0 0.0
  %571 = vmatprep.subr.mxu0 0.0
  %572 = vmatpush1.msra.mxu0 0.0
  %573 = vmatprep.subr.mxu0 0.0
  %574 = vmatpush1.msra.mxu0 0.0
  %575 = vmatprep.subr.mxu0 0.0
  %576 = vmatpush1.msra.mxu0 0.0
  %577 = vmatprep.subr.mxu0 0.0
  %578 = vmatpush1.msra.mxu0 0.0
  %579 = vmatprep.subr.mxu0 0.0
  %580 = vmatpush1.msra.mxu0 0.0
  %581 = vmatprep.subr.mxu0 0.0
  %582 = vmatpush1.msra.mxu0 0.0
  %583 = vmatprep.subr.mxu0 0.0
  %584 = vmatpush1.msra.mxu0 0.0
  %585 = vmatprep.subr.mxu0 0.0
  %586 = vmatpush1.msra.mxu0 0.0
  %587 = vmatprep.subr.mxu0 0.0
  %588 = vmatpush1.msra.mxu0 0.0
  %589 = vmatprep.subr.mxu0 0.0
  %590 = vmatpush1.msra.mxu0 0.0
  %591 = vmatprep.subr.mxu0 0.0
  %592 = vmatpush1.msra.mxu0 0.0
  %593 = vmatprep.subr.mxu0 0.0
  %594 = vmatpush1.msra.mxu0 0.0
  %595 = vmatprep.subr.mxu0 0.0
  %596 = vmatpush1.msra.mxu0 0.0
  %597 = vmatprep.subr.mxu0 0.0
  %598 = vmatpush1.msra.mxu0 0.0
  %599 = vmatprep.subr.mxu0 0.0
  %600 = vmatpush1.msra.mxu0 0.0
  %601 = vmatprep.subr.mxu0 0.0
  %602 = vmatpush1.msra.mxu0 0.0
  %603 = vmatprep.subr.mxu0 0.0
  %604 = vmatpush1.msra.mxu0 0.0
  %605 = vmatprep.subr.mxu0 0.0
  %606 = vmatpush1.msra.mxu0 0.0
  %607 = vmatprep.subr.mxu0 0.0
  %608 = vmatpush1.msra.mxu0 0.0
  %609 = vmatprep.subr.mxu0 0.0
  %610 = vmatpush1.msra.mxu0 0.0
  %611 = vmatprep.subr.mxu0 0.0
  %612 = vmatpush1.msra.mxu0 0.0
  %613 = vmatprep.subr.mxu0 0.0
  %614 = vmatpush1.msra.mxu0 0.0
  %615 = vmatprep.subr.mxu0 0.0
  %616 = vmatpush1.msra.mxu0 0.0
  %617 = vmatprep.subr.mxu0 0.0
  %618 = vmatpush1.msra.mxu0 0.0
  %619 = vmatprep.subr.mxu0 0.0
  %620 = vmatpush1.msra.mxu0 0.0
  %621 = vmatprep.mubr.f32.mxu0 0.0
  %622 = vmatmul.mubr.f32.gmra.mrb[0].mxu0 %v413
  %v623 = vpop.f32.mrb[0].mxu0
  %v624 = vadd.f32 %v391, %v623
  %v625 = vpop.f32.mrb[0].mxu0
  %v626 = vadd.f32 %v395, %v625
  %627 = vdwg.mxu0
  %628 = vmatprep.subr.mxu0 %v345
  %629 = vmatpush1.msra.mxu0 %v344
  %630 = vmatprep.subr.mxu0 %v353
  %631 = vmatpush1.msra.mxu0 %v352
  %632 = vmatprep.subr.mxu0 %v361
  %633 = vmatpush1.msra.mxu0 %v360
  %634 = vmatprep.subr.mxu0 %v369
  %635 = vmatpush1.msra.mxu0 %v368
  %636 = vmatprep.subr.mxu0 0.0
  %637 = vmatpush1.msra.mxu0 0.0
  %638 = vmatprep.subr.mxu0 0.0
  %639 = vmatpush1.msra.mxu0 0.0
  %640 = vmatprep.subr.mxu0 0.0
  %641 = vmatpush1.msra.mxu0 0.0
  %642 = vmatprep.subr.mxu0 0.0
  %643 = vmatpush1.msra.mxu0 0.0
  %644 = vmatprep.subr.mxu0 0.0
  %645 = vmatpush1.msra.mxu0 0.0
  %646 = vmatprep.subr.mxu0 0.0
  %647 = vmatpush1.msra.mxu0 0.0
  %648 = vmatprep.subr.mxu0 0.0
  %649 = vmatpush1.msra.mxu0 0.0
  %650 = vmatprep.subr.mxu0 0.0
  %651 = vmatpush1.msra.mxu0 0.0
  %652 = vmatprep.subr.mxu0 0.0
  %653 = vmatpush1.msra.mxu0 0.0
  %654 = vmatprep.subr.mxu0 0.0
  %655 = vmatpush1.msra.mxu0 0.0
  %656 = vmatprep.subr.mxu0 0.0
  %657 = vmatpush1.msra.mxu0 0.0
  %658 = vmatprep.subr.mxu0 0.0
  %659 = vmatpush1.msra.mxu0 0.0
  %660 = vmatprep.subr.mxu0 0.0
  %661 = vmatpush1.msra.mxu0 0.0
  %662 = vmatprep.subr.mxu0 0.0
  %663 = vmatpush1.msra.mxu0 0.0
  %664 = vmatprep.subr.mxu0 0.0
  %665 = vmatpush1.msra.mxu0 0.0
  %666 = vmatprep.subr.mxu0 0.0
  %667 = vmatpush1.msra.mxu0 0.0
  %668 = vmatprep.subr.mxu0 0.0
  %669 = vmatpush1.msra.mxu0 0.0
  %670 = vmatprep.subr.mxu0 0.0
  %671 = vmatpush1.msra.mxu0 0.0
  %672 = vmatprep.subr.mxu0 0.0
  %673 = vmatpush1.msra.mxu0 0.0
  %674 = vmatprep.subr.mxu0 0.0
  %675 = vmatpush1.msra.mxu0 0.0
  %676 = vmatprep.subr.mxu0 0.0
  %677 = vmatpush1.msra.mxu0 0.0
  %678 = vmatprep.subr.mxu0 0.0
  %679 = vmatpush1.msra.mxu0 0.0
  %680 = vmatprep.subr.mxu0 0.0
  %681 = vmatpush1.msra.mxu0 0.0
  %682 = vmatprep.subr.mxu0 0.0
  %683 = vmatpush1.msra.mxu0 0.0
  %684 = vmatprep.subr.mxu0 0.0
  %685 = vmatpush1.msra.mxu0 0.0
  %686 = vmatprep.subr.mxu0 0.0
  %687 = vmatpush1.msra.mxu0 0.0
  %688 = vmatprep.subr.mxu0 0.0
  %689 = vmatpush1.msra.mxu0 0.0
  %690 = vmatprep.subr.mxu0 0.0
  %691 = vmatpush1.msra.mxu0 0.0
  %692 = vmatprep.mubr.f32.mxu0 0.0
  %693 = vmatmul.mubr.f32.gmra.mrb[0].mxu0 %v413
  %v694 = vpop.f32.mrb[0].mxu0
  %v695 = vadd.f32 %v399, %v694
  %v696 = vpop.f32.mrb[0].mxu0
  %v697 = vadd.f32 %v403, %v696
  %698 = vdwg.mxu0
  %v699 = vld [vmem:[%s11] sm:$0xff]
  %v700 = vld [vmem:[%s11 + $0x8] sm:$0xff]
  %v701 = vld [vmem:[%s11 + $0x10] sm:$0xff]
  %v702 = vld [vmem:[%s11 + $0x18] sm:$0xff]
  %v703 = vld [vmem:[%s12] sm:$0x1]
  %v705 = vlaneseq
  %v706 = vshrl.u32 %v705, 7
  %v707 = vsub.s32 0, %v706
  %v708 = vrot.slane %v703, %v707
  %710 = vmatprep.subr.mxu0 0.0
  %711 = vmatpush1.msra.mxu0 %v699
  %712 = vmatprep.subr.mxu0 0.0
  %713 = vmatpush1.msra.mxu0 %v700
  %714 = vmatprep.subr.mxu0 0.0
  %715 = vmatpush1.msra.mxu0 %v701
  %716 = vmatprep.subr.mxu0 0.0
  %717 = vmatpush1.msra.mxu0 %v702
  %718 = vmatprep.subr.mxu0 0.0
  %719 = vmatpush1.msra.mxu0 0.0
  %720 = vmatprep.subr.mxu0 0.0
  %721 = vmatpush1.msra.mxu0 0.0
  %722 = vmatprep.subr.mxu0 0.0
  %723 = vmatpush1.msra.mxu0 0.0
  %724 = vmatprep.subr.mxu0 0.0
  %725 = vmatpush1.msra.mxu0 0.0
  %726 = vmatprep.subr.mxu0 0.0
  %727 = vmatpush1.msra.mxu0 0.0
  %728 = vmatprep.subr.mxu0 0.0
  %729 = vmatpush1.msra.mxu0 0.0
  %730 = vmatprep.subr.mxu0 0.0
  %731 = vmatpush1.msra.mxu0 0.0
  %732 = vmatprep.subr.mxu0 0.0
  %733 = vmatpush1.msra.mxu0 0.0
  %734 = vmatprep.subr.mxu0 0.0
  %735 = vmatpush1.msra.mxu0 0.0
  %736 = vmatprep.subr.mxu0 0.0
  %737 = vmatpush1.msra.mxu0 0.0
  %738 = vmatprep.subr.mxu0 0.0
  %739 = vmatpush1.msra.mxu0 0.0
  %740 = vmatprep.subr.mxu0 0.0
  %741 = vmatpush1.msra.mxu0 0.0
  %742 = vmatprep.subr.mxu0 0.0
  %743 = vmatpush1.msra.mxu0 0.0
  %744 = vmatprep.subr.mxu0 0.0
  %745 = vmatpush1.msra.mxu0 0.0
  %746 = vmatprep.subr.mxu0 0.0
  %747 = vmatpush1.msra.mxu0 0.0
  %748 = vmatprep.subr.mxu0 0.0
  %749 = vmatpush1.msra.mxu0 0.0
  %750 = vmatprep.subr.mxu0 0.0
  %751 = vmatpush1.msra.mxu0 0.0
  %752 = vmatprep.subr.mxu0 0.0
  %753 = vmatpush1.msra.mxu0 0.0
  %754 = vmatprep.subr.mxu0 0.0
  %755 = vmatpush1.msra.mxu0 0.0
  %756 = vmatprep.subr.mxu0 0.0
  %757 = vmatpush1.msra.mxu0 0.0
  %758 = vmatprep.subr.mxu0 0.0
  %759 = vmatpush1.msra.mxu0 0.0
  %760 = vmatprep.subr.mxu0 0.0
  %761 = vmatpush1.msra.mxu0 0.0
  %762 = vmatprep.subr.mxu0 0.0
  %763 = vmatpush1.msra.mxu0 0.0
  %764 = vmatprep.subr.mxu0 0.0
  %765 = vmatpush1.msra.mxu0 0.0
  %766 = vmatprep.subr.mxu0 0.0
  %767 = vmatpush1.msra.mxu0 0.0
  %768 = vmatprep.subr.mxu0 0.0
  %769 = vmatpush1.msra.mxu0 0.0
  %770 = vmatprep.subr.mxu0 0.0
  %771 = vmatpush1.msra.mxu0 0.0
  %772 = vmatprep.subr.mxu0 0.0
  %773 = vmatpush1.msra.mxu0 0.0
  %774 = vmatprep.mubr.f32.mxu0 0.0
  %775 = vmatmul.mubr.f32.gmra.mrb[0].mxu0 %v413
  %v776 = vpop.f32.mrb[0].mxu0
  %v777 = vadd.f32 %v708, %v776
  %v778 = vpop.f32.mrb[0].mxu0
  %779 = vdwg.mxu0
  %v780 = vld [vmem:[%s1] sm:$0x3]
  %v781 = vld [vmem:[%s2] sm:$0x3]
  %v782 = vld [vmem:[%s13] sm:$0xff]
  %v783 = vld [vmem:[%s13 + $0x8] sm:$0xff]
  %v784 = vld [vmem:[%s13 + $0x10] sm:$0xff]
  %v785 = vld [vmem:[%s13 + $0x18] sm:$0xff]
  %v786 = vld [vmem:[%s13 + $0x20] sm:$0xff]
  %v787 = vld [vmem:[%s13 + $0x28] sm:$0xff]
  %v788 = vld [vmem:[%s13 + $0x30] sm:$0xff]
  %v789 = vld [vmem:[%s13 + $0x38] sm:$0xff]
  %v790 = vld [vmem:[%s13 + $0x40] sm:$0xff]
  %v791 = vld [vmem:[%s13 + $0x48] sm:$0xff]
  %v792 = vld [vmem:[%s13 + $0x50] sm:$0xff]
  %v793 = vld [vmem:[%s13 + $0x58] sm:$0xff]
  %v794 = vld [vmem:[%s13 + $0x60] sm:$0xff]
  %v795 = vld [vmem:[%s13 + $0x68] sm:$0xff]
  %v796 = vld [vmem:[%s13 + $0x70] sm:$0xff]
  %v797 = vld [vmem:[%s13 + $0x78] sm:$0xff]
  %v798 = vld [vmem:[%s13 + $0x80] sm:$0xff]
  %v799 = vld [vmem:[%s13 + $0x88] sm:$0xff]
  %v800 = vld [vmem:[%s13 + $0x90] sm:$0xff]
  %v801 = vld [vmem:[%s13 + $0x98] sm:$0xff]
  %v802 = vld [vmem:[%s13 + $0xa0] sm:$0xff]
  %v803 = vld [vmem:[%s13 + $0xa8] sm:$0xff]
  %v804 = vld [vmem:[%s13 + $0xb0] sm:$0xff]
  %v805 = vld [vmem:[%s13 + $0xb8] sm:$0xff]
  %v806 = vld [vmem:[%s13 + $0xc0] sm:$0xff]
  %v807 = vld [vmem:[%s13 + $0xc8] sm:$0xff]
  %v808 = vld [vmem:[%s13 + $0xd0] sm:$0xff]
  %v809 = vld [vmem:[%s13 + $0xd8] sm:$0xff]
  %v810 = vld [vmem:[%s13 + $0xe0] sm:$0xff]
  %v811 = vld [vmem:[%s13 + $0xe8] sm:$0xff]
  %v812 = vld [vmem:[%s13 + $0xf0] sm:$0xff]
  %v813 = vld [vmem:[%s13 + $0xf8] sm:$0xff]
  %v814 = vld [vmem:[%s13 + $0x100] sm:$0xff]
  %v815 = vld [vmem:[%s13 + $0x108] sm:$0xff]
  %v816 = vld [vmem:[%s13 + $0x110] sm:$0xff]
  %v817 = vld [vmem:[%s13 + $0x118] sm:$0xff]
  %v818 = vld [vmem:[%s14] sm:$0xff]
  %v819 = vld [vmem:[%s14 + $0x8] sm:$0x1]
  %v822 = vlaneseq
  %v823 = vshrl.u32 %v822, 7
  %v824 = vsub.s32 0, %v823
  %v825 = vrot.slane %v818, %v824
  %v826 = vlaneseq
  %v827 = vshrl.u32 %v826, 7
  %v828 = vsub.s32 1, %v827
  %v829 = vrot.slane %v818, %v828
  %v830 = vlaneseq
  %v831 = vshrl.u32 %v830, 7
  %v832 = vsub.s32 2, %v831
  %v833 = vrot.slane %v818, %v832
  %v834 = vlaneseq
  %v835 = vshrl.u32 %v834, 7
  %v836 = vsub.s32 3, %v835
  %v837 = vrot.slane %v818, %v836
  %v838 = vlaneseq
  %v839 = vshrl.u32 %v838, 7
  %v840 = vsub.s32 4, %v839
  %v841 = vrot.slane %v818, %v840
  %v842 = vlaneseq
  %v843 = vshrl.u32 %v842, 7
  %v844 = vsub.s32 5, %v843
  %v845 = vrot.slane %v818, %v844
  %v846 = vlaneseq
  %v847 = vshrl.u32 %v846, 7
  %v848 = vsub.s32 6, %v847
  %v849 = vrot.slane %v818, %v848
  %v850 = vlaneseq
  %v851 = vshrl.u32 %v850, 7
  %v852 = vsub.s32 7, %v851
  %v853 = vrot.slane %v818, %v852
  %v854 = vlaneseq
  %v855 = vshrl.u32 %v854, 7
  %v856 = vsub.s32 0, %v855
  %v857 = vrot.slane %v819, %v856
  %v868 = vsel %vm95, %v780, 0
  %870 = vmatprep.subr.mxu0 %v783
  %871 = vmatpush1.msra.mxu0 %v782
  %872 = vmatprep.subr.mxu0 %v792
  %873 = vmatpush1.msra.mxu0 %v791
  %874 = vmatprep.subr.mxu0 %v801
  %875 = vmatpush1.msra.mxu0 %v800
  %876 = vmatprep.subr.mxu0 %v810
  %877 = vmatpush1.msra.mxu0 %v809
  %878 = vmatprep.subr.mxu0 0.0
  %879 = vmatpush1.msra.mxu0 0.0
  %880 = vmatprep.subr.mxu0 0.0
  %881 = vmatpush1.msra.mxu0 0.0
  %882 = vmatprep.subr.mxu0 0.0
  %883 = vmatpush1.msra.mxu0 0.0
  %884 = vmatprep.subr.mxu0 0.0
  %885 = vmatpush1.msra.mxu0 0.0
  %886 = vmatprep.subr.mxu0 0.0
  %887 = vmatpush1.msra.mxu0 0.0
  %888 = vmatprep.subr.mxu0 0.0
  %889 = vmatpush1.msra.mxu0 0.0
  %890 = vmatprep.subr.mxu0 0.0
  %891 = vmatpush1.msra.mxu0 0.0
  %892 = vmatprep.subr.mxu0 0.0
  %893 = vmatpush1.msra.mxu0 0.0
  %894 = vmatprep.subr.mxu0 0.0
  %895 = vmatpush1.msra.mxu0 0.0
  %896 = vmatprep.subr.mxu0 0.0
  %897 = vmatpush1.msra.mxu0 0.0
  %898 = vmatprep.subr.mxu0 0.0
  %899 = vmatpush1.msra.mxu0 0.0
  %900 = vmatprep.subr.mxu0 0.0
  %901 = vmatpush1.msra.mxu0 0.0
  %902 = vmatprep.subr.mxu0 0.0
  %903 = vmatpush1.msra.mxu0 0.0
  %904 = vmatprep.subr.mxu0 0.0
  %905 = vmatpush1.msra.mxu0 0.0
  %906 = vmatprep.subr.mxu0 0.0
  %907 = vmatpush1.msra.mxu0 0.0
  %908 = vmatprep.subr.mxu0 0.0
  %909 = vmatpush1.msra.mxu0 0.0
  %910 = vmatprep.subr.mxu0 0.0
  %911 = vmatpush1.msra.mxu0 0.0
  %912 = vmatprep.subr.mxu0 0.0
  %913 = vmatpush1.msra.mxu0 0.0
  %914 = vmatprep.subr.mxu0 0.0
  %915 = vmatpush1.msra.mxu0 0.0
  %916 = vmatprep.subr.mxu0 0.0
  %917 = vmatpush1.msra.mxu0 0.0
  %918 = vmatprep.subr.mxu0 0.0
  %919 = vmatpush1.msra.mxu0 0.0
  %920 = vmatprep.subr.mxu0 0.0
  %921 = vmatpush1.msra.mxu0 0.0
  %922 = vmatprep.subr.mxu0 0.0
  %923 = vmatpush1.msra.mxu0 0.0
  %924 = vmatprep.subr.mxu0 0.0
  %925 = vmatpush1.msra.mxu0 0.0
  %926 = vmatprep.subr.mxu0 0.0
  %927 = vmatpush1.msra.mxu0 0.0
  %928 = vmatprep.subr.mxu0 0.0
  %929 = vmatpush1.msra.mxu0 0.0
  %930 = vmatprep.subr.mxu0 0.0
  %931 = vmatpush1.msra.mxu0 0.0
  %932 = vmatprep.subr.mxu0 0.0
  %933 = vmatpush1.msra.mxu0 0.0
  %934 = vmatprep.mubr.f32.mxu0 0.0
  %935 = vmatmul.mubr.f32.gmra.mrb[0].mxu0 %v868
  %v936 = vpop.f32.mrb[0].mxu0
  %v937 = vadd.f32 %v825, %v936
  %v938 = vpop.f32.mrb[0].mxu0
  %v939 = vadd.f32 %v829, %v938
  %940 = vdwg.mxu0
  %941 = vmatprep.subr.mxu0 %v785
  %942 = vmatpush1.msra.mxu0 %v784
  %943 = vmatprep.subr.mxu0 %v794
  %944 = vmatpush1.msra.mxu0 %v793
  %945 = vmatprep.subr.mxu0 %v803
  %946 = vmatpush1.msra.mxu0 %v802
  %947 = vmatprep.subr.mxu0 %v812
  %948 = vmatpush1.msra.mxu0 %v811
  %949 = vmatprep.subr.mxu0 0.0
  %950 = vmatpush1.msra.mxu0 0.0
  %951 = vmatprep.subr.mxu0 0.0
  %952 = vmatpush1.msra.mxu0 0.0
  %953 = vmatprep.subr.mxu0 0.0
  %954 = vmatpush1.msra.mxu0 0.0
  %955 = vmatprep.subr.mxu0 0.0
  %956 = vmatpush1.msra.mxu0 0.0
  %957 = vmatprep.subr.mxu0 0.0
  %958 = vmatpush1.msra.mxu0 0.0
  %959 = vmatprep.subr.mxu0 0.0
  %960 = vmatpush1.msra.mxu0 0.0
  %961 = vmatprep.subr.mxu0 0.0
  %962 = vmatpush1.msra.mxu0 0.0
  %963 = vmatprep.subr.mxu0 0.0
  %964 = vmatpush1.msra.mxu0 0.0
  %965 = vmatprep.subr.mxu0 0.0
  %966 = vmatpush1.msra.mxu0 0.0
  %967 = vmatprep.subr.mxu0 0.0
  %968 = vmatpush1.msra.mxu0 0.0
  %969 = vmatprep.subr.mxu0 0.0
  %970 = vmatpush1.msra.mxu0 0.0
  %971 = vmatprep.subr.mxu0 0.0
  %972 = vmatpush1.msra.mxu0 0.0
  %973 = vmatprep.subr.mxu0 0.0
  %974 = vmatpush1.msra.mxu0 0.0
  %975 = vmatprep.subr.mxu0 0.0
  %976 = vmatpush1.msra.mxu0 0.0
  %977 = vmatprep.subr.mxu0 0.0
  %978 = vmatpush1.msra.mxu0 0.0
  %979 = vmatprep.subr.mxu0 0.0
  %980 = vmatpush1.msra.mxu0 0.0
  %981 = vmatprep.subr.mxu0 0.0
  %982 = vmatpush1.msra.mxu0 0.0
  %983 = vmatprep.subr.mxu0 0.0
  %984 = vmatpush1.msra.mxu0 0.0
  %985 = vmatprep.subr.mxu0 0.0
  %986 = vmatpush1.msra.mxu0 0.0
  %987 = vmatprep.subr.mxu0 0.0
  %988 = vmatpush1.msra.mxu0 0.0
  %989 = vmatprep.subr.mxu0 0.0
  %990 = vmatpush1.msra.mxu0 0.0
  %991 = vmatprep.subr.mxu0 0.0
  %992 = vmatpush1.msra.mxu0 0.0
  %993 = vmatprep.subr.mxu0 0.0
  %994 = vmatpush1.msra.mxu0 0.0
  %995 = vmatprep.subr.mxu0 0.0
  %996 = vmatpush1.msra.mxu0 0.0
  %997 = vmatprep.subr.mxu0 0.0
  %998 = vmatpush1.msra.mxu0 0.0
  %999 = vmatprep.subr.mxu0 0.0
  %1000 = vmatpush1.msra.mxu0 0.0
  %1001 = vmatprep.subr.mxu0 0.0
  %1002 = vmatpush1.msra.mxu0 0.0
  %1003 = vmatprep.subr.mxu0 0.0
  %1004 = vmatpush1.msra.mxu0 0.0
  %1005 = vmatprep.mubr.f32.mxu0 0.0
  %1006 = vmatmul.mubr.f32.gmra.mrb[0].mxu0 %v868
  %v1007 = vpop.f32.mrb[0].mxu0
  %v1008 = vadd.f32 %v833, %v1007
  %v1009 = vpop.f32.mrb[0].mxu0
  %v1010 = vadd.f32 %v837, %v1009
  %1011 = vdwg.mxu0
  %1012 = vmatprep.subr.mxu0 %v787
  %1013 = vmatpush1.msra.mxu0 %v786
  %1014 = vmatprep.subr.mxu0 %v796
  %1015 = vmatpush1.msra.mxu0 %v795
  %1016 = vmatprep.subr.mxu0 %v805
  %1017 = vmatpush1.msra.mxu0 %v804
  %1018 = vmatprep.subr.mxu0 %v814
  %1019 = vmatpush1.msra.mxu0 %v813
  %1020 = vmatprep.subr.mxu0 0.0
  %1021 = vmatpush1.msra.mxu0 0.0
  %1022 = vmatprep.subr.mxu0 0.0
  %1023 = vmatpush1.msra.mxu0 0.0
  %1024 = vmatprep.subr.mxu0 0.0
  %1025 = vmatpush1.msra.mxu0 0.0
  %1026 = vmatprep.subr.mxu0 0.0
  %1027 = vmatpush1.msra.mxu0 0.0
  %1028 = vmatprep.subr.mxu0 0.0
  %1029 = vmatpush1.msra.mxu0 0.0
  %1030 = vmatprep.subr.mxu0 0.0
  %1031 = vmatpush1.msra.mxu0 0.0
  %1032 = vmatprep.subr.mxu0 0.0
  %1033 = vmatpush1.msra.mxu0 0.0
  %1034 = vmatprep.subr.mxu0 0.0
  %1035 = vmatpush1.msra.mxu0 0.0
  %1036 = vmatprep.subr.mxu0 0.0
  %1037 = vmatpush1.msra.mxu0 0.0
  %1038 = vmatprep.subr.mxu0 0.0
  %1039 = vmatpush1.msra.mxu0 0.0
  %1040 = vmatprep.subr.mxu0 0.0
  %1041 = vmatpush1.msra.mxu0 0.0
  %1042 = vmatprep.subr.mxu0 0.0
  %1043 = vmatpush1.msra.mxu0 0.0
  %1044 = vmatprep.subr.mxu0 0.0
  %1045 = vmatpush1.msra.mxu0 0.0
  %1046 = vmatprep.subr.mxu0 0.0
  %1047 = vmatpush1.msra.mxu0 0.0
  %1048 = vmatprep.subr.mxu0 0.0
  %1049 = vmatpush1.msra.mxu0 0.0
  %1050 = vmatprep.subr.mxu0 0.0
  %1051 = vmatpush1.msra.mxu0 0.0
  %1052 = vmatprep.subr.mxu0 0.0
  %1053 = vmatpush1.msra.mxu0 0.0
  %1054 = vmatprep.subr.mxu0 0.0
  %1055 = vmatpush1.msra.mxu0 0.0
  %1056 = vmatprep.subr.mxu0 0.0
  %1057 = vmatpush1.msra.mxu0 0.0
  %1058 = vmatprep.subr.mxu0 0.0
  %1059 = vmatpush1.msra.mxu0 0.0
  %1060 = vmatprep.subr.mxu0 0.0
  %1061 = vmatpush1.msra.mxu0 0.0
  %1062 = vmatprep.subr.mxu0 0.0
  %1063 = vmatpush1.msra.mxu0 0.0
  %1064 = vmatprep.subr.mxu0 0.0
  %1065 = vmatpush1.msra.mxu0 0.0
  %1066 = vmatprep.subr.mxu0 0.0
  %1067 = vmatpush1.msra.mxu0 0.0
  %1068 = vmatprep.subr.mxu0 0.0
  %1069 = vmatpush1.msra.mxu0 0.0
  %1070 = vmatprep.subr.mxu0 0.0
  %1071 = vmatpush1.msra.mxu0 0.0
  %1072 = vmatprep.subr.mxu0 0.0
  %1073 = vmatpush1.msra.mxu0 0.0
  %1074 = vmatprep.subr.mxu0 0.0
  %1075 = vmatpush1.msra.mxu0 0.0
  %1076 = vmatprep.mubr.f32.mxu0 0.0
  %1077 = vmatmul.mubr.f32.gmra.mrb[0].mxu0 %v868
  %v1078 = vpop.f32.mrb[0].mxu0
  %v1079 = vadd.f32 %v841, %v1078
  %v1080 = vpop.f32.mrb[0].mxu0
  %v1081 = vadd.f32 %v845, %v1080
  %1082 = vdwg.mxu0
  %1083 = vmatprep.subr.mxu0 %v789
  %1084 = vmatpush1.msra.mxu0 %v788
  %1085 = vmatprep.subr.mxu0 %v798
  %1086 = vmatpush1.msra.mxu0 %v797
  %1087 = vmatprep.subr.mxu0 %v807
  %1088 = vmatpush1.msra.mxu0 %v806
  %1089 = vmatprep.subr.mxu0 %v816
  %1090 = vmatpush1.msra.mxu0 %v815
  %1091 = vmatprep.subr.mxu0 0.0
  %1092 = vmatpush1.msra.mxu0 0.0
  %1093 = vmatprep.subr.mxu0 0.0
  %1094 = vmatpush1.msra.mxu0 0.0
  %1095 = vmatprep.subr.mxu0 0.0
  %1096 = vmatpush1.msra.mxu0 0.0
  %1097 = vmatprep.subr.mxu0 0.0
  %1098 = vmatpush1.msra.mxu0 0.0
  %1099 = vmatprep.subr.mxu0 0.0
  %1100 = vmatpush1.msra.mxu0 0.0
  %1101 = vmatprep.subr.mxu0 0.0
  %1102 = vmatpush1.msra.mxu0 0.0
  %1103 = vmatprep.subr.mxu0 0.0
  %1104 = vmatpush1.msra.mxu0 0.0
  %1105 = vmatprep.subr.mxu0 0.0
  %1106 = vmatpush1.msra.mxu0 0.0
  %1107 = vmatprep.subr.mxu0 0.0
  %1108 = vmatpush1.msra.mxu0 0.0
  %1109 = vmatprep.subr.mxu0 0.0
  %1110 = vmatpush1.msra.mxu0 0.0
  %1111 = vmatprep.subr.mxu0 0.0
  %1112 = vmatpush1.msra.mxu0 0.0
  %1113 = vmatprep.subr.mxu0 0.0
  %1114 = vmatpush1.msra.mxu0 0.0
  %1115 = vmatprep.subr.mxu0 0.0
  %1116 = vmatpush1.msra.mxu0 0.0
  %1117 = vmatprep.subr.mxu0 0.0
  %1118 = vmatpush1.msra.mxu0 0.0
  %1119 = vmatprep.subr.mxu0 0.0
  %1120 = vmatpush1.msra.mxu0 0.0
  %1121 = vmatprep.subr.mxu0 0.0
  %1122 = vmatpush1.msra.mxu0 0.0
  %1123 = vmatprep.subr.mxu0 0.0
  %1124 = vmatpush1.msra.mxu0 0.0
  %1125 = vmatprep.subr.mxu0 0.0
  %1126 = vmatpush1.msra.mxu0 0.0
  %1127 = vmatprep.subr.mxu0 0.0
  %1128 = vmatpush1.msra.mxu0 0.0
  %1129 = vmatprep.subr.mxu0 0.0
  %1130 = vmatpush1.msra.mxu0 0.0
  %1131 = vmatprep.subr.mxu0 0.0
  %1132 = vmatpush1.msra.mxu0 0.0
  %1133 = vmatprep.subr.mxu0 0.0
  %1134 = vmatpush1.msra.mxu0 0.0
  %1135 = vmatprep.subr.mxu0 0.0
  %1136 = vmatpush1.msra.mxu0 0.0
  %1137 = vmatprep.subr.mxu0 0.0
  %1138 = vmatpush1.msra.mxu0 0.0
  %1139 = vmatprep.subr.mxu0 0.0
  %1140 = vmatpush1.msra.mxu0 0.0
  %1141 = vmatprep.subr.mxu0 0.0
  %1142 = vmatpush1.msra.mxu0 0.0
  %1143 = vmatprep.subr.mxu0 0.0
  %1144 = vmatpush1.msra.mxu0 0.0
  %1145 = vmatprep.subr.mxu0 0.0
  %1146 = vmatpush1.msra.mxu0 0.0
  %1147 = vmatprep.mubr.f32.mxu0 0.0
  %1148 = vmatmul.mubr.f32.gmra.mrb[0].mxu0 %v868
  %v1149 = vpop.f32.mrb[0].mxu0
  %v1150 = vadd.f32 %v849, %v1149
  %v1151 = vpop.f32.mrb[0].mxu0
  %v1152 = vadd.f32 %v853, %v1151
  %1153 = vdwg.mxu0
  %1154 = vmatprep.subr.mxu0 0.0
  %1155 = vmatpush1.msra.mxu0 %v790
  %1156 = vmatprep.subr.mxu0 0.0
  %1157 = vmatpush1.msra.mxu0 %v799
  %1158 = vmatprep.subr.mxu0 0.0
  %1159 = vmatpush1.msra.mxu0 %v808
  %1160 = vmatprep.subr.mxu0 0.0
  %1161 = vmatpush1.msra.mxu0 %v817
  %1162 = vmatprep.subr.mxu0 0.0
  %1163 = vmatpush1.msra.mxu0 0.0
  %1164 = vmatprep.subr.mxu0 0.0
  %1165 = vmatpush1.msra.mxu0 0.0
  %1166 = vmatprep.subr.mxu0 0.0
  %1167 = vmatpush1.msra.mxu0 0.0
  %1168 = vmatprep.subr.mxu0 0.0
  %1169 = vmatpush1.msra.mxu0 0.0
  %1170 = vmatprep.subr.mxu0 0.0
  %1171 = vmatpush1.msra.mxu0 0.0
  %1172 = vmatprep.subr.mxu0 0.0
  %1173 = vmatpush1.msra.mxu0 0.0
  %1174 = vmatprep.subr.mxu0 0.0
  %1175 = vmatpush1.msra.mxu0 0.0
  %1176 = vmatprep.subr.mxu0 0.0
  %1177 = vmatpush1.msra.mxu0 0.0
  %1178 = vmatprep.subr.mxu0 0.0
  %1179 = vmatpush1.msra.mxu0 0.0
  %1180 = vmatprep.subr.mxu0 0.0
  %1181 = vmatpush1.msra.mxu0 0.0
  %1182 = vmatprep.subr.mxu0 0.0
  %1183 = vmatpush1.msra.mxu0 0.0
  %1184 = vmatprep.subr.mxu0 0.0
  %1185 = vmatpush1.msra.mxu0 0.0
  %1186 = vmatprep.subr.mxu0 0.0
  %1187 = vmatpush1.msra.mxu0 0.0
  %1188 = vmatprep.subr.mxu0 0.0
  %1189 = vmatpush1.msra.mxu0 0.0
  %1190 = vmatprep.subr.mxu0 0.0
  %1191 = vmatpush1.msra.mxu0 0.0
  %1192 = vmatprep.subr.mxu0 0.0
  %1193 = vmatpush1.msra.mxu0 0.0
  %1194 = vmatprep.subr.mxu0 0.0
  %1195 = vmatpush1.msra.mxu0 0.0
  %1196 = vmatprep.subr.mxu0 0.0
  %1197 = vmatpush1.msra.mxu0 0.0
  %1198 = vmatprep.subr.mxu0 0.0
  %1199 = vmatpush1.msra.mxu0 0.0
  %1200 = vmatprep.subr.mxu0 0.0
  %1201 = vmatpush1.msra.mxu0 0.0
  %1202 = vmatprep.subr.mxu0 0.0
  %1203 = vmatpush1.msra.mxu0 0.0
  %1204 = vmatprep.subr.mxu0 0.0
  %1205 = vmatpush1.msra.mxu0 0.0
  %1206 = vmatprep.subr.mxu0 0.0
  %1207 = vmatpush1.msra.mxu0 0.0
  %1208 = vmatprep.subr.mxu0 0.0
  %1209 = vmatpush1.msra.mxu0 0.0
  %1210 = vmatprep.subr.mxu0 0.0
  %1211 = vmatpush1.msra.mxu0 0.0
  %1212 = vmatprep.subr.mxu0 0.0
  %1213 = vmatpush1.msra.mxu0 0.0
  %1214 = vmatprep.subr.mxu0 0.0
  %1215 = vmatpush1.msra.mxu0 0.0
  %1216 = vmatprep.subr.mxu0 0.0
  %1217 = vmatpush1.msra.mxu0 0.0
  %1218 = vmatprep.mubr.f32.mxu0 0.0
  %1219 = vmatmul.mubr.f32.gmra.mrb[0].mxu0 %v868
  %v1220 = vpop.f32.mrb[0].mxu0
  %v1221 = vadd.f32 %v857, %v1220
  %v1222 = vpop.f32.mrb[0].mxu0
  %1223 = vdwg.mxu0
  %v1224 = vmul.f32 %v937, %v1079
  %v1225 = vmul.f32 %v939, %v1081
  %v1226 = vmul.f32 %v1008, %v1150
  %v1227 = vmul.f32 %v1010, %v1152
  %vm1228 = vcmask 1041408
  %v1229 = vsel %vm1228, %v1224, 0.0
  %v1230 = vsel %vm1228, %v1225, 0.0
  %v1231 = vadd.f32 %v1229, %v1230
  %v1232 = vsel %vm1228, %v1226, 0.0
  %v1233 = vadd.f32 %v1231, %v1232
  %v1234 = vsel %vm1228, %v1227, 0.0
  %v1235 = vadd.f32 %v1233, %v1234
  %1236 = vadd.xlane.f32.xlu0 %v1235
  %v1237 = vpop.xlane.xlu0 %1236
  %v1238 = vrcp.pop 22.627417
  %v1239 = vmul.f32 %v1237, %v1238
  %v1240 = vand.u32 2147483647, %v1239
  %vm1241 = vcmp.eq.f32.partialorder %v1240, inf
  %v1242 = vsel %vm1241, 0.0, %v1239
  %v1243 = vsub.f32 %v1242, %v1242
  %v1244 = vmul.f32 %v1243, 1.442695
  %v1245 = vpow.pop %v1244
  %v1246 = vand.u32 2147483647, %v1242
  %vm1247 = vcmp.lt.f32.partialorder %v1246, inf
  %v1248 = vsel %vm1247, 1, 0
  %v1249 = vcvt.s32.f32 %v1248
  %v1250 = vmul.f32 %v1245, %v1249
  %v1251 = vmul.f32 %v1250, %v1221
  %v1252 = vld [vmem:[%s15] sm:$0xff]
  %v1253 = vld [vmem:[%s15 + $0x8] sm:$0xff]
  %v1254 = vld [vmem:[%s15 + $0x10] sm:$0xff]
  %v1255 = vld [vmem:[%s15 + $0x18] sm:$0xff]
  %v1256 = vld [vmem:[%s15 + $0x20] sm:$0xff]
  %v1257 = vld [vmem:[%s15 + $0x28] sm:$0xff]
  %v1258 = vld [vmem:[%s15 + $0x30] sm:$0xff]
  %v1259 = vld [vmem:[%s15 + $0x38] sm:$0xff]
  %v1260 = vld [vmem:[%s15 + $0x40] sm:$0xff]
  %v1261 = vld [vmem:[%s15 + $0x48] sm:$0xff]
  %v1262 = vld [vmem:[%s15 + $0x50] sm:$0xff]
  %v1263 = vld [vmem:[%s15 + $0x58] sm:$0xff]
  %v1264 = vld [vmem:[%s15 + $0x60] sm:$0xff]
  %v1265 = vld [vmem:[%s15 + $0x68] sm:$0xff]
  %v1266 = vld [vmem:[%s15 + $0x70] sm:$0xff]
  %v1267 = vld [vmem:[%s15 + $0x78] sm:$0xff]
  %v1268 = vld [vmem:[%s15 + $0x80] sm:$0xff]
  %v1269 = vld [vmem:[%s15 + $0x88] sm:$0xff]
  %v1270 = vld [vmem:[%s15 + $0x90] sm:$0xff]
  %v1271 = vld [vmem:[%s15 + $0x98] sm:$0xff]
  %v1272 = vld [vmem:[%s15 + $0xa0] sm:$0xff]
  %v1273 = vld [vmem:[%s15 + $0xa8] sm:$0xff]
  %v1274 = vld [vmem:[%s15 + $0xb0] sm:$0xff]
  %v1275 = vld [vmem:[%s15 + $0xb8] sm:$0xff]
  %v1276 = vld [vmem:[%s15 + $0xc0] sm:$0xff]
  %v1277 = vld [vmem:[%s15 + $0xc8] sm:$0xff]
  %v1278 = vld [vmem:[%s15 + $0xd0] sm:$0xff]
  %v1279 = vld [vmem:[%s15 + $0xd8] sm:$0xff]
  %v1280 = vld [vmem:[%s15 + $0xe0] sm:$0xff]
  %v1281 = vld [vmem:[%s15 + $0xe8] sm:$0xff]
  %v1282 = vld [vmem:[%s15 + $0xf0] sm:$0xff]
  %v1283 = vld [vmem:[%s15 + $0xf8] sm:$0xff]
  %v1284 = vld [vmem:[%s15 + $0x100] sm:$0xff]
  %v1285 = vld [vmem:[%s15 + $0x108] sm:$0xff]
  %v1286 = vld [vmem:[%s15 + $0x110] sm:$0xff]
  %v1287 = vld [vmem:[%s15 + $0x118] sm:$0xff]
  %v1288 = vld [vmem:[%s16] sm:$0xff]
  %v1289 = vld [vmem:[%s16 + $0x8] sm:$0x1]
  %v1292 = vlaneseq
  %v1293 = vshrl.u32 %v1292, 7
  %v1294 = vsub.s32 0, %v1293
  %v1295 = vrot.slane %v1288, %v1294
  %v1296 = vlaneseq
  %v1297 = vshrl.u32 %v1296, 7
  %v1298 = vsub.s32 1, %v1297
  %v1299 = vrot.slane %v1288, %v1298
  %v1300 = vlaneseq
  %v1301 = vshrl.u32 %v1300, 7
  %v1302 = vsub.s32 2, %v1301
  %v1303 = vrot.slane %v1288, %v1302
  %v1304 = vlaneseq
  %v1305 = vshrl.u32 %v1304, 7
  %v1306 = vsub.s32 3, %v1305
  %v1307 = vrot.slane %v1288, %v1306
  %v1308 = vlaneseq
  %v1309 = vshrl.u32 %v1308, 7
  %v1310 = vsub.s32 4, %v1309
  %v1311 = vrot.slane %v1288, %v1310
  %v1312 = vlaneseq
  %v1313 = vshrl.u32 %v1312, 7
  %v1314 = vsub.s32 5, %v1313
  %v1315 = vrot.slane %v1288, %v1314
  %v1316 = vlaneseq
  %v1317 = vshrl.u32 %v1316, 7
  %v1318 = vsub.s32 6, %v1317
  %v1319 = vrot.slane %v1288, %v1318
  %v1320 = vlaneseq
  %v1321 = vshrl.u32 %v1320, 7
  %v1322 = vsub.s32 7, %v1321
  %v1323 = vrot.slane %v1288, %v1322
  %v1324 = vlaneseq
  %v1325 = vshrl.u32 %v1324, 7
  %v1326 = vsub.s32 0, %v1325
  %v1327 = vrot.slane %v1289, %v1326
  %1337 = vmatprep.subr.mxu0 %v1253
  %1338 = vmatpush1.msra.mxu0 %v1252
  %1339 = vmatprep.subr.mxu0 %v1262
  %1340 = vmatpush1.msra.mxu0 %v1261
  %1341 = vmatprep.subr.mxu0 %v1271
  %1342 = vmatpush1.msra.mxu0 %v1270
  %1343 = vmatprep.subr.mxu0 %v1280
  %1344 = vmatpush1.msra.mxu0 %v1279
  %1345 = vmatprep.subr.mxu0 0.0
  %1346 = vmatpush1.msra.mxu0 0.0
  %1347 = vmatprep.subr.mxu0 0.0
  %1348 = vmatpush1.msra.mxu0 0.0
  %1349 = vmatprep.subr.mxu0 0.0
  %1350 = vmatpush1.msra.mxu0 0.0
  %1351 = vmatprep.subr.mxu0 0.0
  %1352 = vmatpush1.msra.mxu0 0.0
  %1353 = vmatprep.subr.mxu0 0.0
  %1354 = vmatpush1.msra.mxu0 0.0
  %1355 = vmatprep.subr.mxu0 0.0
  %1356 = vmatpush1.msra.mxu0 0.0
  %1357 = vmatprep.subr.mxu0 0.0
  %1358 = vmatpush1.msra.mxu0 0.0
  %1359 = vmatprep.subr.mxu0 0.0
  %1360 = vmatpush1.msra.mxu0 0.0
  %1361 = vmatprep.subr.mxu0 0.0
  %1362 = vmatpush1.msra.mxu0 0.0
  %1363 = vmatprep.subr.mxu0 0.0
  %1364 = vmatpush1.msra.mxu0 0.0
  %1365 = vmatprep.subr.mxu0 0.0
  %1366 = vmatpush1.msra.mxu0 0.0
  %1367 = vmatprep.subr.mxu0 0.0
  %1368 = vmatpush1.msra.mxu0 0.0
  %1369 = vmatprep.subr.mxu0 0.0
  %1370 = vmatpush1.msra.mxu0 0.0
  %1371 = vmatprep.subr.mxu0 0.0
  %1372 = vmatpush1.msra.mxu0 0.0
  %1373 = vmatprep.subr.mxu0 0.0
  %1374 = vmatpush1.msra.mxu0 0.0
  %1375 = vmatprep.subr.mxu0 0.0
  %1376 = vmatpush1.msra.mxu0 0.0
  %1377 = vmatprep.subr.mxu0 0.0
  %1378 = vmatpush1.msra.mxu0 0.0
  %1379 = vmatprep.subr.mxu0 0.0
  %1380 = vmatpush1.msra.mxu0 0.0
  %1381 = vmatprep.subr.mxu0 0.0
  %1382 = vmatpush1.msra.mxu0 0.0
  %1383 = vmatprep.subr.mxu0 0.0
  %1384 = vmatpush1.msra.mxu0 0.0
  %1385 = vmatprep.subr.mxu0 0.0
  %1386 = vmatpush1.msra.mxu0 0.0
  %1387 = vmatprep.subr.mxu0 0.0
  %1388 = vmatpush1.msra.mxu0 0.0
  %1389 = vmatprep.subr.mxu0 0.0
  %1390 = vmatpush1.msra.mxu0 0.0
  %1391 = vmatprep.subr.mxu0 0.0
  %1392 = vmatpush1.msra.mxu0 0.0
  %1393 = vmatprep.subr.mxu0 0.0
  %1394 = vmatpush1.msra.mxu0 0.0
  %1395 = vmatprep.subr.mxu0 0.0
  %1396 = vmatpush1.msra.mxu0 0.0
  %1397 = vmatprep.subr.mxu0 0.0
  %1398 = vmatpush1.msra.mxu0 0.0
  %1399 = vmatprep.subr.mxu0 0.0
  %1400 = vmatpush1.msra.mxu0 0.0
  %1401 = vmatprep.mubr.f32.mxu0 0.0
  %1402 = vmatmul.mubr.f32.gmra.mrb[0].mxu0 %v868
  %v1403 = vpop.f32.mrb[0].mxu0
  %v1404 = vadd.f32 %v1295, %v1403
  %v1405 = vpop.f32.mrb[0].mxu0
  %v1406 = vadd.f32 %v1299, %v1405
  %1407 = vdwg.mxu0
  %1408 = vmatprep.subr.mxu0 %v1255
  %1409 = vmatpush1.msra.mxu0 %v1254
  %1410 = vmatprep.subr.mxu0 %v1264
  %1411 = vmatpush1.msra.mxu0 %v1263
  %1412 = vmatprep.subr.mxu0 %v1273
  %1413 = vmatpush1.msra.mxu0 %v1272
  %1414 = vmatprep.subr.mxu0 %v1282
  %1415 = vmatpush1.msra.mxu0 %v1281
  %1416 = vmatprep.subr.mxu0 0.0
  %1417 = vmatpush1.msra.mxu0 0.0
  %1418 = vmatprep.subr.mxu0 0.0
  %1419 = vmatpush1.msra.mxu0 0.0
  %1420 = vmatprep.subr.mxu0 0.0
  %1421 = vmatpush1.msra.mxu0 0.0
  %1422 = vmatprep.subr.mxu0 0.0
  %1423 = vmatpush1.msra.mxu0 0.0
  %1424 = vmatprep.subr.mxu0 0.0
  %1425 = vmatpush1.msra.mxu0 0.0
  %1426 = vmatprep.subr.mxu0 0.0
  %1427 = vmatpush1.msra.mxu0 0.0
  %1428 = vmatprep.subr.mxu0 0.0
  %1429 = vmatpush1.msra.mxu0 0.0
  %1430 = vmatprep.subr.mxu0 0.0
  %1431 = vmatpush1.msra.mxu0 0.0
  %1432 = vmatprep.subr.mxu0 0.0
  %1433 = vmatpush1.msra.mxu0 0.0
  %1434 = vmatprep.subr.mxu0 0.0
  %1435 = vmatpush1.msra.mxu0 0.0
  %1436 = vmatprep.subr.mxu0 0.0
  %1437 = vmatpush1.msra.mxu0 0.0
  %1438 = vmatprep.subr.mxu0 0.0
  %1439 = vmatpush1.msra.mxu0 0.0
  %1440 = vmatprep.subr.mxu0 0.0
  %1441 = vmatpush1.msra.mxu0 0.0
  %1442 = vmatprep.subr.mxu0 0.0
  %1443 = vmatpush1.msra.mxu0 0.0
  %1444 = vmatprep.subr.mxu0 0.0
  %1445 = vmatpush1.msra.mxu0 0.0
  %1446 = vmatprep.subr.mxu0 0.0
  %1447 = vmatpush1.msra.mxu0 0.0
  %1448 = vmatprep.subr.mxu0 0.0
  %1449 = vmatpush1.msra.mxu0 0.0
  %1450 = vmatprep.subr.mxu0 0.0
  %1451 = vmatpush1.msra.mxu0 0.0
  %1452 = vmatprep.subr.mxu0 0.0
  %1453 = vmatpush1.msra.mxu0 0.0
  %1454 = vmatprep.subr.mxu0 0.0
  %1455 = vmatpush1.msra.mxu0 0.0
  %1456 = vmatprep.subr.mxu0 0.0
  %1457 = vmatpush1.msra.mxu0 0.0
  %1458 = vmatprep.subr.mxu0 0.0
  %1459 = vmatpush1.msra.mxu0 0.0
  %1460 = vmatprep.subr.mxu0 0.0
  %1461 = vmatpush1.msra.mxu0 0.0
  %1462 = vmatprep.subr.mxu0 0.0
  %1463 = vmatpush1.msra.mxu0 0.0
  %1464 = vmatprep.subr.mxu0 0.0
  %1465 = vmatpush1.msra.mxu0 0.0
  %1466 = vmatprep.subr.mxu0 0.0
  %1467 = vmatpush1.msra.mxu0 0.0
  %1468 = vmatprep.subr.mxu0 0.0
  %1469 = vmatpush1.msra.mxu0 0.0
  %1470 = vmatprep.subr.mxu0 0.0
  %1471 = vmatpush1.msra.mxu0 0.0
  %1472 = vmatprep.mubr.f32.mxu0 0.0
  %1473 = vmatmul.mubr.f32.gmra.mrb[0].mxu0 %v868
  %v1474 = vpop.f32.mrb[0].mxu0
  %v1475 = vadd.f32 %v1303, %v1474
  %v1476 = vpop.f32.mrb[0].mxu0
  %v1477 = vadd.f32 %v1307, %v1476
  %1478 = vdwg.mxu0
  %1479 = vmatprep.subr.mxu0 %v1257
  %1480 = vmatpush1.msra.mxu0 %v1256
  %1481 = vmatprep.subr.mxu0 %v1266
  %1482 = vmatpush1.msra.mxu0 %v1265
  %1483 = vmatprep.subr.mxu0 %v1275
  %1484 = vmatpush1.msra.mxu0 %v1274
  %1485 = vmatprep.subr.mxu0 %v1284
  %1486 = vmatpush1.msra.mxu0 %v1283
  %1487 = vmatprep.subr.mxu0 0.0
  %1488 = vmatpush1.msra.mxu0 0.0
  %1489 = vmatprep.subr.mxu0 0.0
  %1490 = vmatpush1.msra.mxu0 0.0
  %1491 = vmatprep.subr.mxu0 0.0
  %1492 = vmatpush1.msra.mxu0 0.0
  %1493 = vmatprep.subr.mxu0 0.0
  %1494 = vmatpush1.msra.mxu0 0.0
  %1495 = vmatprep.subr.mxu0 0.0
  %1496 = vmatpush1.msra.mxu0 0.0
  %1497 = vmatprep.subr.mxu0 0.0
  %1498 = vmatpush1.msra.mxu0 0.0
  %1499 = vmatprep.subr.mxu0 0.0
  %1500 = vmatpush1.msra.mxu0 0.0
  %1501 = vmatprep.subr.mxu0 0.0
  %1502 = vmatpush1.msra.mxu0 0.0
  %1503 = vmatprep.subr.mxu0 0.0
  %1504 = vmatpush1.msra.mxu0 0.0
  %1505 = vmatprep.subr.mxu0 0.0
  %1506 = vmatpush1.msra.mxu0 0.0
  %1507 = vmatprep.subr.mxu0 0.0
  %1508 = vmatpush1.msra.mxu0 0.0
  %1509 = vmatprep.subr.mxu0 0.0
  %1510 = vmatpush1.msra.mxu0 0.0
  %1511 = vmatprep.subr.mxu0 0.0
  %1512 = vmatpush1.msra.mxu0 0.0
  %1513 = vmatprep.subr.mxu0 0.0
  %1514 = vmatpush1.msra.mxu0 0.0
  %1515 = vmatprep.subr.mxu0 0.0
  %1516 = vmatpush1.msra.mxu0 0.0
  %1517 = vmatprep.subr.mxu0 0.0
  %1518 = vmatpush1.msra.mxu0 0.0
  %1519 = vmatprep.subr.mxu0 0.0
  %1520 = vmatpush1.msra.mxu0 0.0
  %1521 = vmatprep.subr.mxu0 0.0
  %1522 = vmatpush1.msra.mxu0 0.0
  %1523 = vmatprep.subr.mxu0 0.0
  %1524 = vmatpush1.msra.mxu0 0.0
  %1525 = vmatprep.subr.mxu0 0.0
  %1526 = vmatpush1.msra.mxu0 0.0
  %1527 = vmatprep.subr.mxu0 0.0
  %1528 = vmatpush1.msra.mxu0 0.0
  %1529 = vmatprep.subr.mxu0 0.0
  %1530 = vmatpush1.msra.mxu0 0.0
  %1531 = vmatprep.subr.mxu0 0.0
  %1532 = vmatpush1.msra.mxu0 0.0
  %1533 = vmatprep.subr.mxu0 0.0
  %1534 = vmatpush1.msra.mxu0 0.0
  %1535 = vmatprep.subr.mxu0 0.0
  %1536 = vmatpush1.msra.mxu0 0.0
  %1537 = vmatprep.subr.mxu0 0.0
  %1538 = vmatpush1.msra.mxu0 0.0
  %1539 = vmatprep.subr.mxu0 0.0
  %1540 = vmatpush1.msra.mxu0 0.0
  %1541 = vmatprep.subr.mxu0 0.0
  %1542 = vmatpush1.msra.mxu0 0.0
  %1543 = vmatprep.mubr.f32.mxu0 0.0
  %1544 = vmatmul.mubr.f32.gmra.mrb[0].mxu0 %v868
  %v1545 = vpop.f32.mrb[0].mxu0
  %v1546 = vadd.f32 %v1311, %v1545
  %v1547 = vpop.f32.mrb[0].mxu0
  %v1548 = vadd.f32 %v1315, %v1547
  %1549 = vdwg.mxu0
  %1550 = vmatprep.subr.mxu0 %v1259
  %1551 = vmatpush1.msra.mxu0 %v1258
  %1552 = vmatprep.subr.mxu0 %v1268
  %1553 = vmatpush1.msra.mxu0 %v1267
  %1554 = vmatprep.subr.mxu0 %v1277
  %1555 = vmatpush1.msra.mxu0 %v1276
  %1556 = vmatprep.subr.mxu0 %v1286
  %1557 = vmatpush1.msra.mxu0 %v1285
  %1558 = vmatprep.subr.mxu0 0.0
  %1559 = vmatpush1.msra.mxu0 0.0
  %1560 = vmatprep.subr.mxu0 0.0
  %1561 = vmatpush1.msra.mxu0 0.0
  %1562 = vmatprep.subr.mxu0 0.0
  %1563 = vmatpush1.msra.mxu0 0.0
  %1564 = vmatprep.subr.mxu0 0.0
  %1565 = vmatpush1.msra.mxu0 0.0
  %1566 = vmatprep.subr.mxu0 0.0
  %1567 = vmatpush1.msra.mxu0 0.0
  %1568 = vmatprep.subr.mxu0 0.0
  %1569 = vmatpush1.msra.mxu0 0.0
  %1570 = vmatprep.subr.mxu0 0.0
  %1571 = vmatpush1.msra.mxu0 0.0
  %1572 = vmatprep.subr.mxu0 0.0
  %1573 = vmatpush1.msra.mxu0 0.0
  %1574 = vmatprep.subr.mxu0 0.0
  %1575 = vmatpush1.msra.mxu0 0.0
  %1576 = vmatprep.subr.mxu0 0.0
  %1577 = vmatpush1.msra.mxu0 0.0
  %1578 = vmatprep.subr.mxu0 0.0
  %1579 = vmatpush1.msra.mxu0 0.0
  %1580 = vmatprep.subr.mxu0 0.0
  %1581 = vmatpush1.msra.mxu0 0.0
  %1582 = vmatprep.subr.mxu0 0.0
  %1583 = vmatpush1.msra.mxu0 0.0
  %1584 = vmatprep.subr.mxu0 0.0
  %1585 = vmatpush1.msra.mxu0 0.0
  %1586 = vmatprep.subr.mxu0 0.0
  %1587 = vmatpush1.msra.mxu0 0.0
  %1588 = vmatprep.subr.mxu0 0.0
  %1589 = vmatpush1.msra.mxu0 0.0
  %1590 = vmatprep.subr.mxu0 0.0
  %1591 = vmatpush1.msra.mxu0 0.0
  %1592 = vmatprep.subr.mxu0 0.0
  %1593 = vmatpush1.msra.mxu0 0.0
  %1594 = vmatprep.subr.mxu0 0.0
  %1595 = vmatpush1.msra.mxu0 0.0
  %1596 = vmatprep.subr.mxu0 0.0
  %1597 = vmatpush1.msra.mxu0 0.0
  %1598 = vmatprep.subr.mxu0 0.0
  %1599 = vmatpush1.msra.mxu0 0.0
  %1600 = vmatprep.subr.mxu0 0.0
  %1601 = vmatpush1.msra.mxu0 0.0
  %1602 = vmatprep.subr.mxu0 0.0
  %1603 = vmatpush1.msra.mxu0 0.0
  %1604 = vmatprep.subr.mxu0 0.0
  %1605 = vmatpush1.msra.mxu0 0.0
  %1606 = vmatprep.subr.mxu0 0.0
  %1607 = vmatpush1.msra.mxu0 0.0
  %1608 = vmatprep.subr.mxu0 0.0
  %1609 = vmatpush1.msra.mxu0 0.0
  %1610 = vmatprep.subr.mxu0 0.0
  %1611 = vmatpush1.msra.mxu0 0.0
  %1612 = vmatprep.subr.mxu0 0.0
  %1613 = vmatpush1.msra.mxu0 0.0
  %1614 = vmatprep.mubr.f32.mxu0 0.0
  %1615 = vmatmul.mubr.f32.gmra.mrb[0].mxu0 %v868
  %v1616 = vpop.f32.mrb[0].mxu0
  %v1617 = vadd.f32 %v1319, %v1616
  %v1618 = vpop.f32.mrb[0].mxu0
  %v1619 = vadd.f32 %v1323, %v1618
  %1620 = vdwg.mxu0
  %1621 = vmatprep.subr.mxu0 0.0
  %1622 = vmatpush1.msra.mxu0 %v1260
  %1623 = vmatprep.subr.mxu0 0.0
  %1624 = vmatpush1.msra.mxu0 %v1269
  %1625 = vmatprep.subr.mxu0 0.0
  %1626 = vmatpush1.msra.mxu0 %v1278
  %1627 = vmatprep.subr.mxu0 0.0
  %1628 = vmatpush1.msra.mxu0 %v1287
  %1629 = vmatprep.subr.mxu0 0.0
  %1630 = vmatpush1.msra.mxu0 0.0
  %1631 = vmatprep.subr.mxu0 0.0
  %1632 = vmatpush1.msra.mxu0 0.0
  %1633 = vmatprep.subr.mxu0 0.0
  %1634 = vmatpush1.msra.mxu0 0.0
  %1635 = vmatprep.subr.mxu0 0.0
  %1636 = vmatpush1.msra.mxu0 0.0
  %1637 = vmatprep.subr.mxu0 0.0
  %1638 = vmatpush1.msra.mxu0 0.0
  %1639 = vmatprep.subr.mxu0 0.0
  %1640 = vmatpush1.msra.mxu0 0.0
  %1641 = vmatprep.subr.mxu0 0.0
  %1642 = vmatpush1.msra.mxu0 0.0
  %1643 = vmatprep.subr.mxu0 0.0
  %1644 = vmatpush1.msra.mxu0 0.0
  %1645 = vmatprep.subr.mxu0 0.0
  %1646 = vmatpush1.msra.mxu0 0.0
  %1647 = vmatprep.subr.mxu0 0.0
  %1648 = vmatpush1.msra.mxu0 0.0
  %1649 = vmatprep.subr.mxu0 0.0
  %1650 = vmatpush1.msra.mxu0 0.0
  %1651 = vmatprep.subr.mxu0 0.0
  %1652 = vmatpush1.msra.mxu0 0.0
  %1653 = vmatprep.subr.mxu0 0.0
  %1654 = vmatpush1.msra.mxu0 0.0
  %1655 = vmatprep.subr.mxu0 0.0
  %1656 = vmatpush1.msra.mxu0 0.0
  %1657 = vmatprep.subr.mxu0 0.0
  %1658 = vmatpush1.msra.mxu0 0.0
  %1659 = vmatprep.subr.mxu0 0.0
  %1660 = vmatpush1.msra.mxu0 0.0
  %1661 = vmatprep.subr.mxu0 0.0
  %1662 = vmatpush1.msra.mxu0 0.0
  %1663 = vmatprep.subr.mxu0 0.0
  %1664 = vmatpush1.msra.mxu0 0.0
  %1665 = vmatprep.subr.mxu0 0.0
  %1666 = vmatpush1.msra.mxu0 0.0
  %1667 = vmatprep.subr.mxu0 0.0
  %1668 = vmatpush1.msra.mxu0 0.0
  %1669 = vmatprep.subr.mxu0 0.0
  %1670 = vmatpush1.msra.mxu0 0.0
  %1671 = vmatprep.subr.mxu0 0.0
  %1672 = vmatpush1.msra.mxu0 0.0
  %1673 = vmatprep.subr.mxu0 0.0
  %1674 = vmatpush1.msra.mxu0 0.0
  %1675 = vmatprep.subr.mxu0 0.0
  %1676 = vmatpush1.msra.mxu0 0.0
  %1677 = vmatprep.subr.mxu0 0.0
  %1678 = vmatpush1.msra.mxu0 0.0
  %1679 = vmatprep.subr.mxu0 0.0
  %1680 = vmatpush1.msra.mxu0 0.0
  %1681 = vmatprep.subr.mxu0 0.0
  %1682 = vmatpush1.msra.mxu0 0.0
  %1683 = vmatprep.subr.mxu0 0.0
  %1684 = vmatpush1.msra.mxu0 0.0
  %1685 = vmatprep.mubr.f32.mxu0 0.0
  %1686 = vmatmul.mubr.f32.gmra.mrb[0].mxu0 %v868
  %v1687 = vpop.f32.mrb[0].mxu0
  %v1688 = vadd.f32 %v1327, %v1687
  %v1689 = vpop.f32.mrb[0].mxu0
  %1690 = vdwg.mxu0
  %v1691 = vmul.f32 %v1404, %v1546
  %v1692 = vmul.f32 %v1406, %v1548
  %v1693 = vmul.f32 %v1475, %v1617
  %v1694 = vmul.f32 %v1477, %v1619
  %v1695 = vsel %vm1228, %v1691, 0.0
  %v1696 = vsel %vm1228, %v1692, 0.0
  %v1697 = vadd.f32 %v1695, %v1696
  %v1698 = vsel %vm1228, %v1693, 0.0
  %v1699 = vadd.f32 %v1697, %v1698
  %v1700 = vsel %vm1228, %v1694, 0.0
  %v1701 = vadd.f32 %v1699, %v1700
  %1702 = vadd.xlane.f32.xlu0 %v1701
  %v1703 = vpop.xlane.xlu0 %1702
  %v1704 = vmul.f32 %v1703, %v1238
  %v1705 = vand.u32 2147483647, %v1704
  %vm1706 = vcmp.eq.f32.partialorder %v1705, inf
  %v1707 = vsel %vm1706, 0.0, %v1704
  %v1708 = vsub.f32 %v1707, %v1707
  %v1709 = vmul.f32 %v1708, 1.442695
  %v1710 = vpow.pop %v1709
  %v1711 = vand.u32 2147483647, %v1707
  %vm1712 = vcmp.lt.f32.partialorder %v1711, inf
  %v1713 = vsel %vm1712, 1, 0
  %v1714 = vcvt.s32.f32 %v1713
  %v1715 = vmul.f32 %v1710, %v1714
  %v1716 = vmul.f32 %v1715, %v1688
  %v1717 = vld [vmem:[%s17] sm:$0xff]
  %v1718 = vld [vmem:[%s17 + $0x8] sm:$0xff]
  %v1719 = vld [vmem:[%s17 + $0x10] sm:$0xff]
  %v1720 = vld [vmem:[%s17 + $0x18] sm:$0x1]
  %v1721 = vld [vmem:[%s17 + $0x20] sm:$0x1]
  %v1722 = vld [vmem:[%s17 + $0x28] sm:$0x1]
  %v1723 = vld [vmem:[%s18] sm:$0x7]
  %v1725 = vlaneseq
  %v1726 = vshrl.u32 %v1725, 7
  %v1727 = vsub.s32 0, %v1726
  %v1728 = vrot.slane %v1723, %v1727
  %v1729 = vlaneseq
  %v1730 = vshrl.u32 %v1729, 7
  %v1731 = vsub.s32 1, %v1730
  %v1732 = vrot.slane %v1723, %v1731
  %v1733 = vlaneseq
  %v1734 = vshrl.u32 %v1733, 7
  %v1735 = vsub.s32 2, %v1734
  %v1736 = vrot.slane %v1723, %v1735
  %vm1740 = vcmask 72704
  %v1742 = vsel %vm1740, %v781, 0
  %vm1744 = vcmask 1040384
  %v1746 = vsel %vm1744, %v1720, 0
  %v1749 = vsel %vm1744, %v1721, 0
  %v1752 = vsel %vm1744, %v1722, 0
  %1754 = vmatprep.subr.mxu0 %v1718
  %1755 = vmatpush1.msra.mxu0 %v1717
  %1756 = vmatprep.subr.mxu0 %v1749
  %1757 = vmatpush1.msra.mxu0 %v1746
  %1758 = vmatprep.subr.mxu0 0.0
  %1759 = vmatpush1.msra.mxu0 0.0
  %1760 = vmatprep.subr.mxu0 0.0
  %1761 = vmatpush1.msra.mxu0 0.0
  %1762 = vmatprep.subr.mxu0 0.0
  %1763 = vmatpush1.msra.mxu0 0.0
  %1764 = vmatprep.subr.mxu0 0.0
  %1765 = vmatpush1.msra.mxu0 0.0
  %1766 = vmatprep.subr.mxu0 0.0
  %1767 = vmatpush1.msra.mxu0 0.0
  %1768 = vmatprep.subr.mxu0 0.0
  %1769 = vmatpush1.msra.mxu0 0.0
  %1770 = vmatprep.subr.mxu0 0.0
  %1771 = vmatpush1.msra.mxu0 0.0
  %1772 = vmatprep.subr.mxu0 0.0
  %1773 = vmatpush1.msra.mxu0 0.0
  %1774 = vmatprep.subr.mxu0 0.0
  %1775 = vmatpush1.msra.mxu0 0.0
  %1776 = vmatprep.subr.mxu0 0.0
  %1777 = vmatpush1.msra.mxu0 0.0
  %1778 = vmatprep.subr.mxu0 0.0
  %1779 = vmatpush1.msra.mxu0 0.0
  %1780 = vmatprep.subr.mxu0 0.0
  %1781 = vmatpush1.msra.mxu0 0.0
  %1782 = vmatprep.subr.mxu0 0.0
  %1783 = vmatpush1.msra.mxu0 0.0
  %1784 = vmatprep.subr.mxu0 0.0
  %1785 = vmatpush1.msra.mxu0 0.0
  %1786 = vmatprep.subr.mxu0 0.0
  %1787 = vmatpush1.msra.mxu0 0.0
  %1788 = vmatprep.subr.mxu0 0.0
  %1789 = vmatpush1.msra.mxu0 0.0
  %1790 = vmatprep.subr.mxu0 0.0
  %1791 = vmatpush1.msra.mxu0 0.0
  %1792 = vmatprep.subr.mxu0 0.0
  %1793 = vmatpush1.msra.mxu0 0.0
  %1794 = vmatprep.subr.mxu0 0.0
  %1795 = vmatpush1.msra.mxu0 0.0
  %1796 = vmatprep.subr.mxu0 0.0
  %1797 = vmatpush1.msra.mxu0 0.0
  %1798 = vmatprep.subr.mxu0 0.0
  %1799 = vmatpush1.msra.mxu0 0.0
  %1800 = vmatprep.subr.mxu0 0.0
  %1801 = vmatpush1.msra.mxu0 0.0
  %1802 = vmatprep.subr.mxu0 0.0
  %1803 = vmatpush1.msra.mxu0 0.0
  %1804 = vmatprep.subr.mxu0 0.0
  %1805 = vmatpush1.msra.mxu0 0.0
  %1806 = vmatprep.subr.mxu0 0.0
  %1807 = vmatpush1.msra.mxu0 0.0
  %1808 = vmatprep.subr.mxu0 0.0
  %1809 = vmatpush1.msra.mxu0 0.0
  %1810 = vmatprep.subr.mxu0 0.0
  %1811 = vmatpush1.msra.mxu0 0.0
  %1812 = vmatprep.subr.mxu0 0.0
  %1813 = vmatpush1.msra.mxu0 0.0
  %1814 = vmatprep.subr.mxu0 0.0
  %1815 = vmatpush1.msra.mxu0 0.0
  %1816 = vmatprep.subr.mxu0 0.0
  %1817 = vmatpush1.msra.mxu0 0.0
  %1818 = vmatprep.mubr.f32.mxu0 0.0
  %1819 = vmatmul.mubr.f32.gmra.mrb[0].mxu0 %v1742
  %v1820 = vpop.f32.mrb[0].mxu0
  %v1821 = vadd.f32 %v1728, %v1820
  %v1822 = vpop.f32.mrb[0].mxu0
  %v1823 = vadd.f32 %v1732, %v1822
  %1824 = vdwg.mxu0
  %1825 = vmatprep.subr.mxu0 0.0
  %1826 = vmatpush1.msra.mxu0 %v1719
  %1827 = vmatprep.subr.mxu0 0.0
  %1828 = vmatpush1.msra.mxu0 %v1752
  %1829 = vmatprep.subr.mxu0 0.0
  %1830 = vmatpush1.msra.mxu0 0.0
  %1831 = vmatprep.subr.mxu0 0.0
  %1832 = vmatpush1.msra.mxu0 0.0
  %1833 = vmatprep.subr.mxu0 0.0
  %1834 = vmatpush1.msra.mxu0 0.0
  %1835 = vmatprep.subr.mxu0 0.0
  %1836 = vmatpush1.msra.mxu0 0.0
  %1837 = vmatprep.subr.mxu0 0.0
  %1838 = vmatpush1.msra.mxu0 0.0
  %1839 = vmatprep.subr.mxu0 0.0
  %1840 = vmatpush1.msra.mxu0 0.0
  %1841 = vmatprep.subr.mxu0 0.0
  %1842 = vmatpush1.msra.mxu0 0.0
  %1843 = vmatprep.subr.mxu0 0.0
  %1844 = vmatpush1.msra.mxu0 0.0
  %1845 = vmatprep.subr.mxu0 0.0
  %1846 = vmatpush1.msra.mxu0 0.0
  %1847 = vmatprep.subr.mxu0 0.0
  %1848 = vmatpush1.msra.mxu0 0.0
  %1849 = vmatprep.subr.mxu0 0.0
  %1850 = vmatpush1.msra.mxu0 0.0
  %1851 = vmatprep.subr.mxu0 0.0
  %1852 = vmatpush1.msra.mxu0 0.0
  %1853 = vmatprep.subr.mxu0 0.0
  %1854 = vmatpush1.msra.mxu0 0.0
  %1855 = vmatprep.subr.mxu0 0.0
  %1856 = vmatpush1.msra.mxu0 0.0
  %1857 = vmatprep.subr.mxu0 0.0
  %1858 = vmatpush1.msra.mxu0 0.0
  %1859 = vmatprep.subr.mxu0 0.0
  %1860 = vmatpush1.msra.mxu0 0.0
  %1861 = vmatprep.subr.mxu0 0.0
  %1862 = vmatpush1.msra.mxu0 0.0
  %1863 = vmatprep.subr.mxu0 0.0
  %1864 = vmatpush1.msra.mxu0 0.0
  %1865 = vmatprep.subr.mxu0 0.0
  %1866 = vmatpush1.msra.mxu0 0.0
  %1867 = vmatprep.subr.mxu0 0.0
  %1868 = vmatpush1.msra.mxu0 0.0
  %1869 = vmatprep.subr.mxu0 0.0
  %1870 = vmatpush1.msra.mxu0 0.0
  %1871 = vmatprep.subr.mxu0 0.0
  %1872 = vmatpush1.msra.mxu0 0.0
  %1873 = vmatprep.subr.mxu0 0.0
  %1874 = vmatpush1.msra.mxu0 0.0
  %1875 = vmatprep.subr.mxu0 0.0
  %1876 = vmatpush1.msra.mxu0 0.0
  %1877 = vmatprep.subr.mxu0 0.0
  %1878 = vmatpush1.msra.mxu0 0.0
  %1879 = vmatprep.subr.mxu0 0.0
  %1880 = vmatpush1.msra.mxu0 0.0
  %1881 = vmatprep.subr.mxu0 0.0
  %1882 = vmatpush1.msra.mxu0 0.0
  %1883 = vmatprep.subr.mxu0 0.0
  %1884 = vmatpush1.msra.mxu0 0.0
  %1885 = vmatprep.subr.mxu0 0.0
  %1886 = vmatpush1.msra.mxu0 0.0
  %1887 = vmatprep.subr.mxu0 0.0
  %1888 = vmatpush1.msra.mxu0 0.0
  %1889 = vmatprep.mubr.f32.mxu0 0.0
  %1890 = vmatmul.mubr.f32.gmra.mrb[0].mxu0 %v1742
  %v1891 = vpop.f32.mrb[0].mxu0
  %v1892 = vadd.f32 %v1736, %v1891
  %v1893 = vpop.f32.mrb[0].mxu0
  %1894 = vdwg.mxu0
  %v1895 = vmul.f32 %v1821, %v1823
  %vm1896 = vcmask 517120
  %v1897 = vsel %vm1896, %v1895, 0.0
  %1898 = vadd.xlane.f32.xlu0 %v1897
  %v1899 = vpop.xlane.xlu0 %1898
  %v1900 = vrcp.pop 8.0
  %v1901 = vmul.f32 %v1899, %v1900
  %v1902 = vand.u32 2147483647, %v1901
  %vm1903 = vcmp.eq.f32.partialorder %v1902, inf
  %v1904 = vsel %vm1903, 0.0, %v1901
  %v1905 = vsub.f32 %v1904, %v1904
  %v1906 = vmul.f32 %v1905, 1.442695
  %v1907 = vpow.pop %v1906
  %v1908 = vand.u32 2147483647, %v1904
  %vm1909 = vcmp.lt.f32.partialorder %v1908, inf
  %v1910 = vsel %vm1909, 1, 0
  %v1911 = vcvt.s32.f32 %v1910
  %v1912 = vmul.f32 %v1907, %v1911
  %v1913 = vmul.f32 %v1912, %v1892
  %v1914 = vld [vmem:[%s19] sm:$0xff]
  %v1915 = vld [vmem:[%s19 + $0x8] sm:$0xff]
  %v1916 = vld [vmem:[%s19 + $0x10] sm:$0xff]
  %v1917 = vld [vmem:[%s19 + $0x18] sm:$0x1]
  %v1918 = vld [vmem:[%s19 + $0x20] sm:$0x1]
  %v1919 = vld [vmem:[%s19 + $0x28] sm:$0x1]
  %v1920 = vld [vmem:[%s20] sm:$0x7]
  %v1922 = vlaneseq
  %v1923 = vshrl.u32 %v1922, 7
  %v1924 = vsub.s32 0, %v1923
  %v1925 = vrot.slane %v1920, %v1924
  %v1926 = vlaneseq
  %v1927 = vshrl.u32 %v1926, 7
  %v1928 = vsub.s32 1, %v1927
  %v1929 = vrot.slane %v1920, %v1928
  %v1930 = vlaneseq
  %v1931 = vshrl.u32 %v1930, 7
  %v1932 = vsub.s32 2, %v1931
  %v1933 = vrot.slane %v1920, %v1932
  %v1938 = vsel %vm1744, %v1917, 0
  %v1941 = vsel %vm1744, %v1918, 0
  %v1944 = vsel %vm1744, %v1919, 0
  %1946 = vmatprep.subr.mxu0 %v1915
  %1947 = vmatpush1.msra.mxu0 %v1914
  %1948 = vmatprep.subr.mxu0 %v1941
  %1949 = vmatpush1.msra.mxu0 %v1938
  %1950 = vmatprep.subr.mxu0 0.0
  %1951 = vmatpush1.msra.mxu0 0.0
  %1952 = vmatprep.subr.mxu0 0.0
  %1953 = vmatpush1.msra.mxu0 0.0
  %1954 = vmatprep.subr.mxu0 0.0
  %1955 = vmatpush1.msra.mxu0 0.0
  %1956 = vmatprep.subr.mxu0 0.0
  %1957 = vmatpush1.msra.mxu0 0.0
  %1958 = vmatprep.subr.mxu0 0.0
  %1959 = vmatpush1.msra.mxu0 0.0
  %1960 = vmatprep.subr.mxu0 0.0
  %1961 = vmatpush1.msra.mxu0 0.0
  %1962 = vmatprep.subr.mxu0 0.0
  %1963 = vmatpush1.msra.mxu0 0.0
  %1964 = vmatprep.subr.mxu0 0.0
  %1965 = vmatpush1.msra.mxu0 0.0
  %1966 = vmatprep.subr.mxu0 0.0
  %1967 = vmatpush1.msra.mxu0 0.0
  %1968 = vmatprep.subr.mxu0 0.0
  %1969 = vmatpush1.msra.mxu0 0.0
  %1970 = vmatprep.subr.mxu0 0.0
  %1971 = vmatpush1.msra.mxu0 0.0
  %1972 = vmatprep.subr.mxu0 0.0
  %1973 = vmatpush1.msra.mxu0 0.0
  %1974 = vmatprep.subr.mxu0 0.0
  %1975 = vmatpush1.msra.mxu0 0.0
  %1976 = vmatprep.subr.mxu0 0.0
  %1977 = vmatpush1.msra.mxu0 0.0
  %1978 = vmatprep.subr.mxu0 0.0
  %1979 = vmatpush1.msra.mxu0 0.0
  %1980 = vmatprep.subr.mxu0 0.0
  %1981 = vmatpush1.msra.mxu0 0.0
  %1982 = vmatprep.subr.mxu0 0.0
  %1983 = vmatpush1.msra.mxu0 0.0
  %1984 = vmatprep.subr.mxu0 0.0
  %1985 = vmatpush1.msra.mxu0 0.0
  %1986 = vmatprep.subr.mxu0 0.0
  %1987 = vmatpush1.msra.mxu0 0.0
  %1988 = vmatprep.subr.mxu0 0.0
  %1989 = vmatpush1.msra.mxu0 0.0
  %1990 = vmatprep.subr.mxu0 0.0
  %1991 = vmatpush1.msra.mxu0 0.0
  %1992 = vmatprep.subr.mxu0 0.0
  %1993 = vmatpush1.msra.mxu0 0.0
  %1994 = vmatprep.subr.mxu0 0.0
  %1995 = vmatpush1.msra.mxu0 0.0
  %1996 = vmatprep.subr.mxu0 0.0
  %1997 = vmatpush1.msra.mxu0 0.0
  %1998 = vmatprep.subr.mxu0 0.0
  %1999 = vmatpush1.msra.mxu0 0.0
  %2000 = vmatprep.subr.mxu0 0.0
  %2001 = vmatpush1.msra.mxu0 0.0
  %2002 = vmatprep.subr.mxu0 0.0
  %2003 = vmatpush1.msra.mxu0 0.0
  %2004 = vmatprep.subr.mxu0 0.0
  %2005 = vmatpush1.msra.mxu0 0.0
  %2006 = vmatprep.subr.mxu0 0.0
  %2007 = vmatpush1.msra.mxu0 0.0
  %2008 = vmatprep.subr.mxu0 0.0
  %2009 = vmatpush1.msra.mxu0 0.0
  %2010 = vmatprep.mubr.f32.mxu0 0.0
  %2011 = vmatmul.mubr.f32.gmra.mrb[0].mxu0 %v1742
  %v2012 = vpop.f32.mrb[0].mxu0
  %v2013 = vadd.f32 %v1925, %v2012
  %v2014 = vpop.f32.mrb[0].mxu0
  %v2015 = vadd.f32 %v1929, %v2014
  %2016 = vdwg.mxu0
  %2017 = vmatprep.subr.mxu0 0.0
  %2018 = vmatpush1.msra.mxu0 %v1916
  %2019 = vmatprep.subr.mxu0 0.0
  %2020 = vmatpush1.msra.mxu0 %v1944
  %2021 = vmatprep.subr.mxu0 0.0
  %2022 = vmatpush1.msra.mxu0 0.0
  %2023 = vmatprep.subr.mxu0 0.0
  %2024 = vmatpush1.msra.mxu0 0.0
  %2025 = vmatprep.subr.mxu0 0.0
  %2026 = vmatpush1.msra.mxu0 0.0
  %2027 = vmatprep.subr.mxu0 0.0
  %2028 = vmatpush1.msra.mxu0 0.0
  %2029 = vmatprep.subr.mxu0 0.0
  %2030 = vmatpush1.msra.mxu0 0.0
  %2031 = vmatprep.subr.mxu0 0.0
  %2032 = vmatpush1.msra.mxu0 0.0
  %2033 = vmatprep.subr.mxu0 0.0
  %2034 = vmatpush1.msra.mxu0 0.0
  %2035 = vmatprep.subr.mxu0 0.0
  %2036 = vmatpush1.msra.mxu0 0.0
  %2037 = vmatprep.subr.mxu0 0.0
  %2038 = vmatpush1.msra.mxu0 0.0
  %2039 = vmatprep.subr.mxu0 0.0
  %2040 = vmatpush1.msra.mxu0 0.0
  %2041 = vmatprep.subr.mxu0 0.0
  %2042 = vmatpush1.msra.mxu0 0.0
  %2043 = vmatprep.subr.mxu0 0.0
  %2044 = vmatpush1.msra.mxu0 0.0
  %2045 = vmatprep.subr.mxu0 0.0
  %2046 = vmatpush1.msra.mxu0 0.0
  %2047 = vmatprep.subr.mxu0 0.0
  %2048 = vmatpush1.msra.mxu0 0.0
  %2049 = vmatprep.subr.mxu0 0.0
  %2050 = vmatpush1.msra.mxu0 0.0
  %2051 = vmatprep.subr.mxu0 0.0
  %2052 = vmatpush1.msra.mxu0 0.0
  %2053 = vmatprep.subr.mxu0 0.0
  %2054 = vmatpush1.msra.mxu0 0.0
  %2055 = vmatprep.subr.mxu0 0.0
  %2056 = vmatpush1.msra.mxu0 0.0
  %2057 = vmatprep.subr.mxu0 0.0
  %2058 = vmatpush1.msra.mxu0 0.0
  %2059 = vmatprep.subr.mxu0 0.0
  %2060 = vmatpush1.msra.mxu0 0.0
  %2061 = vmatprep.subr.mxu0 0.0
  %2062 = vmatpush1.msra.mxu0 0.0
  %2063 = vmatprep.subr.mxu0 0.0
  %2064 = vmatpush1.msra.mxu0 0.0
  %2065 = vmatprep.subr.mxu0 0.0
  %2066 = vmatpush1.msra.mxu0 0.0
  %2067 = vmatprep.subr.mxu0 0.0
  %2068 = vmatpush1.msra.mxu0 0.0
  %2069 = vmatprep.subr.mxu0 0.0
  %2070 = vmatpush1.msra.mxu0 0.0
  %2071 = vmatprep.subr.mxu0 0.0
  %2072 = vmatpush1.msra.mxu0 0.0
  %2073 = vmatprep.subr.mxu0 0.0
  %2074 = vmatpush1.msra.mxu0 0.0
  %2075 = vmatprep.subr.mxu0 0.0
  %2076 = vmatpush1.msra.mxu0 0.0
  %2077 = vmatprep.subr.mxu0 0.0
  %2078 = vmatpush1.msra.mxu0 0.0
  %2079 = vmatprep.subr.mxu0 0.0
  %2080 = vmatpush1.msra.mxu0 0.0
  %2081 = vmatprep.mubr.f32.mxu0 0.0
  %2082 = vmatmul.mubr.f32.gmra.mrb[0].mxu0 %v1742
  %v2083 = vpop.f32.mrb[0].mxu0
  %v2084 = vadd.f32 %v1933, %v2083
  %v2085 = vpop.f32.mrb[0].mxu0
  %2086 = vdwg.mxu0
  %v2087 = vmul.f32 %v2013, %v2015
  %v2088 = vsel %vm1896, %v2087, 0.0
  %2089 = vadd.xlane.f32.xlu0 %v2088
  %v2090 = vpop.xlane.xlu0 %2089
  %v2091 = vmul.f32 %v2090, %v1900
  %v2092 = vand.u32 2147483647, %v2091
  %vm2093 = vcmp.eq.f32.partialorder %v2092, inf
  %v2094 = vsel %vm2093, 0.0, %v2091
  %v2095 = vsub.f32 %v2094, %v2094
  %v2096 = vmul.f32 %v2095, 1.442695
  %v2097 = vpow.pop %v2096
  %v2098 = vand.u32 2147483647, %v2094
  %vm2099 = vcmp.lt.f32.partialorder %v2098, inf
  %v2100 = vsel %vm2099, 1, 0
  %v2101 = vcvt.s32.f32 %v2100
  %v2102 = vmul.f32 %v2097, %v2101
  %v2103 = vmul.f32 %v2102, %v2084
  %v2112 = vcombine.low %v482, %v484
  %v2113 = vcombine.low %v553, %v555
  %v2115 = vunpack.c.l.s4 1983009808
  %v2116 = vunpack.c.0.s8 %v2115
  %v2117 = vlaneseq
  %v2118 = vshrl.u32 %v2117, 7
  %v2119 = vsub.s32 %v2116, %v2118
  %v2120 = vrot.slane %v2112, %v2119
  %v2122 = vunpack.c.l.s4 1983009808
  %v2123 = vunpack.c.0.s8 %v2122
  %v2124 = vlaneseq
  %v2125 = vshrl.u32 %v2124, 7
  %v2126 = vsub.s32 %v2123, %v2125
  %v2127 = vrot.slane %v2113, %v2126
  %v2128 = vcombine.low %v2120, %v2127
  %v2129 = vcombine.low %v624, %v626
  %v2130 = vcombine.low %v695, %v697
  %v2132 = vunpack.c.l.s4 1983009808
  %v2133 = vunpack.c.0.s8 %v2132
  %v2134 = vlaneseq
  %v2135 = vshrl.u32 %v2134, 7
  %v2136 = vsub.s32 %v2133, %v2135
  %v2137 = vrot.slane %v2129, %v2136
  %v2139 = vunpack.c.l.s4 1983009808
  %v2140 = vunpack.c.0.s8 %v2139
  %v2141 = vlaneseq
  %v2142 = vshrl.u32 %v2141, 7
  %v2143 = vsub.s32 %v2140, %v2142
  %v2144 = vrot.slane %v2130, %v2143
  %v2145 = vcombine.low %v2137, %v2144
  %2148 = vst [vmem:[%s25] sm:$0xff] %v2128
  %vm2149 = vcmask 1043458
  %vm2150 = vmor %vm2149, %vm1228
  %vm2151 = vcmask 1045508
  %vm2152 = vmor %vm2151, %vm2150
  %vm2153 = vcmask 31750
  %vm2154 = vmor %vm2153, %vm2152
  %2155 = vst.msk [vmem:[%s25 + $0x8] sm:$0xff] %vm2154, %v2145
  %v2156 = vld [vmem:[%s22] sm:$0xff]
  %v2157 = vld [vmem:[%s22 + $0x8] sm:$0xff]
  %v2158 = vld [vmem:[%s22 + $0x10] sm:$0xff]
  %v2159 = vld [vmem:[%s22 + $0x18] sm:$0xff]
  %v2160 = vld [vmem:[%s22 + $0x20] sm:$0xff]
  %v2161 = vld [vmem:[%s22 + $0x28] sm:$0xff]
  %v2162 = vld [vmem:[%s22 + $0x30] sm:$0xff]
  %v2163 = vld [vmem:[%s22 + $0x38] sm:$0xff]
  %v2164 = vld [vmem:[%s22 + $0x40] sm:$0xff]
  %v2165 = vld [vmem:[%s22 + $0x48] sm:$0xff]
  %v2166 = vld [vmem:[%s22 + $0x50] sm:$0xff]
  %v2167 = vld [vmem:[%s22 + $0x58] sm:$0xff]
  %v2168 = vld [vmem:[%s22 + $0x60] sm:$0xff]
  %v2169 = vld [vmem:[%s22 + $0x68] sm:$0xff]
  %v2170 = vld [vmem:[%s22 + $0x70] sm:$0xff]
  %v2171 = vld [vmem:[%s22 + $0x78] sm:$0xff]
  %v2172 = vld [vmem:[%s22 + $0x80] sm:$0xff]
  %v2173 = vld [vmem:[%s22 + $0x88] sm:$0xff]
  %v2174 = vld [vmem:[%s22 + $0x90] sm:$0xff]
  %v2175 = vld [vmem:[%s22 + $0x98] sm:$0xff]
  %v2176 = vld [vmem:[%s22 + $0xa0] sm:$0xff]
  %v2177 = vld [vmem:[%s22 + $0xa8] sm:$0xff]
  %v2178 = vld [vmem:[%s22 + $0xb0] sm:$0xff]
  %v2179 = vld [vmem:[%s22 + $0xb8] sm:$0xff]
  %v2180 = vld [vmem:[%s22 + $0xc0] sm:$0xff]
  %v2181 = vld [vmem:[%s22 + $0xc8] sm:$0xff]
  %v2182 = vld [vmem:[%s22 + $0xd0] sm:$0xff]
  %v2183 = vld [vmem:[%s22 + $0xd8] sm:$0xff]
  %v2184 = vld [vmem:[%s22 + $0xe0] sm:$0xff]
  %v2185 = vld [vmem:[%s22 + $0xe8] sm:$0xff]
  %v2186 = vld [vmem:[%s22 + $0xf0] sm:$0xff]
  %v2187 = vld [vmem:[%s22 + $0xf8] sm:$0xff]
  %v2188 = vld [vmem:[%s22 + $0x100] sm:$0xff]
  %v2189 = vld [vmem:[%s22 + $0x108] sm:$0xff]
  %v2190 = vld [vmem:[%s22 + $0x110] sm:$0xff]
  %v2191 = vld [vmem:[%s22 + $0x118] sm:$0xff]
  %v2192 = vld [vmem:[%s22 + $0x120] sm:$0xff]
  %v2193 = vld [vmem:[%s22 + $0x128] sm:$0xff]
  %v2194 = vld [vmem:[%s22 + $0x130] sm:$0xff]
  %v2195 = vld [vmem:[%s22 + $0x138] sm:$0xff]
  %v2196 = vld [vmem:[%s22 + $0x140] sm:$0xff]
  %v2197 = vld [vmem:[%s22 + $0x148] sm:$0xff]
  %v2198 = vld [vmem:[%s22 + $0x150] sm:$0xff]
  %v2199 = vld [vmem:[%s22 + $0x158] sm:$0xff]
  %v2200 = vld [vmem:[%s22 + $0x160] sm:$0xff]
  %v2201 = vld [vmem:[%s22 + $0x168] sm:$0xff]
  %v2202 = vld [vmem:[%s22 + $0x170] sm:$0xff]
  %v2203 = vld [vmem:[%s22 + $0x178] sm:$0xff]
  %v2204 = vld [vmem:[%s22 + $0x180] sm:$0x7f]
  %v2205 = vld [vmem:[%s22 + $0x188] sm:$0x7f]
  %v2206 = vld [vmem:[%s22 + $0x190] sm:$0x7f]
  %v2207 = vld [vmem:[%s22 + $0x198] sm:$0x7f]
  %v2208 = vld [vmem:[%s22 + $0x1a0] sm:$0x7f]
  %v2209 = vld [vmem:[%s22 + $0x1a8] sm:$0x7f]
  %v2210 = vld [vmem:[%s22 + $0x1b0] sm:$0x7f]
  %v2211 = vld [vmem:[%s22 + $0x1b8] sm:$0x7f]
  %v2212 = vld [vmem:[%s24] sm:$0xff]
  %v2213 = vld [vmem:[%s24 + $0x8] sm:$0xff]
  %v2214 = vld [vmem:[%s24 + $0x10] sm:$0xff]
  %v2215 = vld [vmem:[%s24 + $0x18] sm:$0xff]
  %v2216 = vld [vmem:[%s24 + $0x20] sm:$0xff]
  %v2217 = vld [vmem:[%s24 + $0x28] sm:$0xff]
  %v2218 = vld [vmem:[%s24 + $0x30] sm:$0xff]
  %v2219 = vld [vmem:[%s24 + $0x38] sm:$0xff]
  %v2220 = vld [vmem:[%s24 + $0x40] sm:$0xff]
  %v2221 = vld [vmem:[%s24 + $0x48] sm:$0xff]
  %v2222 = vld [vmem:[%s24 + $0x50] sm:$0xff]
  %v2223 = vld [vmem:[%s24 + $0x58] sm:$0xff]
  %v2224 = vld [vmem:[%s24 + $0x60] sm:$0xff]
  %v2225 = vld [vmem:[%s24 + $0x68] sm:$0xff]
  %v2226 = vld [vmem:[%s24 + $0x70] sm:$0xff]
  %v2227 = vld [vmem:[%s24 + $0x78] sm:$0xff]
  %v2228 = vld [vmem:[%s24 + $0x80] sm:$0xff]
  %v2229 = vld [vmem:[%s24 + $0x88] sm:$0xff]
  %v2230 = vld [vmem:[%s24 + $0x90] sm:$0xff]
  %v2231 = vld [vmem:[%s24 + $0x98] sm:$0xff]
  %v2232 = vld [vmem:[%s24 + $0xa0] sm:$0xff]
  %v2233 = vld [vmem:[%s24 + $0xa8] sm:$0xff]
  %v2234 = vld [vmem:[%s24 + $0xb0] sm:$0xff]
  %v2235 = vld [vmem:[%s24 + $0xb8] sm:$0xff]
  %v2236 = vld [vmem:[%s24 + $0xc0] sm:$0xff]
  %v2237 = vld [vmem:[%s24 + $0xc8] sm:$0xff]
  %v2238 = vld [vmem:[%s24 + $0xd0] sm:$0xff]
  %v2239 = vld [vmem:[%s24 + $0xd8] sm:$0xff]
  %v2240 = vld [vmem:[%s24 + $0xe0] sm:$0xff]
  %v2241 = vld [vmem:[%s24 + $0xe8] sm:$0xff]
  %v2242 = vld [vmem:[%s24 + $0xf0] sm:$0xff]
  %v2243 = vld [vmem:[%s24 + $0xf8] sm:$0xff]
  %v2244 = vld [vmem:[%s24 + $0x100] sm:$0xff]
  %v2245 = vld [vmem:[%s24 + $0x108] sm:$0xff]
  %v2246 = vld [vmem:[%s24 + $0x110] sm:$0xff]
  %v2247 = vld [vmem:[%s24 + $0x118] sm:$0xff]
  %v2248 = vld [vmem:[%s24 + $0x120] sm:$0xff]
  %v2249 = vld [vmem:[%s24 + $0x128] sm:$0xff]
  %v2250 = vld [vmem:[%s24 + $0x130] sm:$0xff]
  %v2251 = vld [vmem:[%s24 + $0x138] sm:$0xff]
  %v2252 = vld [vmem:[%s24 + $0x140] sm:$0xff]
  %v2253 = vld [vmem:[%s24 + $0x148] sm:$0xff]
  %v2254 = vld [vmem:[%s24 + $0x150] sm:$0xff]
  %v2255 = vld [vmem:[%s24 + $0x158] sm:$0xff]
  %v2256 = vld [vmem:[%s24 + $0x160] sm:$0xff]
  %v2257 = vld [vmem:[%s24 + $0x168] sm:$0xff]
  %v2258 = vld [vmem:[%s24 + $0x170] sm:$0xff]
  %v2259 = vld [vmem:[%s24 + $0x178] sm:$0xff]
  %v2260 = vld [vmem:[%s24 + $0x180] sm:$0xff]
  %v2261 = vld [vmem:[%s24 + $0x188] sm:$0xff]
  %v2262 = vld [vmem:[%s24 + $0x190] sm:$0xff]
  %v2263 = vld [vmem:[%s24 + $0x198] sm:$0xff]
  %v2264 = vld [vmem:[%s24 + $0x1a0] sm:$0xff]
  %v2265 = vld [vmem:[%s24 + $0x1a8] sm:$0xff]
  %v2266 = vld [vmem:[%s24 + $0x1b0] sm:$0xff]
  %v2267 = vld [vmem:[%s24 + $0x1b8] sm:$0xff]
  %v2268 = vld [vmem:[%s24 + $0x1c0] sm:$0xff]
  %v2269 = vld [vmem:[%s24 + $0x1c8] sm:$0xff]
  %v2270 = vld [vmem:[%s24 + $0x1d0] sm:$0xff]
  %v2271 = vld [vmem:[%s24 + $0x1d8] sm:$0xff]
  %v2272 = vld [vmem:[%s24 + $0x1e0] sm:$0xff]
  %v2273 = vld [vmem:[%s24 + $0x1e8] sm:$0xff]
  %v2274 = vld [vmem:[%s24 + $0x1f0] sm:$0xff]
  %v2275 = vld [vmem:[%s24 + $0x1f8] sm:$0xff]
  %v2276 = vld [vmem:[%s24 + $0x200] sm:$0xff]
  %v2277 = vld [vmem:[%s24 + $0x208] sm:$0xff]
  %v2278 = vld [vmem:[%s24 + $0x210] sm:$0xff]
  %v2279 = vld [vmem:[%s24 + $0x218] sm:$0xff]
  %v2280 = vld [vmem:[%s24 + $0x220] sm:$0xff]
  %v2281 = vld [vmem:[%s24 + $0x228] sm:$0xff]
  %v2282 = vld [vmem:[%s24 + $0x230] sm:$0xff]
  %v2283 = vld [vmem:[%s24 + $0x238] sm:$0xff]
  %v2284 = vld [vmem:[%s24 + $0x240] sm:$0x3f]
  %v2285 = vld [vmem:[%s24 + $0x248] sm:$0x3f]
  %v2286 = vld [vmem:[%s24 + $0x250] sm:$0x3f]
  %v2287 = vld [vmem:[%s24 + $0x258] sm:$0x3f]
  %v2288 = vld [vmem:[%s24 + $0x260] sm:$0x3f]
  %v2289 = vld [vmem:[%s24 + $0x268] sm:$0x3f]
  %v2290 = vld [vmem:[%s24 + $0x270] sm:$0x3f]
  %v2291 = vld [vmem:[%s24 + $0x278] sm:$0x3f]
  %vm2292 = vcmask 637952
  %v2294 = vsel %vm2292, %v2103, 0
  %vm2296 = vcmask 1045504
  %v2298 = vsel %vm2296, %v2284, 0
  %v2301 = vsel %vm2296, %v2285, 0
  %v2304 = vsel %vm2296, %v2286, 0
  %v2307 = vsel %vm2296, %v2287, 0
  %v2310 = vsel %vm2296, %v2288, 0
  %v2313 = vsel %vm2296, %v2289, 0
  %v2316 = vsel %vm2296, %v2290, 0
  %v2319 = vsel %vm2296, %v2291, 0
  %2321 = vmatprep.subr.mxu0 %v2213
  %2322 = vmatpush1.msra.mxu0 %v2212
  %2323 = vmatprep.subr.mxu0 %v2221
  %2324 = vmatpush1.msra.mxu0 %v2220
  %2325 = vmatprep.subr.mxu0 %v2229
  %2326 = vmatpush1.msra.mxu0 %v2228
  %2327 = vmatprep.subr.mxu0 %v2237
  %2328 = vmatpush1.msra.mxu0 %v2236
  %2329 = vmatprep.subr.mxu0 %v2245
  %2330 = vmatpush1.msra.mxu0 %v2244
  %2331 = vmatprep.subr.mxu0 %v2253
  %2332 = vmatpush1.msra.mxu0 %v2252
  %2333 = vmatprep.subr.mxu0 %v2261
  %2334 = vmatpush1.msra.mxu0 %v2260
  %2335 = vmatprep.subr.mxu0 %v2269
  %2336 = vmatpush1.msra.mxu0 %v2268
  %2337 = vmatprep.subr.mxu0 %v2277
  %2338 = vmatpush1.msra.mxu0 %v2276
  %2339 = vmatprep.subr.mxu0 %v2301
  %2340 = vmatpush1.msra.mxu0 %v2298
  %2341 = vmatprep.subr.mxu0 0.0
  %2342 = vmatpush1.msra.mxu0 0.0
  %2343 = vmatprep.subr.mxu0 0.0
  %2344 = vmatpush1.msra.mxu0 0.0
  %2345 = vmatprep.subr.mxu0 0.0
  %2346 = vmatpush1.msra.mxu0 0.0
  %2347 = vmatprep.subr.mxu0 0.0
  %2348 = vmatpush1.msra.mxu0 0.0
  %2349 = vmatprep.subr.mxu0 0.0
  %2350 = vmatpush1.msra.mxu0 0.0
  %2351 = vmatprep.subr.mxu0 0.0
  %2352 = vmatpush1.msra.mxu0 0.0
  %2353 = vmatprep.subr.mxu0 0.0
  %2354 = vmatpush1.msra.mxu0 0.0
  %2355 = vmatprep.subr.mxu0 0.0
  %2356 = vmatpush1.msra.mxu0 0.0
  %2357 = vmatprep.subr.mxu0 0.0
  %2358 = vmatpush1.msra.mxu0 0.0
  %2359 = vmatprep.subr.mxu0 0.0
  %2360 = vmatpush1.msra.mxu0 0.0
  %2361 = vmatprep.subr.mxu0 0.0
  %2362 = vmatpush1.msra.mxu0 0.0
  %2363 = vmatprep.subr.mxu0 0.0
  %2364 = vmatpush1.msra.mxu0 0.0
  %2365 = vmatprep.subr.mxu0 0.0
  %2366 = vmatpush1.msra.mxu0 0.0
  %2367 = vmatprep.subr.mxu0 0.0
  %2368 = vmatpush1.msra.mxu0 0.0
  %2369 = vmatprep.subr.mxu0 0.0
  %2370 = vmatpush1.msra.mxu0 0.0
  %2371 = vmatprep.subr.mxu0 0.0
  %2372 = vmatpush1.msra.mxu0 0.0
  %2373 = vmatprep.subr.mxu0 0.0
  %2374 = vmatpush1.msra.mxu0 0.0
  %2375 = vmatprep.subr.mxu0 0.0
  %2376 = vmatpush1.msra.mxu0 0.0
  %2377 = vmatprep.subr.mxu0 0.0
  %2378 = vmatpush1.msra.mxu0 0.0
  %2379 = vmatprep.subr.mxu0 0.0
  %2380 = vmatpush1.msra.mxu0 0.0
  %2381 = vmatprep.subr.mxu0 0.0
  %2382 = vmatpush1.msra.mxu0 0.0
  %2383 = vmatprep.subr.mxu0 0.0
  %2384 = vmatpush1.msra.mxu0 0.0
  %2385 = vmatprep.mubr.f32.mxu0 0.0
  %2386 = vmatmul.mubr.f32.gmra.mrb[0].mxu0 %v2294
  %v2387 = vpop.f32.mrb[0].mxu0
  %v2388 = vadd.f32 0.0, %v2387
  %v2389 = vpop.f32.mrb[0].mxu0
  %v2390 = vadd.f32 0.0, %v2389
  %2391 = vdwg.mxu0
  %2392 = vmatprep.subr.mxu0 %v2215
  %2393 = vmatpush1.msra.mxu0 %v2214
  %2394 = vmatprep.subr.mxu0 %v2223
  %2395 = vmatpush1.msra.mxu0 %v2222
  %2396 = vmatprep.subr.mxu0 %v2231
  %2397 = vmatpush1.msra.mxu0 %v2230
  %2398 = vmatprep.subr.mxu0 %v2239
  %2399 = vmatpush1.msra.mxu0 %v2238
  %2400 = vmatprep.subr.mxu0 %v2247
  %2401 = vmatpush1.msra.mxu0 %v2246
  %2402 = vmatprep.subr.mxu0 %v2255
  %2403 = vmatpush1.msra.mxu0 %v2254
  %2404 = vmatprep.subr.mxu0 %v2263
  %2405 = vmatpush1.msra.mxu0 %v2262
  %2406 = vmatprep.subr.mxu0 %v2271
  %2407 = vmatpush1.msra.mxu0 %v2270
  %2408 = vmatprep.subr.mxu0 %v2279
  %2409 = vmatpush1.msra.mxu0 %v2278
  %2410 = vmatprep.subr.mxu0 %v2307
  %2411 = vmatpush1.msra.mxu0 %v2304
  %2412 = vmatprep.subr.mxu0 0.0
  %2413 = vmatpush1.msra.mxu0 0.0
  %2414 = vmatprep.subr.mxu0 0.0
  %2415 = vmatpush1.msra.mxu0 0.0
  %2416 = vmatprep.subr.mxu0 0.0
  %2417 = vmatpush1.msra.mxu0 0.0
  %2418 = vmatprep.subr.mxu0 0.0
  %2419 = vmatpush1.msra.mxu0 0.0
  %2420 = vmatprep.subr.mxu0 0.0
  %2421 = vmatpush1.msra.mxu0 0.0
  %2422 = vmatprep.subr.mxu0 0.0
  %2423 = vmatpush1.msra.mxu0 0.0
  %2424 = vmatprep.subr.mxu0 0.0
  %2425 = vmatpush1.msra.mxu0 0.0
  %2426 = vmatprep.subr.mxu0 0.0
  %2427 = vmatpush1.msra.mxu0 0.0
  %2428 = vmatprep.subr.mxu0 0.0
  %2429 = vmatpush1.msra.mxu0 0.0
  %2430 = vmatprep.subr.mxu0 0.0
  %2431 = vmatpush1.msra.mxu0 0.0
  %2432 = vmatprep.subr.mxu0 0.0
  %2433 = vmatpush1.msra.mxu0 0.0
  %2434 = vmatprep.subr.mxu0 0.0
  %2435 = vmatpush1.msra.mxu0 0.0
  %2436 = vmatprep.subr.mxu0 0.0
  %2437 = vmatpush1.msra.mxu0 0.0
  %2438 = vmatprep.subr.mxu0 0.0
  %2439 = vmatpush1.msra.mxu0 0.0
  %2440 = vmatprep.subr.mxu0 0.0
  %2441 = vmatpush1.msra.mxu0 0.0
  %2442 = vmatprep.subr.mxu0 0.0
  %2443 = vmatpush1.msra.mxu0 0.0
  %2444 = vmatprep.subr.mxu0 0.0
  %2445 = vmatpush1.msra.mxu0 0.0
  %2446 = vmatprep.subr.mxu0 0.0
  %2447 = vmatpush1.msra.mxu0 0.0
  %2448 = vmatprep.subr.mxu0 0.0
  %2449 = vmatpush1.msra.mxu0 0.0
  %2450 = vmatprep.subr.mxu0 0.0
  %2451 = vmatpush1.msra.mxu0 0.0
  %2452 = vmatprep.subr.mxu0 0.0
  %2453 = vmatpush1.msra.mxu0 0.0
  %2454 = vmatprep.subr.mxu0 0.0
  %2455 = vmatpush1.msra.mxu0 0.0
  %2456 = vmatprep.mubr.f32.mxu0 0.0
  %2457 = vmatmul.mubr.f32.gmra.mrb[0].mxu0 %v2294
  %v2458 = vpop.f32.mrb[0].mxu0
  %v2459 = vadd.f32 0.0, %v2458
  %v2460 = vpop.f32.mrb[0].mxu0
  %v2461 = vadd.f32 0.0, %v2460
  %2462 = vdwg.mxu0
  %2463 = vmatprep.subr.mxu0 %v2217
  %2464 = vmatpush1.msra.mxu0 %v2216
  %2465 = vmatprep.subr.mxu0 %v2225
  %2466 = vmatpush1.msra.mxu0 %v2224
  %2467 = vmatprep.subr.mxu0 %v2233
  %2468 = vmatpush1.msra.mxu0 %v2232
  %2469 = vmatprep.subr.mxu0 %v2241
  %2470 = vmatpush1.msra.mxu0 %v2240
  %2471 = vmatprep.subr.mxu0 %v2249
  %2472 = vmatpush1.msra.mxu0 %v2248
  %2473 = vmatprep.subr.mxu0 %v2257
  %2474 = vmatpush1.msra.mxu0 %v2256
  %2475 = vmatprep.subr.mxu0 %v2265
  %2476 = vmatpush1.msra.mxu0 %v2264
  %2477 = vmatprep.subr.mxu0 %v2273
  %2478 = vmatpush1.msra.mxu0 %v2272
  %2479 = vmatprep.subr.mxu0 %v2281
  %2480 = vmatpush1.msra.mxu0 %v2280
  %2481 = vmatprep.subr.mxu0 %v2313
  %2482 = vmatpush1.msra.mxu0 %v2310
  %2483 = vmatprep.subr.mxu0 0.0
  %2484 = vmatpush1.msra.mxu0 0.0
  %2485 = vmatprep.subr.mxu0 0.0
  %2486 = vmatpush1.msra.mxu0 0.0
  %2487 = vmatprep.subr.mxu0 0.0
  %2488 = vmatpush1.msra.mxu0 0.0
  %2489 = vmatprep.subr.mxu0 0.0
  %2490 = vmatpush1.msra.mxu0 0.0
  %2491 = vmatprep.subr.mxu0 0.0
  %2492 = vmatpush1.msra.mxu0 0.0
  %2493 = vmatprep.subr.mxu0 0.0
  %2494 = vmatpush1.msra.mxu0 0.0
  %2495 = vmatprep.subr.mxu0 0.0
  %2496 = vmatpush1.msra.mxu0 0.0
  %2497 = vmatprep.subr.mxu0 0.0
  %2498 = vmatpush1.msra.mxu0 0.0
  %2499 = vmatprep.subr.mxu0 0.0
  %2500 = vmatpush1.msra.mxu0 0.0
  %2501 = vmatprep.subr.mxu0 0.0
  %2502 = vmatpush1.msra.mxu0 0.0
  %2503 = vmatprep.subr.mxu0 0.0
  %2504 = vmatpush1.msra.mxu0 0.0
  %2505 = vmatprep.subr.mxu0 0.0
  %2506 = vmatpush1.msra.mxu0 0.0
  %2507 = vmatprep.subr.mxu0 0.0
  %2508 = vmatpush1.msra.mxu0 0.0
  %2509 = vmatprep.subr.mxu0 0.0
  %2510 = vmatpush1.msra.mxu0 0.0
  %2511 = vmatprep.subr.mxu0 0.0
  %2512 = vmatpush1.msra.mxu0 0.0
  %2513 = vmatprep.subr.mxu0 0.0
  %2514 = vmatpush1.msra.mxu0 0.0
  %2515 = vmatprep.subr.mxu0 0.0
  %2516 = vmatpush1.msra.mxu0 0.0
  %2517 = vmatprep.subr.mxu0 0.0
  %2518 = vmatpush1.msra.mxu0 0.0
  %2519 = vmatprep.subr.mxu0 0.0
  %2520 = vmatpush1.msra.mxu0 0.0
  %2521 = vmatprep.subr.mxu0 0.0
  %2522 = vmatpush1.msra.mxu0 0.0
  %2523 = vmatprep.subr.mxu0 0.0
  %2524 = vmatpush1.msra.mxu0 0.0
  %2525 = vmatprep.subr.mxu0 0.0
  %2526 = vmatpush1.msra.mxu0 0.0
  %2527 = vmatprep.mubr.f32.mxu0 0.0
  %2528 = vmatmul.mubr.f32.gmra.mrb[0].mxu0 %v2294
  %v2529 = vpop.f32.mrb[0].mxu0
  %v2530 = vadd.f32 0.0, %v2529
  %v2531 = vpop.f32.mrb[0].mxu0
  %v2532 = vadd.f32 0.0, %v2531
  %2533 = vdwg.mxu0
  %2534 = vmatprep.subr.mxu0 %v2219
  %2535 = vmatpush1.msra.mxu0 %v2218
  %2536 = vmatprep.subr.mxu0 %v2227
  %2537 = vmatpush1.msra.mxu0 %v2226
  %2538 = vmatprep.subr.mxu0 %v2235
  %2539 = vmatpush1.msra.mxu0 %v2234
  %2540 = vmatprep.subr.mxu0 %v2243
  %2541 = vmatpush1.msra.mxu0 %v2242
  %2542 = vmatprep.subr.mxu0 %v2251
  %2543 = vmatpush1.msra.mxu0 %v2250
  %2544 = vmatprep.subr.mxu0 %v2259
  %2545 = vmatpush1.msra.mxu0 %v2258
  %2546 = vmatprep.subr.mxu0 %v2267
  %2547 = vmatpush1.msra.mxu0 %v2266
  %2548 = vmatprep.subr.mxu0 %v2275
  %2549 = vmatpush1.msra.mxu0 %v2274
  %2550 = vmatprep.subr.mxu0 %v2283
  %2551 = vmatpush1.msra.mxu0 %v2282
  %2552 = vmatprep.subr.mxu0 %v2319
  %2553 = vmatpush1.msra.mxu0 %v2316
  %2554 = vmatprep.subr.mxu0 0.0
  %2555 = vmatpush1.msra.mxu0 0.0
  %2556 = vmatprep.subr.mxu0 0.0
  %2557 = vmatpush1.msra.mxu0 0.0
  %2558 = vmatprep.subr.mxu0 0.0
  %2559 = vmatpush1.msra.mxu0 0.0
  %2560 = vmatprep.subr.mxu0 0.0
  %2561 = vmatpush1.msra.mxu0 0.0
  %2562 = vmatprep.subr.mxu0 0.0
  %2563 = vmatpush1.msra.mxu0 0.0
  %2564 = vmatprep.subr.mxu0 0.0
  %2565 = vmatpush1.msra.mxu0 0.0
  %2566 = vmatprep.subr.mxu0 0.0
  %2567 = vmatpush1.msra.mxu0 0.0
  %2568 = vmatprep.subr.mxu0 0.0
  %2569 = vmatpush1.msra.mxu0 0.0
  %2570 = vmatprep.subr.mxu0 0.0
  %2571 = vmatpush1.msra.mxu0 0.0
  %2572 = vmatprep.subr.mxu0 0.0
  %2573 = vmatpush1.msra.mxu0 0.0
  %2574 = vmatprep.subr.mxu0 0.0
  %2575 = vmatpush1.msra.mxu0 0.0
  %2576 = vmatprep.subr.mxu0 0.0
  %2577 = vmatpush1.msra.mxu0 0.0
  %2578 = vmatprep.subr.mxu0 0.0
  %2579 = vmatpush1.msra.mxu0 0.0
  %2580 = vmatprep.subr.mxu0 0.0
  %2581 = vmatpush1.msra.mxu0 0.0
  %2582 = vmatprep.subr.mxu0 0.0
  %2583 = vmatpush1.msra.mxu0 0.0
  %2584 = vmatprep.subr.mxu0 0.0
  %2585 = vmatpush1.msra.mxu0 0.0
  %2586 = vmatprep.subr.mxu0 0.0
  %2587 = vmatpush1.msra.mxu0 0.0
  %2588 = vmatprep.subr.mxu0 0.0
  %2589 = vmatpush1.msra.mxu0 0.0
  %2590 = vmatprep.subr.mxu0 0.0
  %2591 = vmatpush1.msra.mxu0 0.0
  %2592 = vmatprep.subr.mxu0 0.0
  %2593 = vmatpush1.msra.mxu0 0.0
  %2594 = vmatprep.subr.mxu0 0.0
  %2595 = vmatpush1.msra.mxu0 0.0
  %2596 = vmatprep.subr.mxu0 0.0
  %2597 = vmatpush1.msra.mxu0 0.0
  %2598 = vmatprep.mubr.f32.mxu0 0.0
  %2599 = vmatmul.mubr.f32.gmra.mrb[0].mxu0 %v2294
  %v2600 = vpop.f32.mrb[0].mxu0
  %v2601 = vadd.f32 0.0, %v2600
  %v2602 = vpop.f32.mrb[0].mxu0
  %v2603 = vadd.f32 0.0, %v2602
  %2604 = vdwg.mxu0
  %vm2605 = vcmask 449536
  %v2607 = vsel %vm2605, %v1716, 0
  %vm2609 = vcmask 1046528
  %v2611 = vsel %vm2609, %v2204, 0
  %v2614 = vsel %vm2609, %v2205, 0
  %v2617 = vsel %vm2609, %v2206, 0
  %v2620 = vsel %vm2609, %v2207, 0
  %v2623 = vsel %vm2609, %v2208, 0
  %v2626 = vsel %vm2609, %v2209, 0
  %v2629 = vsel %vm2609, %v2210, 0
  %v2632 = vsel %vm2609, %v2211, 0
  %2634 = vmatprep.subr.mxu0 %v2157
  %2635 = vmatpush1.msra.mxu0 %v2156
  %2636 = vmatprep.subr.mxu0 %v2165
  %2637 = vmatpush1.msra.mxu0 %v2164
  %2638 = vmatprep.subr.mxu0 %v2173
  %2639 = vmatpush1.msra.mxu0 %v2172
  %2640 = vmatprep.subr.mxu0 %v2181
  %2641 = vmatpush1.msra.mxu0 %v2180
  %2642 = vmatprep.subr.mxu0 %v2189
  %2643 = vmatpush1.msra.mxu0 %v2188
  %2644 = vmatprep.subr.mxu0 %v2197
  %2645 = vmatpush1.msra.mxu0 %v2196
  %2646 = vmatprep.subr.mxu0 %v2614
  %2647 = vmatpush1.msra.mxu0 %v2611
  %2648 = vmatprep.subr.mxu0 0.0
  %2649 = vmatpush1.msra.mxu0 0.0
  %2650 = vmatprep.subr.mxu0 0.0
  %2651 = vmatpush1.msra.mxu0 0.0
  %2652 = vmatprep.subr.mxu0 0.0
  %2653 = vmatpush1.msra.mxu0 0.0
  %2654 = vmatprep.subr.mxu0 0.0
  %2655 = vmatpush1.msra.mxu0 0.0
  %2656 = vmatprep.subr.mxu0 0.0
  %2657 = vmatpush1.msra.mxu0 0.0
  %2658 = vmatprep.subr.mxu0 0.0
  %2659 = vmatpush1.msra.mxu0 0.0
  %2660 = vmatprep.subr.mxu0 0.0
  %2661 = vmatpush1.msra.mxu0 0.0
  %2662 = vmatprep.subr.mxu0 0.0
  %2663 = vmatpush1.msra.mxu0 0.0
  %2664 = vmatprep.subr.mxu0 0.0
  %2665 = vmatpush1.msra.mxu0 0.0
  %2666 = vmatprep.subr.mxu0 0.0
  %2667 = vmatpush1.msra.mxu0 0.0
  %2668 = vmatprep.subr.mxu0 0.0
  %2669 = vmatpush1.msra.mxu0 0.0
  %2670 = vmatprep.subr.mxu0 0.0
  %2671 = vmatpush1.msra.mxu0 0.0
  %2672 = vmatprep.subr.mxu0 0.0
  %2673 = vmatpush1.msra.mxu0 0.0
  %2674 = vmatprep.subr.mxu0 0.0
  %2675 = vmatpush1.msra.mxu0 0.0
  %2676 = vmatprep.subr.mxu0 0.0
  %2677 = vmatpush1.msra.mxu0 0.0
  %2678 = vmatprep.subr.mxu0 0.0
  %2679 = vmatpush1.msra.mxu0 0.0
  %2680 = vmatprep.subr.mxu0 0.0
  %2681 = vmatpush1.msra.mxu0 0.0
  %2682 = vmatprep.subr.mxu0 0.0
  %2683 = vmatpush1.msra.mxu0 0.0
  %2684 = vmatprep.subr.mxu0 0.0
  %2685 = vmatpush1.msra.mxu0 0.0
  %2686 = vmatprep.subr.mxu0 0.0
  %2687 = vmatpush1.msra.mxu0 0.0
  %2688 = vmatprep.subr.mxu0 0.0
  %2689 = vmatpush1.msra.mxu0 0.0
  %2690 = vmatprep.subr.mxu0 0.0
  %2691 = vmatpush1.msra.mxu0 0.0
  %2692 = vmatprep.subr.mxu0 0.0
  %2693 = vmatpush1.msra.mxu0 0.0
  %2694 = vmatprep.subr.mxu0 0.0
  %2695 = vmatpush1.msra.mxu0 0.0
  %2696 = vmatprep.subr.mxu0 0.0
  %2697 = vmatpush1.msra.mxu0 0.0
  %2698 = vmatprep.mubr.f32.mxu0 0.0
  %2699 = vmatmul.mubr.f32.gmra.mrb[0].mxu0 %v2607
  %v2700 = vpop.f32.mrb[0].mxu0
  %v2701 = vadd.f32 %v2388, %v2700
  %v2702 = vpop.f32.mrb[0].mxu0
  %v2703 = vadd.f32 %v2390, %v2702
  %2704 = vdwg.mxu0
  %2705 = vmatprep.subr.mxu0 %v2159
  %2706 = vmatpush1.msra.mxu0 %v2158
  %2707 = vmatprep.subr.mxu0 %v2167
  %2708 = vmatpush1.msra.mxu0 %v2166
  %2709 = vmatprep.subr.mxu0 %v2175
  %2710 = vmatpush1.msra.mxu0 %v2174
  %2711 = vmatprep.subr.mxu0 %v2183
  %2712 = vmatpush1.msra.mxu0 %v2182
  %2713 = vmatprep.subr.mxu0 %v2191
  %2714 = vmatpush1.msra.mxu0 %v2190
  %2715 = vmatprep.subr.mxu0 %v2199
  %2716 = vmatpush1.msra.mxu0 %v2198
  %2717 = vmatprep.subr.mxu0 %v2620
  %2718 = vmatpush1.msra.mxu0 %v2617
  %2719 = vmatprep.subr.mxu0 0.0
  %2720 = vmatpush1.msra.mxu0 0.0
  %2721 = vmatprep.subr.mxu0 0.0
  %2722 = vmatpush1.msra.mxu0 0.0
  %2723 = vmatprep.subr.mxu0 0.0
  %2724 = vmatpush1.msra.mxu0 0.0
  %2725 = vmatprep.subr.mxu0 0.0
  %2726 = vmatpush1.msra.mxu0 0.0
  %2727 = vmatprep.subr.mxu0 0.0
  %2728 = vmatpush1.msra.mxu0 0.0
  %2729 = vmatprep.subr.mxu0 0.0
  %2730 = vmatpush1.msra.mxu0 0.0
  %2731 = vmatprep.subr.mxu0 0.0
  %2732 = vmatpush1.msra.mxu0 0.0
  %2733 = vmatprep.subr.mxu0 0.0
  %2734 = vmatpush1.msra.mxu0 0.0
  %2735 = vmatprep.subr.mxu0 0.0
  %2736 = vmatpush1.msra.mxu0 0.0
  %2737 = vmatprep.subr.mxu0 0.0
  %2738 = vmatpush1.msra.mxu0 0.0
  %2739 = vmatprep.subr.mxu0 0.0
  %2740 = vmatpush1.msra.mxu0 0.0
  %2741 = vmatprep.subr.mxu0 0.0
  %2742 = vmatpush1.msra.mxu0 0.0
  %2743 = vmatprep.subr.mxu0 0.0
  %2744 = vmatpush1.msra.mxu0 0.0
  %2745 = vmatprep.subr.mxu0 0.0
  %2746 = vmatpush1.msra.mxu0 0.0
  %2747 = vmatprep.subr.mxu0 0.0
  %2748 = vmatpush1.msra.mxu0 0.0
  %2749 = vmatprep.subr.mxu0 0.0
  %2750 = vmatpush1.msra.mxu0 0.0
  %2751 = vmatprep.subr.mxu0 0.0
  %2752 = vmatpush1.msra.mxu0 0.0
  %2753 = vmatprep.subr.mxu0 0.0
  %2754 = vmatpush1.msra.mxu0 0.0
  %2755 = vmatprep.subr.mxu0 0.0
  %2756 = vmatpush1.msra.mxu0 0.0
  %2757 = vmatprep.subr.mxu0 0.0
  %2758 = vmatpush1.msra.mxu0 0.0
  %2759 = vmatprep.subr.mxu0 0.0
  %2760 = vmatpush1.msra.mxu0 0.0
  %2761 = vmatprep.subr.mxu0 0.0
  %2762 = vmatpush1.msra.mxu0 0.0
  %2763 = vmatprep.subr.mxu0 0.0
  %2764 = vmatpush1.msra.mxu0 0.0
  %2765 = vmatprep.subr.mxu0 0.0
  %2766 = vmatpush1.msra.mxu0 0.0
  %2767 = vmatprep.subr.mxu0 0.0
  %2768 = vmatpush1.msra.mxu0 0.0
  %2769 = vmatprep.mubr.f32.mxu0 0.0
  %2770 = vmatmul.mubr.f32.gmra.mrb[0].mxu0 %v2607
  %v2771 = vpop.f32.mrb[0].mxu0
  %v2772 = vadd.f32 %v2459, %v2771
  %v2773 = vpop.f32.mrb[0].mxu0
  %v2774 = vadd.f32 %v2461, %v2773
  %2775 = vdwg.mxu0
  %2776 = vmatprep.subr.mxu0 %v2161
  %2777 = vmatpush1.msra.mxu0 %v2160
  %2778 = vmatprep.subr.mxu0 %v2169
  %2779 = vmatpush1.msra.mxu0 %v2168
  %2780 = vmatprep.subr.mxu0 %v2177
  %2781 = vmatpush1.msra.mxu0 %v2176
  %2782 = vmatprep.subr.mxu0 %v2185
  %2783 = vmatpush1.msra.mxu0 %v2184
  %2784 = vmatprep.subr.mxu0 %v2193
  %2785 = vmatpush1.msra.mxu0 %v2192
  %2786 = vmatprep.subr.mxu0 %v2201
  %2787 = vmatpush1.msra.mxu0 %v2200
  %2788 = vmatprep.subr.mxu0 %v2626
  %2789 = vmatpush1.msra.mxu0 %v2623
  %2790 = vmatprep.subr.mxu0 0.0
  %2791 = vmatpush1.msra.mxu0 0.0
  %2792 = vmatprep.subr.mxu0 0.0
  %2793 = vmatpush1.msra.mxu0 0.0
  %2794 = vmatprep.subr.mxu0 0.0
  %2795 = vmatpush1.msra.mxu0 0.0
  %2796 = vmatprep.subr.mxu0 0.0
  %2797 = vmatpush1.msra.mxu0 0.0
  %2798 = vmatprep.subr.mxu0 0.0
  %2799 = vmatpush1.msra.mxu0 0.0
  %2800 = vmatprep.subr.mxu0 0.0
  %2801 = vmatpush1.msra.mxu0 0.0
  %2802 = vmatprep.subr.mxu0 0.0
  %2803 = vmatpush1.msra.mxu0 0.0
  %2804 = vmatprep.subr.mxu0 0.0
  %2805 = vmatpush1.msra.mxu0 0.0
  %2806 = vmatprep.subr.mxu0 0.0
  %2807 = vmatpush1.msra.mxu0 0.0
  %2808 = vmatprep.subr.mxu0 0.0
  %2809 = vmatpush1.msra.mxu0 0.0
  %2810 = vmatprep.subr.mxu0 0.0
  %2811 = vmatpush1.msra.mxu0 0.0
  %2812 = vmatprep.subr.mxu0 0.0
  %2813 = vmatpush1.msra.mxu0 0.0
  %2814 = vmatprep.subr.mxu0 0.0
  %2815 = vmatpush1.msra.mxu0 0.0
  %2816 = vmatprep.subr.mxu0 0.0
  %2817 = vmatpush1.msra.mxu0 0.0
  %2818 = vmatprep.subr.mxu0 0.0
  %2819 = vmatpush1.msra.mxu0 0.0
  %2820 = vmatprep.subr.mxu0 0.0
  %2821 = vmatpush1.msra.mxu0 0.0
  %2822 = vmatprep.subr.mxu0 0.0
  %2823 = vmatpush1.msra.mxu0 0.0
  %2824 = vmatprep.subr.mxu0 0.0
  %2825 = vmatpush1.msra.mxu0 0.0
  %2826 = vmatprep.subr.mxu0 0.0
  %2827 = vmatpush1.msra.mxu0 0.0
  %2828 = vmatprep.subr.mxu0 0.0
  %2829 = vmatpush1.msra.mxu0 0.0
  %2830 = vmatprep.subr.mxu0 0.0
  %2831 = vmatpush1.msra.mxu0 0.0
  %2832 = vmatprep.subr.mxu0 0.0
  %2833 = vmatpush1.msra.mxu0 0.0
  %2834 = vmatprep.subr.mxu0 0.0
  %2835 = vmatpush1.msra.mxu0 0.0
  %2836 = vmatprep.subr.mxu0 0.0
  %2837 = vmatpush1.msra.mxu0 0.0
  %2838 = vmatprep.subr.mxu0 0.0
  %2839 = vmatpush1.msra.mxu0 0.0
  %2840 = vmatprep.mubr.f32.mxu0 0.0
  %2841 = vmatmul.mubr.f32.gmra.mrb[0].mxu0 %v2607
  %v2842 = vpop.f32.mrb[0].mxu0
  %v2843 = vadd.f32 %v2530, %v2842
  %v2844 = vpop.f32.mrb[0].mxu0
  %v2845 = vadd.f32 %v2532, %v2844
  %2846 = vdwg.mxu0
  %2847 = vmatprep.subr.mxu0 %v2163
  %2848 = vmatpush1.msra.mxu0 %v2162
  %2849 = vmatprep.subr.mxu0 %v2171
  %2850 = vmatpush1.msra.mxu0 %v2170
  %2851 = vmatprep.subr.mxu0 %v2179
  %2852 = vmatpush1.msra.mxu0 %v2178
  %2853 = vmatprep.subr.mxu0 %v2187
  %2854 = vmatpush1.msra.mxu0 %v2186
  %2855 = vmatprep.subr.mxu0 %v2195
  %2856 = vmatpush1.msra.mxu0 %v2194
  %2857 = vmatprep.subr.mxu0 %v2203
  %2858 = vmatpush1.msra.mxu0 %v2202
  %2859 = vmatprep.subr.mxu0 %v2632
  %2860 = vmatpush1.msra.mxu0 %v2629
  %2861 = vmatprep.subr.mxu0 0.0
  %2862 = vmatpush1.msra.mxu0 0.0
  %2863 = vmatprep.subr.mxu0 0.0
  %2864 = vmatpush1.msra.mxu0 0.0
  %2865 = vmatprep.subr.mxu0 0.0
  %2866 = vmatpush1.msra.mxu0 0.0
  %2867 = vmatprep.subr.mxu0 0.0
  %2868 = vmatpush1.msra.mxu0 0.0
  %2869 = vmatprep.subr.mxu0 0.0
  %2870 = vmatpush1.msra.mxu0 0.0
  %2871 = vmatprep.subr.mxu0 0.0
  %2872 = vmatpush1.msra.mxu0 0.0
  %2873 = vmatprep.subr.mxu0 0.0
  %2874 = vmatpush1.msra.mxu0 0.0
  %2875 = vmatprep.subr.mxu0 0.0
  %2876 = vmatpush1.msra.mxu0 0.0
  %2877 = vmatprep.subr.mxu0 0.0
  %2878 = vmatpush1.msra.mxu0 0.0
  %2879 = vmatprep.subr.mxu0 0.0
  %2880 = vmatpush1.msra.mxu0 0.0
  %2881 = vmatprep.subr.mxu0 0.0
  %2882 = vmatpush1.msra.mxu0 0.0
  %2883 = vmatprep.subr.mxu0 0.0
  %2884 = vmatpush1.msra.mxu0 0.0
  %2885 = vmatprep.subr.mxu0 0.0
  %2886 = vmatpush1.msra.mxu0 0.0
  %2887 = vmatprep.subr.mxu0 0.0
  %2888 = vmatpush1.msra.mxu0 0.0
  %2889 = vmatprep.subr.mxu0 0.0
  %2890 = vmatpush1.msra.mxu0 0.0
  %2891 = vmatprep.subr.mxu0 0.0
  %2892 = vmatpush1.msra.mxu0 0.0
  %2893 = vmatprep.subr.mxu0 0.0
  %2894 = vmatpush1.msra.mxu0 0.0
  %2895 = vmatprep.subr.mxu0 0.0
  %2896 = vmatpush1.msra.mxu0 0.0
  %2897 = vmatprep.subr.mxu0 0.0
  %2898 = vmatpush1.msra.mxu0 0.0
  %2899 = vmatprep.subr.mxu0 0.0
  %2900 = vmatpush1.msra.mxu0 0.0
  %2901 = vmatprep.subr.mxu0 0.0
  %2902 = vmatpush1.msra.mxu0 0.0
  %2903 = vmatprep.subr.mxu0 0.0
  %2904 = vmatpush1.msra.mxu0 0.0
  %2905 = vmatprep.subr.mxu0 0.0
  %2906 = vmatpush1.msra.mxu0 0.0
  %2907 = vmatprep.subr.mxu0 0.0
  %2908 = vmatpush1.msra.mxu0 0.0
  %2909 = vmatprep.subr.mxu0 0.0
  %2910 = vmatpush1.msra.mxu0 0.0
  %2911 = vmatprep.mubr.f32.mxu0 0.0
  %2912 = vmatmul.mubr.f32.gmra.mrb[0].mxu0 %v2607
  %v2913 = vpop.f32.mrb[0].mxu0
  %v2914 = vadd.f32 %v2601, %v2913
  %v2915 = vpop.f32.mrb[0].mxu0
  %v2916 = vadd.f32 %v2603, %v2915
  %2917 = vdwg.mxu0
  %v2926 = vcombine.low %v2701, %v2703
  %v2927 = vcombine.low %v2772, %v2774
  %v2929 = vunpack.c.l.s4 1983009808
  %v2930 = vunpack.c.0.s8 %v2929
  %v2931 = vlaneseq
  %v2932 = vshrl.u32 %v2931, 7
  %v2933 = vsub.s32 %v2930, %v2932
  %v2934 = vrot.slane %v2926, %v2933
  %v2936 = vunpack.c.l.s4 1983009808
  %v2937 = vunpack.c.0.s8 %v2936
  %v2938 = vlaneseq
  %v2939 = vshrl.u32 %v2938, 7
  %v2940 = vsub.s32 %v2937, %v2939
  %v2941 = vrot.slane %v2927, %v2940
  %v2942 = vcombine.low %v2934, %v2941
  %v2943 = vcombine.low %v2843, %v2845
  %v2944 = vcombine.low %v2914, %v2916
  %v2946 = vunpack.c.l.s4 1983009808
  %v2947 = vunpack.c.0.s8 %v2946
  %v2948 = vlaneseq
  %v2949 = vshrl.u32 %v2948, 7
  %v2950 = vsub.s32 %v2947, %v2949
  %v2951 = vrot.slane %v2943, %v2950
  %v2953 = vunpack.c.l.s4 1983009808
  %v2954 = vunpack.c.0.s8 %v2953
  %v2955 = vlaneseq
  %v2956 = vshrl.u32 %v2955, 7
  %v2957 = vsub.s32 %v2954, %v2956
  %v2958 = vrot.slane %v2944, %v2957
  %v2959 = vcombine.low %v2951, %v2958
  %2962 = vst [vmem:[%s26] sm:$0xff] %v2942
  %2963 = vst.msk [vmem:[%s26 + $0x8] sm:$0xff] %vm2154, %v2959
  %v2964 = vld [vmem:[%s21] sm:$0xff]
  %v2965 = vld [vmem:[%s21 + $0x8] sm:$0x3]
  %vm2966 = vcmask 80896
  %v2968 = vsel %vm2966, %v1251, 0
  %v2971 = vsel %vm1228, %v2965, 0
  %2973 = vmatprep.subr.mxu0 0.0
  %2974 = vmatpush1.msra.mxu0 %v2964
  %2975 = vmatprep.subr.mxu0 0.0
  %2976 = vmatpush1.msra.mxu0 %v2971
  %2977 = vmatprep.subr.mxu0 0.0
  %2978 = vmatpush1.msra.mxu0 0.0
  %2979 = vmatprep.subr.mxu0 0.0
  %2980 = vmatpush1.msra.mxu0 0.0
  %2981 = vmatprep.subr.mxu0 0.0
  %2982 = vmatpush1.msra.mxu0 0.0
  %2983 = vmatprep.subr.mxu0 0.0
  %2984 = vmatpush1.msra.mxu0 0.0
  %2985 = vmatprep.subr.mxu0 0.0
  %2986 = vmatpush1.msra.mxu0 0.0
  %2987 = vmatprep.subr.mxu0 0.0
  %2988 = vmatpush1.msra.mxu0 0.0
  %2989 = vmatprep.subr.mxu0 0.0
  %2990 = vmatpush1.msra.mxu0 0.0
  %2991 = vmatprep.subr.mxu0 0.0
  %2992 = vmatpush1.msra.mxu0 0.0
  %2993 = vmatprep.subr.mxu0 0.0
  %2994 = vmatpush1.msra.mxu0 0.0
  %2995 = vmatprep.subr.mxu0 0.0
  %2996 = vmatpush1.msra.mxu0 0.0
  %2997 = vmatprep.subr.mxu0 0.0
  %2998 = vmatpush1.msra.mxu0 0.0
  %2999 = vmatprep.subr.mxu0 0.0
  %3000 = vmatpush1.msra.mxu0 0.0
  %3001 = vmatprep.subr.mxu0 0.0
  %3002 = vmatpush1.msra.mxu0 0.0
  %3003 = vmatprep.subr.mxu0 0.0
  %3004 = vmatpush1.msra.mxu0 0.0
  %3005 = vmatprep.subr.mxu0 0.0
  %3006 = vmatpush1.msra.mxu0 0.0
  %3007 = vmatprep.subr.mxu0 0.0
  %3008 = vmatpush1.msra.mxu0 0.0
  %3009 = vmatprep.subr.mxu0 0.0
  %3010 = vmatpush1.msra.mxu0 0.0
  %3011 = vmatprep.subr.mxu0 0.0
  %3012 = vmatpush1.msra.mxu0 0.0
  %3013 = vmatprep.subr.mxu0 0.0
  %3014 = vmatpush1.msra.mxu0 0.0
  %3015 = vmatprep.subr.mxu0 0.0
  %3016 = vmatpush1.msra.mxu0 0.0
  %3017 = vmatprep.subr.mxu0 0.0
  %3018 = vmatpush1.msra.mxu0 0.0
  %3019 = vmatprep.subr.mxu0 0.0
  %3020 = vmatpush1.msra.mxu0 0.0
  %3021 = vmatprep.subr.mxu0 0.0
  %3022 = vmatpush1.msra.mxu0 0.0
  %3023 = vmatprep.subr.mxu0 0.0
  %3024 = vmatpush1.msra.mxu0 0.0
  %3025 = vmatprep.subr.mxu0 0.0
  %3026 = vmatpush1.msra.mxu0 0.0
  %3027 = vmatprep.subr.mxu0 0.0
  %3028 = vmatpush1.msra.mxu0 0.0
  %3029 = vmatprep.subr.mxu0 0.0
  %3030 = vmatpush1.msra.mxu0 0.0
  %3031 = vmatprep.subr.mxu0 0.0
  %3032 = vmatpush1.msra.mxu0 0.0
  %3033 = vmatprep.subr.mxu0 0.0
  %3034 = vmatpush1.msra.mxu0 0.0
  %3035 = vmatprep.subr.mxu0 0.0
  %3036 = vmatpush1.msra.mxu0 0.0
  %3037 = vmatprep.mubr.f32.mxu0 0.0
  %3038 = vmatmul.mubr.f32.gmra.mrb[0].mxu0 %v2968
  %v3039 = vpop.f32.mrb[0].mxu0
  %v3040 = vadd.f32 0.0, %v3039
  %v3041 = vpop.f32.mrb[0].mxu0
  %3042 = vdwg.mxu0
  %v3043 = vadd.f32 %v777, %v3040
  %v3044 = vld [vmem:[%s23] sm:$0xff]
  %v3045 = vld [vmem:[%s23 + $0x8] sm:$0xf]
  %vm3046 = vcmask 97280
  %v3048 = vsel %vm3046, %v1913, 0
  %vm3050 = vcmask 1043456
  %v3052 = vsel %vm3050, %v3045, 0
  %3054 = vmatprep.subr.mxu0 0.0
  %3055 = vmatpush1.msra.mxu0 %v3044
  %3056 = vmatprep.subr.mxu0 0.0
  %3057 = vmatpush1.msra.mxu0 %v3052
  %3058 = vmatprep.subr.mxu0 0.0
  %3059 = vmatpush1.msra.mxu0 0.0
  %3060 = vmatprep.subr.mxu0 0.0
  %3061 = vmatpush1.msra.mxu0 0.0
  %3062 = vmatprep.subr.mxu0 0.0
  %3063 = vmatpush1.msra.mxu0 0.0
  %3064 = vmatprep.subr.mxu0 0.0
  %3065 = vmatpush1.msra.mxu0 0.0
  %3066 = vmatprep.subr.mxu0 0.0
  %3067 = vmatpush1.msra.mxu0 0.0
  %3068 = vmatprep.subr.mxu0 0.0
  %3069 = vmatpush1.msra.mxu0 0.0
  %3070 = vmatprep.subr.mxu0 0.0
  %3071 = vmatpush1.msra.mxu0 0.0
  %3072 = vmatprep.subr.mxu0 0.0
  %3073 = vmatpush1.msra.mxu0 0.0
  %3074 = vmatprep.subr.mxu0 0.0
  %3075 = vmatpush1.msra.mxu0 0.0
  %3076 = vmatprep.subr.mxu0 0.0
  %3077 = vmatpush1.msra.mxu0 0.0
  %3078 = vmatprep.subr.mxu0 0.0
  %3079 = vmatpush1.msra.mxu0 0.0
  %3080 = vmatprep.subr.mxu0 0.0
  %3081 = vmatpush1.msra.mxu0 0.0
  %3082 = vmatprep.subr.mxu0 0.0
  %3083 = vmatpush1.msra.mxu0 0.0
  %3084 = vmatprep.subr.mxu0 0.0
  %3085 = vmatpush1.msra.mxu0 0.0
  %3086 = vmatprep.subr.mxu0 0.0
  %3087 = vmatpush1.msra.mxu0 0.0
  %3088 = vmatprep.subr.mxu0 0.0
  %3089 = vmatpush1.msra.mxu0 0.0
  %3090 = vmatprep.subr.mxu0 0.0
  %3091 = vmatpush1.msra.mxu0 0.0
  %3092 = vmatprep.subr.mxu0 0.0
  %3093 = vmatpush1.msra.mxu0 0.0
  %3094 = vmatprep.subr.mxu0 0.0
  %3095 = vmatpush1.msra.mxu0 0.0
  %3096 = vmatprep.subr.mxu0 0.0
  %3097 = vmatpush1.msra.mxu0 0.0
  %3098 = vmatprep.subr.mxu0 0.0
  %3099 = vmatpush1.msra.mxu0 0.0
  %3100 = vmatprep.subr.mxu0 0.0
  %3101 = vmatpush1.msra.mxu0 0.0
  %3102 = vmatprep.subr.mxu0 0.0
  %3103 = vmatpush1.msra.mxu0 0.0
  %3104 = vmatprep.subr.mxu0 0.0
  %3105 = vmatpush1.msra.mxu0 0.0
  %3106 = vmatprep.subr.mxu0 0.0
  %3107 = vmatpush1.msra.mxu0 0.0
  %3108 = vmatprep.subr.mxu0 0.0
  %3109 = vmatpush1.msra.mxu0 0.0
  %3110 = vmatprep.subr.mxu0 0.0
  %3111 = vmatpush1.msra.mxu0 0.0
  %3112 = vmatprep.subr.mxu0 0.0
  %3113 = vmatpush1.msra.mxu0 0.0
  %3114 = vmatprep.subr.mxu0 0.0
  %3115 = vmatpush1.msra.mxu0 0.0
  %3116 = vmatprep.subr.mxu0 0.0
  %3117 = vmatpush1.msra.mxu0 0.0
  %3118 = vmatprep.mubr.f32.mxu0 0.0
  %3119 = vmatmul.mubr.f32.gmra.mrb[0].mxu0 %v3048
  %v3120 = vpop.f32.mrb[0].mxu0
  %v3121 = vadd.f32 0.0, %v3120
  %v3122 = vpop.f32.mrb[0].mxu0
  %3123 = vdwg.mxu0
  %v3124 = vadd.f32 %v3043, %v3121
  %vm3125 = vcmask 975872
  %3126 = vst.msk [vmem:[%s27] sm:$0x3] %vm3125, %v3124
  // Predicated region
  $region102: #{outter_bae_forward.7} parent=0 // pred_check
    _
  $region103: #{outter_bae_forward.7} parent=0 // pred_check_branch
    %3128 = sbr.rel (0) target = $region105
  $region104: #{outter_bae_forward.7} parent=0 // pred_region
    _
  $region105: #{outter_bae_forward.7} parent=0 // pred_fallthru
    _
  // Predicated region
  $region106: #{outter_bae_forward.7} parent=0 // pred_check
    _
  $region107: #{outter_bae_forward.7} parent=0 // pred_check_branch
    %3130 = sbr.rel (0) target = $region109
  $region108: #{outter_bae_forward.7} parent=0 // pred_region
    _
  $region109: #{outter_bae_forward.7} parent=0 // pred_fallthru
    _
  // Predicated region
  $region110: #{outter_bae_forward.7} parent=0 // pred_check
    _
  $region111: #{outter_bae_forward.7} parent=0 // pred_check_branch
    %3132 = sbr.rel (0) target = $region113
  $region112: #{outter_bae_forward.7} parent=0 // pred_region
    _
  $region113: #{outter_bae_forward.7} parent=0 // pred_fallthru
    _
  // Predicated region
  $region114: #{outter_bae_forward.7} parent=0 // pred_check
    _
  $region115: #{outter_bae_forward.7} parent=0 // pred_check_branch
    %3134 = sbr.rel (0) target = $region117
  $region116: #{outter_bae_forward.7} parent=0 // pred_region
    _
  $region117: #{outter_bae_forward.7} parent=0 // pred_fallthru
    _
  // Predicated region
  $region118: #{outter_bae_forward.7} parent=0 // pred_check
    _
  $region119: #{outter_bae_forward.7} parent=0 // pred_check_branch
    %3136 = sbr.rel (0) target = $region121
  $region120: #{outter_bae_forward.7} parent=0 // pred_region
    _
  $region121: #{outter_bae_forward.7} parent=0 // pred_fallthru
    _
  // Predicated region
  $region122: #{outter_bae_forward.7} parent=0 // pred_check
    _
  $region123: #{outter_bae_forward.7} parent=0 // pred_check_branch
    %3138 = sbr.rel (0) target = $region125
  $region124: #{outter_bae_forward.7} parent=0 // pred_region
    _
  $region125: #{outter_bae_forward.7} parent=0 // pred_fallthru
    _

</llo_original>
